<compile_context>
chip_gen: v5e
topology: v5e:2x2
jax: 0.10.0
libtpu: 0.0.40
codegen_flags: <defaults>
</compile_context>

<pallas_src>
import numpy as np

import jax
import jax.numpy as jnp
from jax.experimental import pallas as pl
from jax.experimental.pallas import tpu as pltpu


# ---------------------------------------------------------------------------
# Model dimensions.  Spatial input must be 13x13 so two valid 5x5 convs yield
# 5x5 feature maps, matching Linear(10*5*5, 150).
# ---------------------------------------------------------------------------
H_IN, W_IN, C_IN = 13, 13, 3
K1, C1 = 5, 20
K2, C2 = 5, 10
H1, W1 = H_IN - K1 + 1, W_IN - K1 + 1          # 9, 9
H2, W2 = H1 - K2 + 1, W1 - K2 + 1              # 5, 5
FC3_OUT, FC4_OUT = 150, 9


def _round_up(x, m):
    return ((x + m - 1) // m) * m


K1_PAD = _round_up(C_IN * H_IN * W_IN, 128)    # 507  -> 512
K2_PAD = _round_up(C1 * H1 * W1, 128)          # 1620 -> 1664
K3_PAD = _round_up(FC3_OUT, 128)               # 150  -> 256


# ---------------------------------------------------------------------------
# Single fused kernel per batch tile:
#   conv1(+bias+ReLU) -> [conv2+fc3 folded](+bias+ReLU) -> fc4(+bias+softmax)
# All dots hit the MXU in bf16 with f32 accumulation.
# ---------------------------------------------------------------------------
def _cnn_fused_kernel(x_ref, m1_ref, b1_ref, m23_ref, b23_ref,
                      w4_ref, b4_ref, o_ref):
    # Conv2d(3,20,5) as a single matmul + bias + ReLU (position-major layout)
    h = jnp.dot(x_ref[...].astype(jnp.bfloat16), m1_ref[...],
                preferred_element_type=jnp.float32)
    h = jnp.maximum(h + b1_ref[...], 0.0)
    # Conv2d(20,10,5) folded with Linear(250,150) (exact: no ReLU in between)
    h = jnp.dot(h.astype(jnp.bfloat16), m23_ref[...],
                preferred_element_type=jnp.float32) + b23_ref[...]
    h = jnp.maximum(h, 0.0)
    # Linear(150,9) + Softmax(dim=1)
    z = jnp.dot(h.astype(jnp.bfloat16), w4_ref[...],
                preferred_element_type=jnp.float32) + b4_ref[...]
    z = z - jnp.max(z, axis=-1, keepdims=True)
    e = jnp.exp(z)
    o_ref[...] = (e / jnp.sum(e, axis=-1, keepdims=True)).astype(o_ref.dtype)


@jax.jit
def cnn_forward(fused, x):
    """x: (N, 3, 13, 13) NCHW float32 -> (N, 9) softmax probabilities."""
    m1, b1, m23, b23, w4t, b4 = fused
    N = x.shape[0]

    # Contiguous NCHW flatten (no transpose), pad features 507 -> 512 and the
    # batch to a multiple of the tile.
    x_flat = x.reshape(N, -1)
    tile_n = min(256, _round_up(N, 8))
    n_pad = _round_up(N, tile_n)
    x_flat = jnp.pad(x_flat, ((0, n_pad - N), (0, K1_PAD - x_flat.shape[1])))

    const = lambda i: (0, 0)            # weights/biases: fetched once, resident
    out = pl.pallas_call(
        _cnn_fused_kernel,
        out_shape=jax.ShapeDtypeStruct((n_pad, FC4_OUT), jnp.float32),
        grid=(n_pad // tile_n,),
        in_specs=[
            pl.BlockSpec((tile_n, K1_PAD), lambda i: (i, 0)),   # x tile
            pl.BlockSpec(m1.shape, const),
            pl.BlockSpec(b1.shape, const),
            pl.BlockSpec(m23.shape, const),
            pl.BlockSpec(b23.shape, const),
            pl.BlockSpec(w4t.shape, const),
            pl.BlockSpec(b4.shape, const),
        ],
        out_specs=pl.BlockSpec((tile_n, FC4_OUT), lambda i: (i, 0)),
        compiler_params=pltpu.CompilerParams(
            dimension_semantics=("parallel",)),      # 2 TCs on v7x
    )(x_flat, m1, b1, m23, b23, w4t, b4)
    return out[:N]


# ---------------------------------------------------------------------------
# Init-time weight preprocessing (runs once, outside the forward path)
# ---------------------------------------------------------------------------
def _conv_as_matmul(w, H, W, in_layout, out_layout):
    """Dense M such that flat_out = flat_in @ M equals a stride-1 VALID Conv2d
    with PyTorch-layout weight w (Cout, Cin, k, k).

    'chw' -> channel-major flatten (c*H*W + h*W + w)   [== NCHW .reshape]
    'hwc' -> position-major flatten ((h*W + w)*C + c)
    """
    w = np.asarray(w, np.float32)
    Cout, Cin, k, _ = w.shape
    Ho, Wo = H - k + 1, W - k + 1
    co, ci, kh, kw, ho, wo = np.meshgrid(
        np.arange(Cout), np.arange(Cin), np.arange(k), np.arange(k),
        np.arange(Ho), np.arange(Wo), indexing="ij")
    hi, wi = ho + kh, wo + kw
    rows = (ci * H * W + hi * W + wi) if in_layout == "chw" \
        else ((hi * W + wi) * Cin + ci)
    cols = (co * Ho * Wo + ho * Wo + wo) if out_layout == "chw" \
        else ((ho * Wo + wo) * Cout + co)
    M = np.zeros((Cin * H * W, Cout * Ho * Wo), np.float32)
    M[rows.ravel(), cols.ravel()] = w[co, ci, kh, kw].ravel()
    return jnp.asarray(M)


def fuse_params(params):
    """Fold PyTorch-layout params into direct DMA-able kernel operands."""
    f32 = jnp.float32
    # conv1: NCHW-flat input -> position-major output
    m1 = _conv_as_matmul(params["w1"], H_IN, W_IN, "chw", "hwc")            # (507,1620)
    b1 = jnp.tile(jnp.asarray(params["b1"], f32), H1 * W1).reshape(1, -1)   # (1,1620)
    # conv2: position-major in -> channel-major out (== torch Flatten order)
    m2 = _conv_as_matmul(params["w2"], H1, W1, "hwc", "chw")                # (1620,250)
    b2 = jnp.repeat(jnp.asarray(params["b2"], f32), H2 * W2).reshape(1, -1)
    w3t = jnp.asarray(params["w3"], f32).T                                  # (250,150)
    b3 = jnp.asarray(params["b3"], f32).reshape(1, -1)
    # Exact algebraic fold of conv2 and fc3 (no ReLU between them)
    m23 = m2 @ w3t                                                          # (1620,150)
    b23 = b2 @ w3t + b3                                                     # (1,150)
    w4t = jnp.asarray(params["w4"], f32).T                                  # (150,9)
    b4 = jnp.asarray(params["b4"], f32).reshape(1, -1)                      # (1,9)

    # Zero-pad awkward dims to (8,128)-friendly sizes (exact: zeros everywhere)
    def pad_to(a, rows, cols):
        return jnp.pad(a, ((0, rows - a.shape[0]), (0, cols - a.shape[1])))

    m1 = pad_to(m1, K1_PAD, K2_PAD)
    b1 = pad_to(b1, 1, K2_PAD)
    m23 = pad_to(m23, K2_PAD, K3_PAD)
    b23 = pad_to(b23, 1, K3_PAD)
    w4t = pad_to(w4t, K3_PAD, FC4_OUT)

    # MXU operands in bf16 (f32 accumulation in-kernel); biases stay f32.
    return (m1.astype(jnp.bfloat16), b1,
            m23.astype(jnp.bfloat16), b23,
            w4t.astype(jnp.bfloat16), b4)


# ---------------------------------------------------------------------------
# Parameters (deterministic, PyTorch-like uniform fan-in init, torch layouts)
# ---------------------------------------------------------------------------
def init_params(key):
    def uniform(k, shape, fan_in):
        bound = 1.0 / float(np.sqrt(fan_in))
        return jax.random.uniform(k, shape, jnp.float32, -bound, bound)

    ks = jax.random.split(key, 8)
    return {
        "w1": uniform(ks[0], (C1, C_IN, K1, K1), C_IN * K1 * K1),
        "b1": uniform(ks[1], (C1,), C_IN * K1 * K1),
        "w2": uniform(ks[2], (C2, C1, K2, K2), C1 * K2 * K2),
        "b2": uniform(ks[3], (C2,), C1 * K2 * K2),
        "w3": uniform(ks[4], (FC3_OUT, C2 * H2 * W2), C2 * H2 * W2),
        "b3": uniform(ks[5], (FC3_OUT,), C2 * H2 * W2),
        "w4": uniform(ks[6], (FC4_OUT, FC3_OUT), FC3_OUT),
        "b4": uniform(ks[7], (FC4_OUT,), FC3_OUT),
    }


# ---------------------------------------------------------------------------
# Pure-JAX reference of the original module (for self-validation only)
# ---------------------------------------------------------------------------
@jax.jit
def cnn_reference(params, x):
    dn = ("NCHW", "OIHW", "NCHW")
    h = jax.lax.conv_general_dilated(x, params["w1"], (1, 1), "VALID",
                                     dimension_numbers=dn)
    h = jax.nn.relu(h + params["b1"][None, :, None, None])
    h = jax.lax.conv_general_dilated(h, params["w2"], (1, 1), "VALID",
                                     dimension_numbers=dn)
    h = h + params["b2"][None, :, None, None]
    h = h.reshape(x.shape[0], -1)                       # torch.nn.Flatten
    h = jax.nn.relu(h @ params["w3"].T + params["b3"])
    h = h @ params["w4"].T + params["b4"]
    return jax.nn.softmax(h, axis=-1)


if __name__ == "__main__":
    key = jax.random.PRNGKey(0)
    pkey, xkey, xkey2 = jax.random.split(key, 3)
    params = init_params(pkey)
    fused = fuse_params(params)          # one-time weight preprocessing

    # Small-batch run (single tile)
    x = jax.random.normal(xkey, (2, C_IN, H_IN, W_IN), jnp.float32)
    out = jax.block_until_ready(cnn_forward(fused, x))
    assert out.shape == (2, FC4_OUT)
    assert jnp.allclose(jnp.sum(out, axis=-1), 1.0, atol=1e-4)   # exact divide
    ref = jax.block_until_ready(cnn_reference(params, x))
    assert jnp.allclose(out, ref, atol=1e-2), float(jnp.max(jnp.abs(out - ref)))

    # Exercise the batch-tiled grid (multiple tiles + padded tail rows)
    xb = jax.random.normal(xkey2, (300, C_IN, H_IN, W_IN), jnp.float32)
    outb = jax.block_until_ready(cnn_forward(fused, xb))
    refb = jax.block_until_ready(cnn_reference(params, xb))
    assert outb.shape == (300, FC4_OUT)
    assert jnp.allclose(jnp.sum(outb, axis=-1), 1.0, atol=1e-4)
    assert jnp.allclose(outb, refb, atol=1e-2), float(jnp.max(jnp.abs(outb - refb)))

    print("KERNEL_OK")
</pallas_src>

<mosaic_0001>
module attributes {stable_mosaic.version = 11 : i64} {
  func.func @_cnn_fused_kernel(%arg0: i32, %arg1: memref<8x512xf32, #tpu.memory_space<vmem>>, %arg2: memref<512x1664xbf16, #tpu.memory_space<vmem>>, %arg3: memref<1x1664xf32, #tpu.memory_space<vmem>>, %arg4: memref<1664x256xbf16, #tpu.memory_space<vmem>>, %arg5: memref<1x256xf32, #tpu.memory_space<vmem>>, %arg6: memref<256x9xbf16, #tpu.memory_space<vmem>>, %arg7: memref<1x9xf32, #tpu.memory_space<vmem>>, %arg8: memref<8x9xf32, #tpu.memory_space<vmem>>) attributes {dimension_semantics = [#tpu.dimension_semantics<parallel>], iteration_bounds = array<i64: 1>, scalar_prefetch = 0 : i64, scratch_operands = 0 : i64, tpu.core_type = #tpu.core_type<tc>, window_params = [{transform_indices = @transform_0, window_bounds = array<i64: 8, 512>}, {pipeline_mode = #tpu.pipeline_mode<synchronous>, transform_indices = @transform_1, window_bounds = array<i64: 512, 1664>}, {pipeline_mode = #tpu.pipeline_mode<synchronous>, transform_indices = @transform_2, window_bounds = array<i64: 1, 1664>}, {pipeline_mode = #tpu.pipeline_mode<synchronous>, transform_indices = @transform_3, window_bounds = array<i64: 1664, 256>}, {pipeline_mode = #tpu.pipeline_mode<synchronous>, transform_indices = @transform_4, window_bounds = array<i64: 1, 256>}, {pipeline_mode = #tpu.pipeline_mode<synchronous>, transform_indices = @transform_5, window_bounds = array<i64: 256, 9>}, {pipeline_mode = #tpu.pipeline_mode<synchronous>, transform_indices = @transform_6, window_bounds = array<i64: 1, 9>}, {transform_indices = @transform_7, window_bounds = array<i64: 8, 9>}]} {
    %c0 = arith.constant 0 : index
    %c0_0 = arith.constant 0 : index
    %0 = vector.load %arg1[%c0, %c0_0] : memref<8x512xf32, #tpu.memory_space<vmem>>, vector<8x512xf32>
    %1 = arith.truncf %0 : vector<8x512xf32> to vector<8x512xbf16>
    %c0_1 = arith.constant 0 : index
    %c0_2 = arith.constant 0 : index
    %2 = vector.load %arg2[%c0_1, %c0_2] : memref<512x1664xbf16, #tpu.memory_space<vmem>>, vector<512x1664xbf16>
    %cst = arith.constant dense<0.000000e+00> : vector<8x1664xf32>
    %3 = tpu.matmul %1, %2, %cst {dimension_numbers = #tpu.dot_dimension_numbers<[1], [0], [0], [1], [0, 0, 1, 1], [], []>} : vector<8x512xbf16>, vector<512x1664xbf16>, vector<8x1664xf32> -> vector<8x1664xf32>
    %c0_3 = arith.constant 0 : index
    %c0_4 = arith.constant 0 : index
    %4 = vector.load %arg3[%c0_3, %c0_4] : memref<1x1664xf32, #tpu.memory_space<vmem>>, vector<1x1664xf32>
    %5 = vector.broadcast %4 : vector<1x1664xf32> to vector<8x1664xf32>
    %6 = arith.addf %3, %5 : vector<8x1664xf32>
    %cst_5 = arith.constant 0.000000e+00 : f32
    %7 = vector.broadcast %cst_5 : f32 to vector<8x1664xf32>
    %8 = arith.maximumf %6, %7 : vector<8x1664xf32>
    %9 = arith.truncf %8 : vector<8x1664xf32> to vector<8x1664xbf16>
    %c0_6 = arith.constant 0 : index
    %c0_7 = arith.constant 0 : index
    %10 = vector.load %arg4[%c0_6, %c0_7] : memref<1664x256xbf16, #tpu.memory_space<vmem>>, vector<1664x256xbf16>
    %cst_8 = arith.constant dense<0.000000e+00> : vector<8x256xf32>
    %11 = tpu.matmul %9, %10, %cst_8 {dimension_numbers = #tpu.dot_dimension_numbers<[1], [0], [0], [1], [0, 0, 1, 1], [], []>} : vector<8x1664xbf16>, vector<1664x256xbf16>, vector<8x256xf32> -> vector<8x256xf32>
    %c0_9 = arith.constant 0 : index
    %c0_10 = arith.constant 0 : index
    %12 = vector.load %arg5[%c0_9, %c0_10] : memref<1x256xf32, #tpu.memory_space<vmem>>, vector<1x256xf32>
    %13 = vector.broadcast %12 : vector<1x256xf32> to vector<8x256xf32>
    %14 = arith.addf %11, %13 : vector<8x256xf32>
    %cst_11 = arith.constant 0.000000e+00 : f32
    %15 = vector.broadcast %cst_11 : f32 to vector<8x256xf32>
    %16 = arith.maximumf %14, %15 : vector<8x256xf32>
    %17 = arith.truncf %16 : vector<8x256xf32> to vector<8x256xbf16>
    %c0_12 = arith.constant 0 : index
    %c0_13 = arith.constant 0 : index
    %18 = vector.load %arg6[%c0_12, %c0_13] : memref<256x9xbf16, #tpu.memory_space<vmem>>, vector<256x9xbf16>
    %cst_14 = arith.constant dense<0.000000e+00> : vector<8x9xf32>
    %19 = tpu.matmul %17, %18, %cst_14 {dimension_numbers = #tpu.dot_dimension_numbers<[1], [0], [0], [1], [0, 0, 1, 1], [], []>} : vector<8x256xbf16>, vector<256x9xbf16>, vector<8x9xf32> -> vector<8x9xf32>
    %c0_15 = arith.constant 0 : index
    %c0_16 = arith.constant 0 : index
    %20 = vector.load %arg7[%c0_15, %c0_16] : memref<1x9xf32, #tpu.memory_space<vmem>>, vector<1x9xf32>
    %21 = vector.broadcast %20 : vector<1x9xf32> to vector<8x9xf32>
    %22 = arith.addf %19, %21 : vector<8x9xf32>
    %cst_17 = arith.constant dense<0xFF800000> : vector<8xf32>
    %23 = vector.multi_reduction <maximumf>, %22, %cst_17 [1] : vector<8x9xf32> to vector<8xf32>
    %24 = vector.shape_cast %23 : vector<8xf32> to vector<8x1xf32>
    %25 = vector.broadcast %24 : vector<8x1xf32> to vector<8x9xf32>
    %26 = arith.subf %22, %25 : vector<8x9xf32>
    %27 = math.exp %26 : vector<8x9xf32>
    %cst_18 = arith.constant dense<0.000000e+00> : vector<8xf32>
    %28 = vector.multi_reduction <add>, %27, %cst_18 [1] : vector<8x9xf32> to vector<8xf32>
    %29 = vector.shape_cast %28 : vector<8xf32> to vector<8x1xf32>
    %30 = vector.broadcast %29 : vector<8x1xf32> to vector<8x9xf32>
    %31 = arith.divf %27, %30 : vector<8x9xf32>
    %c0_19 = arith.constant 0 : index
    %c0_20 = arith.constant 0 : index
    %32 = vector.load %arg8[%c0_19, %c0_20] : memref<8x9xf32, #tpu.memory_space<vmem>>, vector<8x9xf32>
    tpu.vector_store %arg8[%c0_19, %c0_20], %31 {strides = array<i32>} : memref<8x9xf32, #tpu.memory_space<vmem>>, vector<8x9xf32>,
    return
  }
  func.func @transform_0(%arg0: i32) -> (i32, i32) {
    %c0_i32 = arith.constant 0 : i32
    %c0_i32_0 = arith.constant 0 : i32
    return %arg0, %c0_i32 : i32, i32
  }
  func.func @transform_1(%arg0: i32) -> (i32, i32) {
    %c0_i32 = arith.constant 0 : i32
    %c0_i32_0 = arith.constant 0 : i32
    %c0_i32_1 = arith.constant 0 : i32
    return %c0_i32, %c0_i32_0 : i32, i32
  }
  func.func @transform_2(%arg0: i32) -> (i32, i32) {
    %c0_i32 = arith.constant 0 : i32
    %c0_i32_0 = arith.constant 0 : i32
    %c0_i32_1 = arith.constant 0 : i32
    return %c0_i32, %c0_i32_0 : i32, i32
  }
  func.func @transform_3(%arg0: i32) -> (i32, i32) {
    %c0_i32 = arith.constant 0 : i32
    %c0_i32_0 = arith.constant 0 : i32
    %c0_i32_1 = arith.constant 0 : i32
    return %c0_i32, %c0_i32_0 : i32, i32
  }
  func.func @transform_4(%arg0: i32) -> (i32, i32) {
    %c0_i32 = arith.constant 0 : i32
    %c0_i32_0 = arith.constant 0 : i32
    %c0_i32_1 = arith.constant 0 : i32
    return %c0_i32, %c0_i32_0 : i32, i32
  }
  func.func @transform_5(%arg0: i32) -> (i32, i32) {
    %c0_i32 = arith.constant 0 : i32
    %c0_i32_0 = arith.constant 0 : i32
    %c0_i32_1 = arith.constant 0 : i32
    return %c0_i32, %c0_i32_0 : i32, i32
  }
  func.func @transform_6(%arg0: i32) -> (i32, i32) {
    %c0_i32 = arith.constant 0 : i32
    %c0_i32_0 = arith.constant 0 : i32
    %c0_i32_1 = arith.constant 0 : i32
    return %c0_i32, %c0_i32_0 : i32, i32
  }
  func.func @transform_7(%arg0: i32) -> (i32, i32) {
    %c0_i32 = arith.constant 0 : i32
    %c0_i32_0 = arith.constant 0 : i32
    return %arg0, %c0_i32 : i32, i32
  }
}

</mosaic_0001>

<llo_original>
// kernel: cnn_forward.1
$region0: #{cnn_forward.1}
  #allocation0 [shape = 'u32[]', space=smem, size = 0x4, offset = 0x4, fixed_abs, tag = 'smem constant byte address 0x4 - core index']
  #allocation1 [shape = 'u32[72,128]{1,0:T(1,128)}', space=vmem, size = 0x9000, scoped, tag = 'internal scratch']
  %s0 = inlined_call_operand.vmem [shape: f32[8,512], index: 0, kind: input, shape index: {}]
  %s1 = inlined_call_operand.hbm [shape: bf16[512,1664], index: 1, kind: input, shape index: {}]
  %s2 = inlined_call_operand.hbm [shape: f32[1,1664], index: 2, kind: input, shape index: {}]
  %s3 = inlined_call_operand.hbm [shape: bf16[1664,256], index: 3, kind: input, shape index: {}]
  %s4 = inlined_call_operand.hbm [shape: f32[1,256], index: 4, kind: input, shape index: {}]
  %s5 = inlined_call_operand.vmem [shape: bf16[256,9], index: 5, kind: input, shape index: {}]
  %s6 = inlined_call_operand.hbm [shape: f32[1,9], index: 6, kind: input, shape index: {}]
  %s7 = inlined_call_operand.vmem [shape: f32[8,9], index: 7, kind: output, shape index: {}]
  %s8 = sld [smem:[#allocation0]]
  $region58: #{cnn_forward.1} parent=0
    _
  %s10 = ssub.s32 1, %s8
  %s11 = scalar_select 0, %s10, %s8
  $region1: #{cnn_forward.1} parent=0
    #allocation2 [shape = 'u8[1703936]{0}', space=vmem, size = 0x1a0000, scoped, tag = 'input window, operand 1, single buffered']
    #allocation3 [shape = 's32[1]{0}', space=sflag, size = 0x4, scoped, tag = 'scoped memory for cnn_forward.1']
    #allocation4 [shape = 'u8[6656]{0}', space=vmem, size = 0x1c00, scoped, tag = 'input window, operand 2, single buffered']
    #allocation5 [shape = 's32[1]{0}', space=sflag, size = 0x4, scoped, tag = 'scoped memory for cnn_forward.1']
    #allocation6 [shape = 'u8[851968]{0}', space=vmem, size = 0xd0000, scoped, tag = 'input window, operand 3, single buffered']
    #allocation7 [shape = 'u8[1024]{0}', space=vmem, size = 0x400, scoped, tag = 'input window, operand 4, single buffered']
    #allocation8 [shape = 's32[1]{0}', space=sflag, size = 0x4, scoped, tag = 'scoped memory for cnn_forward.1']
    #allocation9 [shape = 'u8[512]{0}', space=vmem, size = 0x400, scoped, tag = 'input window, operand 6, single buffered']
    %12 = vsyncpa [#allocation3], 0
    %13 = vsyncpa [#allocation5], 0
    %14 = vsyncpa [#allocation8], 0
    // Predicated region
    $region2: #{cnn_forward.1} parent=1 // pred_check
      _
    $region3: #{cnn_forward.1} parent=1 // pred_check_branch
      %16 = sbr.rel (0) target = $region5
    $region4: #{cnn_forward.1} parent=1 // pred_region
      _
    $region5: #{cnn_forward.1} parent=1 // pred_fallthru
      _
    // Predicated region
    $region6: #{cnn_forward.1} parent=1 // pred_check
      _
    $region7: #{cnn_forward.1} parent=1 // pred_check_branch
      %18 = sbr.rel (0) target = $region9
    $region8: #{cnn_forward.1} parent=1 // pred_region
      %20 = vsyncadd [#allocation3], 0
      %s21 = sshll.u32 %s1, 4
      %s22 = int_to_ptr.hbm [resolvable:$true] %s21
      %s23 = sshll.u32 [#allocation2], 4
      %s24 = int_to_ptr.vmem [resolvable:$true] %s23
      %29 = dma.hbm_to_vmem [thread:$0]  %s22, 53248, %s24, [#allocation3], 832, 832, 52
    $region9: #{cnn_forward.1} parent=1 // pred_fallthru
      _
    // Predicated region
    $region10: #{cnn_forward.1} parent=1 // pred_check
      _
    $region11: #{cnn_forward.1} parent=1 // pred_check_branch
      %31 = sbr.rel (0) target = $region13
    $region12: #{cnn_forward.1} parent=1 // pred_region
      %33 = vsyncadd [#allocation5], 0
      %s35 = sshll.u32 %s2, 4
      %s36 = int_to_ptr.hbm [resolvable:$true] %s35
      %s37 = sshll.u32 [#allocation4], 4
      %s38 = int_to_ptr.vmem [resolvable:$true] %s37
      %40 = dma.hbm_to_vmem [thread:$0]  %s36, 208, %s38, [#allocation5]
    $region13: #{cnn_forward.1} parent=1 // pred_fallthru
      _
    // Predicated region
    $region14: #{cnn_forward.1} parent=1 // pred_check
      _
    $region15: #{cnn_forward.1} parent=1 // pred_check_branch
      %42 = sbr.rel (0) target = $region17
    $region16: #{cnn_forward.1} parent=1 // pred_region
      %44 = vsyncadd [#allocation5], 0
      %s45 = sshll.u32 %s3, 4
      %s46 = int_to_ptr.hbm [resolvable:$true] %s45
      %s47 = sshll.u32 [#allocation6], 4
      %s48 = int_to_ptr.vmem [resolvable:$true] %s47
      %53 = dma.hbm_to_vmem [thread:$0]  %s46, 26624, %s48, [#allocation5], 128, 128, 8
    $region17: #{cnn_forward.1} parent=1 // pred_fallthru
      _
    // Predicated region
    $region18: #{cnn_forward.1} parent=1 // pred_check
      _
    $region19: #{cnn_forward.1} parent=1 // pred_check_branch
      %55 = sbr.rel (0) target = $region21
    $region20: #{cnn_forward.1} parent=1 // pred_region
      %57 = vsyncadd [#allocation8], 0
      %s59 = sshll.u32 %s4, 4
      %s60 = int_to_ptr.hbm [resolvable:$true] %s59
      %s61 = sshll.u32 [#allocation7], 4
      %s62 = int_to_ptr.vmem [resolvable:$true] %s61
      %64 = dma.hbm_to_vmem [thread:$0]  %s60, 32, %s62, [#allocation8]
    $region21: #{cnn_forward.1} parent=1 // pred_fallthru
      _
    // Predicated region
    $region22: #{cnn_forward.1} parent=1 // pred_check
      _
    $region23: #{cnn_forward.1} parent=1 // pred_check_branch
      %66 = sbr.rel (0) target = $region25
    $region24: #{cnn_forward.1} parent=1 // pred_region
      _
    $region25: #{cnn_forward.1} parent=1 // pred_fallthru
      _
    // Predicated region
    $region26: #{cnn_forward.1} parent=1 // pred_check
      _
    $region27: #{cnn_forward.1} parent=1 // pred_check_branch
      %68 = sbr.rel (0) target = $region29
    $region28: #{cnn_forward.1} parent=1 // pred_region
      %70 = vsyncadd [#allocation8], 0
      %s72 = sshll.u32 %s6, 4
      %s73 = int_to_ptr.hbm [resolvable:$true] %s72
      %s74 = sshll.u32 [#allocation9], 4
      %s75 = int_to_ptr.vmem [resolvable:$true] %s74
      %77 = dma.hbm_to_vmem [thread:$0]  %s73, 16, %s75, [#allocation8]
    $region29: #{cnn_forward.1} parent=1 // pred_fallthru
      _
    // Predicated region
    $region30: #{cnn_forward.1} parent=1 // pred_check
      _
    $region31: #{cnn_forward.1} parent=1 // pred_check_branch
      %79 = sbr.rel (0) target = $region33
    $region32: #{cnn_forward.1} parent=1 // pred_region
      %81 = dma.done [#allocation3], 53248
    $region33: #{cnn_forward.1} parent=1 // pred_fallthru
      _
    // Predicated region
    $region34: #{cnn_forward.1} parent=1 // pred_check
      _
    $region35: #{cnn_forward.1} parent=1 // pred_check_branch
      %83 = sbr.rel (0) target = $region37
    $region36: #{cnn_forward.1} parent=1 // pred_region
      %85 = dma.done [#allocation5], 208
    $region37: #{cnn_forward.1} parent=1 // pred_fallthru
      _
    // Predicated region
    $region38: #{cnn_forward.1} parent=1 // pred_check
      _
    $region39: #{cnn_forward.1} parent=1 // pred_check_branch
      %87 = sbr.rel (0) target = $region41
    $region40: #{cnn_forward.1} parent=1 // pred_region
      %89 = dma.done [#allocation5], 26624
    $region41: #{cnn_forward.1} parent=1 // pred_fallthru
      _
    // Predicated region
    $region42: #{cnn_forward.1} parent=1 // pred_check
      _
    $region43: #{cnn_forward.1} parent=1 // pred_check_branch
      %91 = sbr.rel (0) target = $region45
    $region44: #{cnn_forward.1} parent=1 // pred_region
      %93 = dma.done [#allocation8], 32
    $region45: #{cnn_forward.1} parent=1 // pred_fallthru
      _
    // Predicated region
    $region46: #{cnn_forward.1} parent=1 // pred_check
      _
    $region47: #{cnn_forward.1} parent=1 // pred_check_branch
      %95 = sbr.rel (0) target = $region49
    $region48: #{cnn_forward.1} parent=1 // pred_region
      %97 = dma.done [#allocation8], 16
    $region49: #{cnn_forward.1} parent=1 // pred_fallthru
      _
    %v98 = vld [vmem:[%s0] sm:$0xff]
    %v99 = vld [vmem:[%s0 + $0x8] sm:$0xff]
    %v100 = vld [vmem:[%s0 + $0x10] sm:$0xff]
    %v101 = vld [vmem:[%s0 + $0x18] sm:$0xff]
    %v102 = vpack.c.bf16 %v98, %v98
    %v103 = vpack.c.bf16 %v99, %v99
    %v104 = vpack.c.bf16 %v100, %v100
    %v105 = vpack.c.bf16 %v101, %v101
    %v106 = vld [vmem:[#allocation2] sm:$0xff]
    %v107 = vld [vmem:[#allocation2 + $0x8] sm:$0xff]
    %v108 = vld [vmem:[#allocation2 + $0x10] sm:$0xff]
    %v109 = vld [vmem:[#allocation2 + $0x18] sm:$0xff]
    %v110 = vld [vmem:[#allocation2 + $0x20] sm:$0xff]
    %v111 = vld [vmem:[#allocation2 + $0x28] sm:$0xff]
    %v112 = vld [vmem:[#allocation2 + $0x30] sm:$0xf]
    %v113 = vld [vmem:[#allocation2 + $0x34] sm:$0xff]
    %v114 = vld [vmem:[#allocation2 + $0x3c] sm:$0xff]
    %v115 = vld [vmem:[#allocation2 + $0x44] sm:$0xff]
    %v116 = vld [vmem:[#allocation2 + $0x4c] sm:$0xff]
    %v117 = vld [vmem:[#allocation2 + $0x54] sm:$0xff]
    %v118 = vld [vmem:[#allocation2 + $0x5c] sm:$0xff]
    %v119 = vld [vmem:[#allocation2 + $0x64] sm:$0xf]
    %v120 = vld [vmem:[#allocation2 + $0x68] sm:$0xff]
    %v121 = vld [vmem:[#allocation2 + $0x70] sm:$0xff]
    %v122 = vld [vmem:[#allocation2 + $0x78] sm:$0xff]
    %v123 = vld [vmem:[#allocation2 + $0x80] sm:$0xff]
    %v124 = vld [vmem:[#allocation2 + $0x88] sm:$0xff]
    %v125 = vld [vmem:[#allocation2 + $0x90] sm:$0xff]
    %v126 = vld [vmem:[#allocation2 + $0x98] sm:$0xf]
    %v127 = vld [vmem:[#allocation2 + $0x9c] sm:$0xff]
    %v128 = vld [vmem:[#allocation2 + $0xa4] sm:$0xff]
    %v129 = vld [vmem:[#allocation2 + $0xac] sm:$0xff]
    %v130 = vld [vmem:[#allocation2 + $0xb4] sm:$0xff]
    %v131 = vld [vmem:[#allocation2 + $0xbc] sm:$0xff]
    %v132 = vld [vmem:[#allocation2 + $0xc4] sm:$0xff]
    %v133 = vld [vmem:[#allocation2 + $0xcc] sm:$0xf]
    %v134 = vld [vmem:[#allocation2 + $0xd0] sm:$0xff]
    %v135 = vld [vmem:[#allocation2 + $0xd8] sm:$0xff]
    %v136 = vld [vmem:[#allocation2 + $0xe0] sm:$0xff]
    %v137 = vld [vmem:[#allocation2 + $0xe8] sm:$0xff]
    %v138 = vld [vmem:[#allocation2 + $0xf0] sm:$0xff]
    %v139 = vld [vmem:[#allocation2 + $0xf8] sm:$0xff]
    %v140 = vld [vmem:[#allocation2 + $0x100] sm:$0xf]
    %v141 = vld [vmem:[#allocation2 + $0x104] sm:$0xff]
    %v142 = vld [vmem:[#allocation2 + $0x10c] sm:$0xff]
    %v143 = vld [vmem:[#allocation2 + $0x114] sm:$0xff]
    %v144 = vld [vmem:[#allocation2 + $0x11c] sm:$0xff]
    %v145 = vld [vmem:[#allocation2 + $0x124] sm:$0xff]
    %v146 = vld [vmem:[#allocation2 + $0x12c] sm:$0xff]
    %v147 = vld [vmem:[#allocation2 + $0x134] sm:$0xf]
    %v148 = vld [vmem:[#allocation2 + $0x138] sm:$0xff]
    %v149 = vld [vmem:[#allocation2 + $0x140] sm:$0xff]
    %v150 = vld [vmem:[#allocation2 + $0x148] sm:$0xff]
    %v151 = vld [vmem:[#allocation2 + $0x150] sm:$0xff]
    %v152 = vld [vmem:[#allocation2 + $0x158] sm:$0xff]
    %v153 = vld [vmem:[#allocation2 + $0x160] sm:$0xff]
    %v154 = vld [vmem:[#allocation2 + $0x168] sm:$0xf]
    %v155 = vld [vmem:[#allocation2 + $0x16c] sm:$0xff]
    %v156 = vld [vmem:[#allocation2 + $0x174] sm:$0xff]
    %v157 = vld [vmem:[#allocation2 + $0x17c] sm:$0xff]
    %v158 = vld [vmem:[#allocation2 + $0x184] sm:$0xff]
    %v159 = vld [vmem:[#allocation2 + $0x18c] sm:$0xff]
    %v160 = vld [vmem:[#allocation2 + $0x194] sm:$0xff]
    %v161 = vld [vmem:[#allocation2 + $0x19c] sm:$0xf]
    %v162 = vld [vmem:[#allocation2 + $0x1a0] sm:$0xff]
    %v163 = vld [vmem:[#allocation2 + $0x1a8] sm:$0xff]
    %v164 = vld [vmem:[#allocation2 + $0x1b0] sm:$0xff]
    %v165 = vld [vmem:[#allocation2 + $0x1b8] sm:$0xff]
    %v166 = vld [vmem:[#allocation2 + $0x1c0] sm:$0xff]
    %v167 = vld [vmem:[#allocation2 + $0x1c8] sm:$0xff]
    %v168 = vld [vmem:[#allocation2 + $0x1d0] sm:$0xf]
    %v169 = vld [vmem:[#allocation2 + $0x1d4] sm:$0xff]
    %v170 = vld [vmem:[#allocation2 + $0x1dc] sm:$0xff]
    %v171 = vld [vmem:[#allocation2 + $0x1e4] sm:$0xff]
    %v172 = vld [vmem:[#allocation2 + $0x1ec] sm:$0xff]
    %v173 = vld [vmem:[#allocation2 + $0x1f4] sm:$0xff]
    %v174 = vld [vmem:[#allocation2 + $0x1fc] sm:$0xff]
    %v175 = vld [vmem:[#allocation2 + $0x204] sm:$0xf]
    %v176 = vld [vmem:[#allocation2 + $0x208] sm:$0xff]
    %v177 = vld [vmem:[#allocation2 + $0x210] sm:$0xff]
    %v178 = vld [vmem:[#allocation2 + $0x218] sm:$0xff]
    %v179 = vld [vmem:[#allocation2 + $0x220] sm:$0xff]
    %v180 = vld [vmem:[#allocation2 + $0x228] sm:$0xff]
    %v181 = vld [vmem:[#allocation2 + $0x230] sm:$0xff]
    %v182 = vld [vmem:[#allocation2 + $0x238] sm:$0xf]
    %v183 = vld [vmem:[#allocation2 + $0x23c] sm:$0xff]
    %v184 = vld [vmem:[#allocation2 + $0x244] sm:$0xff]
    %v185 = vld [vmem:[#allocation2 + $0x24c] sm:$0xff]
    %v186 = vld [vmem:[#allocation2 + $0x254] sm:$0xff]
    %v187 = vld [vmem:[#allocation2 + $0x25c] sm:$0xff]
    %v188 = vld [vmem:[#allocation2 + $0x264] sm:$0xff]
    %v189 = vld [vmem:[#allocation2 + $0x26c] sm:$0xf]
    %v190 = vld [vmem:[#allocation2 + $0x270] sm:$0xff]
    %v191 = vld [vmem:[#allocation2 + $0x278] sm:$0xff]
    %v192 = vld [vmem:[#allocation2 + $0x280] sm:$0xff]
    %v193 = vld [vmem:[#allocation2 + $0x288] sm:$0xff]
    %v194 = vld [vmem:[#allocation2 + $0x290] sm:$0xff]
    %v195 = vld [vmem:[#allocation2 + $0x298] sm:$0xff]
    %v196 = vld [vmem:[#allocation2 + $0x2a0] sm:$0xf]
    %v197 = vld [vmem:[#allocation2 + $0x2a4] sm:$0xff]
    %v198 = vld [vmem:[#allocation2 + $0x2ac] sm:$0xff]
    %v199 = vld [vmem:[#allocation2 + $0x2b4] sm:$0xff]
    %v200 = vld [vmem:[#allocation2 + $0x2bc] sm:$0xff]
    %v201 = vld [vmem:[#allocation2 + $0x2c4] sm:$0xff]
    %v202 = vld [vmem:[#allocation2 + $0x2cc] sm:$0xff]
    %v203 = vld [vmem:[#allocation2 + $0x2d4] sm:$0xf]
    %v204 = vld [vmem:[#allocation2 + $0x2d8] sm:$0xff]
    %v205 = vld [vmem:[#allocation2 + $0x2e0] sm:$0xff]
    %v206 = vld [vmem:[#allocation2 + $0x2e8] sm:$0xff]
    %v207 = vld [vmem:[#allocation2 + $0x2f0] sm:$0xff]
    %v208 = vld [vmem:[#allocation2 + $0x2f8] sm:$0xff]
    %v209 = vld [vmem:[#allocation2 + $0x300] sm:$0xff]
    %v210 = vld [vmem:[#allocation2 + $0x308] sm:$0xf]
    %v211 = vld [vmem:[#allocation2 + $0x30c] sm:$0xff]
    %v212 = vld [vmem:[#allocation2 + $0x314] sm:$0xff]
    %v213 = vld [vmem:[#allocation2 + $0x31c] sm:$0xff]
    %v214 = vld [vmem:[#allocation2 + $0x324] sm:$0xff]
    %v215 = vld [vmem:[#allocation2 + $0x32c] sm:$0xff]
    %v216 = vld [vmem:[#allocation2 + $0x334] sm:$0xff]
    %v217 = vld [vmem:[#allocation2 + $0x33c] sm:$0xf]
    %v218 = vld [vmem:[#allocation2 + $0x340] sm:$0xff]
    %v219 = vld [vmem:[#allocation2 + $0x348] sm:$0xff]
    %v220 = vld [vmem:[#allocation2 + $0x350] sm:$0xff]
    %v221 = vld [vmem:[#allocation2 + $0x358] sm:$0xff]
    %v222 = vld [vmem:[#allocation2 + $0x360] sm:$0xff]
    %v223 = vld [vmem:[#allocation2 + $0x368] sm:$0xff]
    %v224 = vld [vmem:[#allocation2 + $0x370] sm:$0xf]
    %v225 = vld [vmem:[#allocation2 + $0x374] sm:$0xff]
    %v226 = vld [vmem:[#allocation2 + $0x37c] sm:$0xff]
    %v227 = vld [vmem:[#allocation2 + $0x384] sm:$0xff]
    %v228 = vld [vmem:[#allocation2 + $0x38c] sm:$0xff]
    %v229 = vld [vmem:[#allocation2 + $0x394] sm:$0xff]
    %v230 = vld [vmem:[#allocation2 + $0x39c] sm:$0xff]
    %v231 = vld [vmem:[#allocation2 + $0x3a4] sm:$0xf]
    %v232 = vld [vmem:[#allocation2 + $0x3a8] sm:$0xff]
    %v233 = vld [vmem:[#allocation2 + $0x3b0] sm:$0xff]
    %v234 = vld [vmem:[#allocation2 + $0x3b8] sm:$0xff]
    %v235 = vld [vmem:[#allocation2 + $0x3c0] sm:$0xff]
    %v236 = vld [vmem:[#allocation2 + $0x3c8] sm:$0xff]
    %v237 = vld [vmem:[#allocation2 + $0x3d0] sm:$0xff]
    %v238 = vld [vmem:[#allocation2 + $0x3d8] sm:$0xf]
    %v239 = vld [vmem:[#allocation2 + $0x3dc] sm:$0xff]
    %v240 = vld [vmem:[#allocation2 + $0x3e4] sm:$0xff]
    %v241 = vld [vmem:[#allocation2 + $0x3ec] sm:$0xff]
    %v242 = vld [vmem:[#allocation2 + $0x3f4] sm:$0xff]
    %v243 = vld [vmem:[#allocation2 + $0x3fc] sm:$0xff]
    %v244 = vld [vmem:[#allocation2 + $0x404] sm:$0xff]
    %v245 = vld [vmem:[#allocation2 + $0x40c] sm:$0xf]
    %v246 = vld [vmem:[#allocation2 + $0x410] sm:$0xff]
    %v247 = vld [vmem:[#allocation2 + $0x418] sm:$0xff]
    %v248 = vld [vmem:[#allocation2 + $0x420] sm:$0xff]
    %v249 = vld [vmem:[#allocation2 + $0x428] sm:$0xff]
    %v250 = vld [vmem:[#allocation2 + $0x430] sm:$0xff]
    %v251 = vld [vmem:[#allocation2 + $0x438] sm:$0xff]
    %v252 = vld [vmem:[#allocation2 + $0x440] sm:$0xf]
    %v253 = vld [vmem:[#allocation2 + $0x444] sm:$0xff]
    %v254 = vld [vmem:[#allocation2 + $0x44c] sm:$0xff]
    %v255 = vld [vmem:[#allocation2 + $0x454] sm:$0xff]
    %v256 = vld [vmem:[#allocation2 + $0x45c] sm:$0xff]
    %v257 = vld [vmem:[#allocation2 + $0x464] sm:$0xff]
    %v258 = vld [vmem:[#allocation2 + $0x46c] sm:$0xff]
    %v259 = vld [vmem:[#allocation2 + $0x474] sm:$0xf]
    %v260 = vld [vmem:[#allocation2 + $0x478] sm:$0xff]
    %v261 = vld [vmem:[#allocation2 + $0x480] sm:$0xff]
    %v262 = vld [vmem:[#allocation2 + $0x488] sm:$0xff]
    %v263 = vld [vmem:[#allocation2 + $0x490] sm:$0xff]
    %v264 = vld [vmem:[#allocation2 + $0x498] sm:$0xff]
    %v265 = vld [vmem:[#allocation2 + $0x4a0] sm:$0xff]
    %v266 = vld [vmem:[#allocation2 + $0x4a8] sm:$0xf]
    %v267 = vld [vmem:[#allocation2 + $0x4ac] sm:$0xff]
    %v268 = vld [vmem:[#allocation2 + $0x4b4] sm:$0xff]
    %v269 = vld [vmem:[#allocation2 + $0x4bc] sm:$0xff]
    %v270 = vld [vmem:[#allocation2 + $0x4c4] sm:$0xff]
    %v271 = vld [vmem:[#allocation2 + $0x4cc] sm:$0xff]
    %v272 = vld [vmem:[#allocation2 + $0x4d4] sm:$0xff]
    %v273 = vld [vmem:[#allocation2 + $0x4dc] sm:$0xf]
    %v274 = vld [vmem:[#allocation2 + $0x4e0] sm:$0xff]
    %v275 = vld [vmem:[#allocation2 + $0x4e8] sm:$0xff]
    %v276 = vld [vmem:[#allocation2 + $0x4f0] sm:$0xff]
    %v277 = vld [vmem:[#allocation2 + $0x4f8] sm:$0xff]
    %v278 = vld [vmem:[#allocation2 + $0x500] sm:$0xff]
    %v279 = vld [vmem:[#allocation2 + $0x508] sm:$0xff]
    %v280 = vld [vmem:[#allocation2 + $0x510] sm:$0xf]
    %v281 = vld [vmem:[#allocation2 + $0x514] sm:$0xff]
    %v282 = vld [vmem:[#allocation2 + $0x51c] sm:$0xff]
    %v283 = vld [vmem:[#allocation2 + $0x524] sm:$0xff]
    %v284 = vld [vmem:[#allocation2 + $0x52c] sm:$0xff]
    %v285 = vld [vmem:[#allocation2 + $0x534] sm:$0xff]
    %v286 = vld [vmem:[#allocation2 + $0x53c] sm:$0xff]
    %v287 = vld [vmem:[#allocation2 + $0x544] sm:$0xf]
    %v288 = vld [vmem:[#allocation2 + $0x548] sm:$0xff]
    %v289 = vld [vmem:[#allocation2 + $0x550] sm:$0xff]
    %v290 = vld [vmem:[#allocation2 + $0x558] sm:$0xff]
    %v291 = vld [vmem:[#allocation2 + $0x560] sm:$0xff]
    %v292 = vld [vmem:[#allocation2 + $0x568] sm:$0xff]
    %v293 = vld [vmem:[#allocation2 + $0x570] sm:$0xff]
    %v294 = vld [vmem:[#allocation2 + $0x578] sm:$0xf]
    %v295 = vld [vmem:[#allocation2 + $0x57c] sm:$0xff]
    %v296 = vld [vmem:[#allocation2 + $0x584] sm:$0xff]
    %v297 = vld [vmem:[#allocation2 + $0x58c] sm:$0xff]
    %v298 = vld [vmem:[#allocation2 + $0x594] sm:$0xff]
    %v299 = vld [vmem:[#allocation2 + $0x59c] sm:$0xff]
    %v300 = vld [vmem:[#allocation2 + $0x5a4] sm:$0xff]
    %v301 = vld [vmem:[#allocation2 + $0x5ac] sm:$0xf]
    %v302 = vld [vmem:[#allocation2 + $0x5b0] sm:$0xff]
    %v303 = vld [vmem:[#allocation2 + $0x5b8] sm:$0xff]
    %v304 = vld [vmem:[#allocation2 + $0x5c0] sm:$0xff]
    %v305 = vld [vmem:[#allocation2 + $0x5c8] sm:$0xff]
    %v306 = vld [vmem:[#allocation2 + $0x5d0] sm:$0xff]
    %v307 = vld [vmem:[#allocation2 + $0x5d8] sm:$0xff]
    %v308 = vld [vmem:[#allocation2 + $0x5e0] sm:$0xf]
    %v309 = vld [vmem:[#allocation2 + $0x5e4] sm:$0xff]
    %v310 = vld [vmem:[#allocation2 + $0x5ec] sm:$0xff]
    %v311 = vld [vmem:[#allocation2 + $0x5f4] sm:$0xff]
    %v312 = vld [vmem:[#allocation2 + $0x5fc] sm:$0xff]
    %v313 = vld [vmem:[#allocation2 + $0x604] sm:$0xff]
    %v314 = vld [vmem:[#allocation2 + $0x60c] sm:$0xff]
    %v315 = vld [vmem:[#allocation2 + $0x614] sm:$0xf]
    %v316 = vld [vmem:[#allocation2 + $0x618] sm:$0xff]
    %v317 = vld [vmem:[#allocation2 + $0x620] sm:$0xff]
    %v318 = vld [vmem:[#allocation2 + $0x628] sm:$0xff]
    %v319 = vld [vmem:[#allocation2 + $0x630] sm:$0xff]
    %v320 = vld [vmem:[#allocation2 + $0x638] sm:$0xff]
    %v321 = vld [vmem:[#allocation2 + $0x640] sm:$0xff]
    %v322 = vld [vmem:[#allocation2 + $0x648] sm:$0xf]
    %v323 = vld [vmem:[#allocation2 + $0x64c] sm:$0xff]
    %v324 = vld [vmem:[#allocation2 + $0x654] sm:$0xff]
    %v325 = vld [vmem:[#allocation2 + $0x65c] sm:$0xff]
    %v326 = vld [vmem:[#allocation2 + $0x664] sm:$0xff]
    %v327 = vld [vmem:[#allocation2 + $0x66c] sm:$0xff]
    %v328 = vld [vmem:[#allocation2 + $0x674] sm:$0xff]
    %v329 = vld [vmem:[#allocation2 + $0x67c] sm:$0xf]
    %v330 = vld [vmem:[#allocation2 + $0x680] sm:$0xff]
    %v331 = vld [vmem:[#allocation2 + $0x688] sm:$0xff]
    %v332 = vld [vmem:[#allocation2 + $0x690] sm:$0xff]
    %v333 = vld [vmem:[#allocation2 + $0x698] sm:$0xff]
    %v334 = vld [vmem:[#allocation2 + $0x6a0] sm:$0xff]
    %v335 = vld [vmem:[#allocation2 + $0x6a8] sm:$0xff]
    %v336 = vld [vmem:[#allocation2 + $0x6b0] sm:$0xf]
    %v337 = vld [vmem:[#allocation2 + $0x6b4] sm:$0xff]
    %v338 = vld [vmem:[#allocation2 + $0x6bc] sm:$0xff]
    %v339 = vld [vmem:[#allocation2 + $0x6c4] sm:$0xff]
    %v340 = vld [vmem:[#allocation2 + $0x6cc] sm:$0xff]
    %v341 = vld [vmem:[#allocation2 + $0x6d4] sm:$0xff]
    %v342 = vld [vmem:[#allocation2 + $0x6dc] sm:$0xff]
    %v343 = vld [vmem:[#allocation2 + $0x6e4] sm:$0xf]
    %v344 = vld [vmem:[#allocation2 + $0x6e8] sm:$0xff]
    %v345 = vld [vmem:[#allocation2 + $0x6f0] sm:$0xff]
    %v346 = vld [vmem:[#allocation2 + $0x6f8] sm:$0xff]
    %v347 = vld [vmem:[#allocation2 + $0x700] sm:$0xff]
    %v348 = vld [vmem:[#allocation2 + $0x708] sm:$0xff]
    %v349 = vld [vmem:[#allocation2 + $0x710] sm:$0xff]
    %v350 = vld [vmem:[#allocation2 + $0x718] sm:$0xf]
    %v351 = vld [vmem:[#allocation2 + $0x71c] sm:$0xff]
    %v352 = vld [vmem:[#allocation2 + $0x724] sm:$0xff]
    %v353 = vld [vmem:[#allocation2 + $0x72c] sm:$0xff]
    %v354 = vld [vmem:[#allocation2 + $0x734] sm:$0xff]
    %v355 = vld [vmem:[#allocation2 + $0x73c] sm:$0xff]
    %v356 = vld [vmem:[#allocation2 + $0x744] sm:$0xff]
    %v357 = vld [vmem:[#allocation2 + $0x74c] sm:$0xf]
    %v358 = vld [vmem:[#allocation2 + $0x750] sm:$0xff]
    %v359 = vld [vmem:[#allocation2 + $0x758] sm:$0xff]
    %v360 = vld [vmem:[#allocation2 + $0x760] sm:$0xff]
    %v361 = vld [vmem:[#allocation2 + $0x768] sm:$0xff]
    %v362 = vld [vmem:[#allocation2 + $0x770] sm:$0xff]
    %v363 = vld [vmem:[#allocation2 + $0x778] sm:$0xff]
    %v364 = vld [vmem:[#allocation2 + $0x780] sm:$0xf]
    %v365 = vld [vmem:[#allocation2 + $0x784] sm:$0xff]
    %v366 = vld [vmem:[#allocation2 + $0x78c] sm:$0xff]
    %v367 = vld [vmem:[#allocation2 + $0x794] sm:$0xff]
    %v368 = vld [vmem:[#allocation2 + $0x79c] sm:$0xff]
    %v369 = vld [vmem:[#allocation2 + $0x7a4] sm:$0xff]
    %v370 = vld [vmem:[#allocation2 + $0x7ac] sm:$0xff]
    %v371 = vld [vmem:[#allocation2 + $0x7b4] sm:$0xf]
    %v372 = vld [vmem:[#allocation2 + $0x7b8] sm:$0xff]
    %v373 = vld [vmem:[#allocation2 + $0x7c0] sm:$0xff]
    %v374 = vld [vmem:[#allocation2 + $0x7c8] sm:$0xff]
    %v375 = vld [vmem:[#allocation2 + $0x7d0] sm:$0xff]
    %v376 = vld [vmem:[#allocation2 + $0x7d8] sm:$0xff]
    %v377 = vld [vmem:[#allocation2 + $0x7e0] sm:$0xff]
    %v378 = vld [vmem:[#allocation2 + $0x7e8] sm:$0xf]
    %v379 = vld [vmem:[#allocation2 + $0x7ec] sm:$0xff]
    %v380 = vld [vmem:[#allocation2 + $0x7f4] sm:$0xff]
    %v381 = vld [vmem:[#allocation2 + $0x7fc] sm:$0xff]
    %v382 = vld [vmem:[#allocation2 + $0x804] sm:$0xff]
    %v383 = vld [vmem:[#allocation2 + $0x80c] sm:$0xff]
    %v384 = vld [vmem:[#allocation2 + $0x814] sm:$0xff]
    %v385 = vld [vmem:[#allocation2 + $0x81c] sm:$0xf]
    %v386 = vld [vmem:[#allocation2 + $0x820] sm:$0xff]
    %v387 = vld [vmem:[#allocation2 + $0x828] sm:$0xff]
    %v388 = vld [vmem:[#allocation2 + $0x830] sm:$0xff]
    %v389 = vld [vmem:[#allocation2 + $0x838] sm:$0xff]
    %v390 = vld [vmem:[#allocation2 + $0x840] sm:$0xff]
    %v391 = vld [vmem:[#allocation2 + $0x848] sm:$0xff]
    %v392 = vld [vmem:[#allocation2 + $0x850] sm:$0xf]
    %v393 = vld [vmem:[#allocation2 + $0x854] sm:$0xff]
    %v394 = vld [vmem:[#allocation2 + $0x85c] sm:$0xff]
    %v395 = vld [vmem:[#allocation2 + $0x864] sm:$0xff]
    %v396 = vld [vmem:[#allocation2 + $0x86c] sm:$0xff]
    %v397 = vld [vmem:[#allocation2 + $0x874] sm:$0xff]
    %v398 = vld [vmem:[#allocation2 + $0x87c] sm:$0xff]
    %v399 = vld [vmem:[#allocation2 + $0x884] sm:$0xf]
    %v400 = vld [vmem:[#allocation2 + $0x888] sm:$0xff]
    %v401 = vld [vmem:[#allocation2 + $0x890] sm:$0xff]
    %v402 = vld [vmem:[#allocation2 + $0x898] sm:$0xff]
    %v403 = vld [vmem:[#allocation2 + $0x8a0] sm:$0xff]
    %v404 = vld [vmem:[#allocation2 + $0x8a8] sm:$0xff]
    %v405 = vld [vmem:[#allocation2 + $0x8b0] sm:$0xff]
    %v406 = vld [vmem:[#allocation2 + $0x8b8] sm:$0xf]
    %v407 = vld [vmem:[#allocation2 + $0x8bc] sm:$0xff]
    %v408 = vld [vmem:[#allocation2 + $0x8c4] sm:$0xff]
    %v409 = vld [vmem:[#allocation2 + $0x8cc] sm:$0xff]
    %v410 = vld [vmem:[#allocation2 + $0x8d4] sm:$0xff]
    %v411 = vld [vmem:[#allocation2 + $0x8dc] sm:$0xff]
    %v412 = vld [vmem:[#allocation2 + $0x8e4] sm:$0xff]
    %v413 = vld [vmem:[#allocation2 + $0x8ec] sm:$0xf]
    %v414 = vld [vmem:[#allocation2 + $0x8f0] sm:$0xff]
    %v415 = vld [vmem:[#allocation2 + $0x8f8] sm:$0xff]
    %v416 = vld [vmem:[#allocation2 + $0x900] sm:$0xff]
    %v417 = vld [vmem:[#allocation2 + $0x908] sm:$0xff]
    %v418 = vld [vmem:[#allocation2 + $0x910] sm:$0xff]
    %v419 = vld [vmem:[#allocation2 + $0x918] sm:$0xff]
    %v420 = vld [vmem:[#allocation2 + $0x920] sm:$0xf]
    %v421 = vld [vmem:[#allocation2 + $0x924] sm:$0xff]
    %v422 = vld [vmem:[#allocation2 + $0x92c] sm:$0xff]
    %v423 = vld [vmem:[#allocation2 + $0x934] sm:$0xff]
    %v424 = vld [vmem:[#allocation2 + $0x93c] sm:$0xff]
    %v425 = vld [vmem:[#allocation2 + $0x944] sm:$0xff]
    %v426 = vld [vmem:[#allocation2 + $0x94c] sm:$0xff]
    %v427 = vld [vmem:[#allocation2 + $0x954] sm:$0xf]
    %v428 = vld [vmem:[#allocation2 + $0x958] sm:$0xff]
    %v429 = vld [vmem:[#allocation2 + $0x960] sm:$0xff]
    %v430 = vld [vmem:[#allocation2 + $0x968] sm:$0xff]
    %v431 = vld [vmem:[#allocation2 + $0x970] sm:$0xff]
    %v432 = vld [vmem:[#allocation2 + $0x978] sm:$0xff]
    %v433 = vld [vmem:[#allocation2 + $0x980] sm:$0xff]
    %v434 = vld [vmem:[#allocation2 + $0x988] sm:$0xf]
    %v435 = vld [vmem:[#allocation2 + $0x98c] sm:$0xff]
    %v436 = vld [vmem:[#allocation2 + $0x994] sm:$0xff]
    %v437 = vld [vmem:[#allocation2 + $0x99c] sm:$0xff]
    %v438 = vld [vmem:[#allocation2 + $0x9a4] sm:$0xff]
    %v439 = vld [vmem:[#allocation2 + $0x9ac] sm:$0xff]
    %v440 = vld [vmem:[#allocation2 + $0x9b4] sm:$0xff]
    %v441 = vld [vmem:[#allocation2 + $0x9bc] sm:$0xf]
    %v442 = vld [vmem:[#allocation2 + $0x9c0] sm:$0xff]
    %v443 = vld [vmem:[#allocation2 + $0x9c8] sm:$0xff]
    %v444 = vld [vmem:[#allocation2 + $0x9d0] sm:$0xff]
    %v445 = vld [vmem:[#allocation2 + $0x9d8] sm:$0xff]
    %v446 = vld [vmem:[#allocation2 + $0x9e0] sm:$0xff]
    %v447 = vld [vmem:[#allocation2 + $0x9e8] sm:$0xff]
    %v448 = vld [vmem:[#allocation2 + $0x9f0] sm:$0xf]
    %v449 = vld [vmem:[#allocation2 + $0x9f4] sm:$0xff]
    %v450 = vld [vmem:[#allocation2 + $0x9fc] sm:$0xff]
    %v451 = vld [vmem:[#allocation2 + $0xa04] sm:$0xff]
    %v452 = vld [vmem:[#allocation2 + $0xa0c] sm:$0xff]
    %v453 = vld [vmem:[#allocation2 + $0xa14] sm:$0xff]
    %v454 = vld [vmem:[#allocation2 + $0xa1c] sm:$0xff]
    %v455 = vld [vmem:[#allocation2 + $0xa24] sm:$0xf]
    %v456 = vld [vmem:[#allocation2 + $0xa28] sm:$0xff]
    %v457 = vld [vmem:[#allocation2 + $0xa30] sm:$0xff]
    %v458 = vld [vmem:[#allocation2 + $0xa38] sm:$0xff]
    %v459 = vld [vmem:[#allocation2 + $0xa40] sm:$0xff]
    %v460 = vld [vmem:[#allocation2 + $0xa48] sm:$0xff]
    %v461 = vld [vmem:[#allocation2 + $0xa50] sm:$0xff]
    %v462 = vld [vmem:[#allocation2 + $0xa58] sm:$0xf]
    %v463 = vld [vmem:[#allocation2 + $0xa5c] sm:$0xff]
    %v464 = vld [vmem:[#allocation2 + $0xa64] sm:$0xff]
    %v465 = vld [vmem:[#allocation2 + $0xa6c] sm:$0xff]
    %v466 = vld [vmem:[#allocation2 + $0xa74] sm:$0xff]
    %v467 = vld [vmem:[#allocation2 + $0xa7c] sm:$0xff]
    %v468 = vld [vmem:[#allocation2 + $0xa84] sm:$0xff]
    %v469 = vld [vmem:[#allocation2 + $0xa8c] sm:$0xf]
    %v470 = vld [vmem:[#allocation2 + $0xa90] sm:$0xff]
    %v471 = vld [vmem:[#allocation2 + $0xa98] sm:$0xff]
    %v472 = vld [vmem:[#allocation2 + $0xaa0] sm:$0xff]
    %v473 = vld [vmem:[#allocation2 + $0xaa8] sm:$0xff]
    %v474 = vld [vmem:[#allocation2 + $0xab0] sm:$0xff]
    %v475 = vld [vmem:[#allocation2 + $0xab8] sm:$0xff]
    %v476 = vld [vmem:[#allocation2 + $0xac0] sm:$0xf]
    %v477 = vld [vmem:[#allocation2 + $0xac4] sm:$0xff]
    %v478 = vld [vmem:[#allocation2 + $0xacc] sm:$0xff]
    %v479 = vld [vmem:[#allocation2 + $0xad4] sm:$0xff]
    %v480 = vld [vmem:[#allocation2 + $0xadc] sm:$0xff]
    %v481 = vld [vmem:[#allocation2 + $0xae4] sm:$0xff]
    %v482 = vld [vmem:[#allocation2 + $0xaec] sm:$0xff]
    %v483 = vld [vmem:[#allocation2 + $0xaf4] sm:$0xf]
    %v484 = vld [vmem:[#allocation2 + $0xaf8] sm:$0xff]
    %v485 = vld [vmem:[#allocation2 + $0xb00] sm:$0xff]
    %v486 = vld [vmem:[#allocation2 + $0xb08] sm:$0xff]
    %v487 = vld [vmem:[#allocation2 + $0xb10] sm:$0xff]
    %v488 = vld [vmem:[#allocation2 + $0xb18] sm:$0xff]
    %v489 = vld [vmem:[#allocation2 + $0xb20] sm:$0xff]
    %v490 = vld [vmem:[#allocation2 + $0xb28] sm:$0xf]
    %v491 = vld [vmem:[#allocation2 + $0xb2c] sm:$0xff]
    %v492 = vld [vmem:[#allocation2 + $0xb34] sm:$0xff]
    %v493 = vld [vmem:[#allocation2 + $0xb3c] sm:$0xff]
    %v494 = vld [vmem:[#allocation2 + $0xb44] sm:$0xff]
    %v495 = vld [vmem:[#allocation2 + $0xb4c] sm:$0xff]
    %v496 = vld [vmem:[#allocation2 + $0xb54] sm:$0xff]
    %v497 = vld [vmem:[#allocation2 + $0xb5c] sm:$0xf]
    %v498 = vld [vmem:[#allocation2 + $0xb60] sm:$0xff]
    %v499 = vld [vmem:[#allocation2 + $0xb68] sm:$0xff]
    %v500 = vld [vmem:[#allocation2 + $0xb70] sm:$0xff]
    %v501 = vld [vmem:[#allocation2 + $0xb78] sm:$0xff]
    %v502 = vld [vmem:[#allocation2 + $0xb80] sm:$0xff]
    %v503 = vld [vmem:[#allocation2 + $0xb88] sm:$0xff]
    %v504 = vld [vmem:[#allocation2 + $0xb90] sm:$0xf]
    %v505 = vld [vmem:[#allocation2 + $0xb94] sm:$0xff]
    %v506 = vld [vmem:[#allocation2 + $0xb9c] sm:$0xff]
    %v507 = vld [vmem:[#allocation2 + $0xba4] sm:$0xff]
    %v508 = vld [vmem:[#allocation2 + $0xbac] sm:$0xff]
    %v509 = vld [vmem:[#allocation2 + $0xbb4] sm:$0xff]
    %v510 = vld [vmem:[#allocation2 + $0xbbc] sm:$0xff]
    %v511 = vld [vmem:[#allocation2 + $0xbc4] sm:$0xf]
    %v512 = vld [vmem:[#allocation2 + $0xbc8] sm:$0xff]
    %v513 = vld [vmem:[#allocation2 + $0xbd0] sm:$0xff]
    %v514 = vld [vmem:[#allocation2 + $0xbd8] sm:$0xff]
    %v515 = vld [vmem:[#allocation2 + $0xbe0] sm:$0xff]
    %v516 = vld [vmem:[#allocation2 + $0xbe8] sm:$0xff]
    %v517 = vld [vmem:[#allocation2 + $0xbf0] sm:$0xff]
    %v518 = vld [vmem:[#allocation2 + $0xbf8] sm:$0xf]
    %v519 = vld [vmem:[#allocation2 + $0xbfc] sm:$0xff]
    %v520 = vld [vmem:[#allocation2 + $0xc04] sm:$0xff]
    %v521 = vld [vmem:[#allocation2 + $0xc0c] sm:$0xff]
    %v522 = vld [vmem:[#allocation2 + $0xc14] sm:$0xff]
    %v523 = vld [vmem:[#allocation2 + $0xc1c] sm:$0xff]
    %v524 = vld [vmem:[#allocation2 + $0xc24] sm:$0xff]
    %v525 = vld [vmem:[#allocation2 + $0xc2c] sm:$0xf]
    %v526 = vld [vmem:[#allocation2 + $0xc30] sm:$0xff]
    %v527 = vld [vmem:[#allocation2 + $0xc38] sm:$0xff]
    %v528 = vld [vmem:[#allocation2 + $0xc40] sm:$0xff]
    %v529 = vld [vmem:[#allocation2 + $0xc48] sm:$0xff]
    %v530 = vld [vmem:[#allocation2 + $0xc50] sm:$0xff]
    %v531 = vld [vmem:[#allocation2 + $0xc58] sm:$0xff]
    %v532 = vld [vmem:[#allocation2 + $0xc60] sm:$0xf]
    %v533 = vld [vmem:[#allocation2 + $0xc64] sm:$0xff]
    %v534 = vld [vmem:[#allocation2 + $0xc6c] sm:$0xff]
    %v535 = vld [vmem:[#allocation2 + $0xc74] sm:$0xff]
    %v536 = vld [vmem:[#allocation2 + $0xc7c] sm:$0xff]
    %v537 = vld [vmem:[#allocation2 + $0xc84] sm:$0xff]
    %v538 = vld [vmem:[#allocation2 + $0xc8c] sm:$0xff]
    %v539 = vld [vmem:[#allocation2 + $0xc94] sm:$0xf]
    %v540 = vld [vmem:[#allocation2 + $0xc98] sm:$0xff]
    %v541 = vld [vmem:[#allocation2 + $0xca0] sm:$0xff]
    %v542 = vld [vmem:[#allocation2 + $0xca8] sm:$0xff]
    %v543 = vld [vmem:[#allocation2 + $0xcb0] sm:$0xff]
    %v544 = vld [vmem:[#allocation2 + $0xcb8] sm:$0xff]
    %v545 = vld [vmem:[#allocation2 + $0xcc0] sm:$0xff]
    %v546 = vld [vmem:[#allocation2 + $0xcc8] sm:$0xf]
    %v547 = vld [vmem:[#allocation2 + $0xccc] sm:$0xff]
    %v548 = vld [vmem:[#allocation2 + $0xcd4] sm:$0xff]
    %v549 = vld [vmem:[#allocation2 + $0xcdc] sm:$0xff]
    %v550 = vld [vmem:[#allocation2 + $0xce4] sm:$0xff]
    %v551 = vld [vmem:[#allocation2 + $0xcec] sm:$0xff]
    %v552 = vld [vmem:[#allocation2 + $0xcf4] sm:$0xff]
    %v553 = vld [vmem:[#allocation2 + $0xcfc] sm:$0xf]
    %v554 = vld [vmem:[#allocation4] sm:$0xff]
    %v555 = vld [vmem:[#allocation4 + $0x8] sm:$0x1f]
    %v558 = vperm.slane %v554, 0
    %v559 = vperm.slane %v554, 1
    %v560 = vperm.slane %v554, 2
    %v561 = vperm.slane %v554, 3
    %v562 = vperm.slane %v554, 4
    %v563 = vperm.slane %v554, 5
    %v564 = vperm.slane %v554, 6
    %v565 = vperm.slane %v554, 7
    %v566 = vperm.slane %v555, 0
    %v567 = vperm.slane %v555, 1
    %v568 = vperm.slane %v555, 2
    %v569 = vperm.slane %v555, 3
    %v570 = vperm.slane %v555, 4
    %v1032 = vunpack.c.l.b16 %v106
    %v1033 = vunpack.c.h.b16 %v106
    %v1034 = vunpack.c.l.b16 %v107
    %v1035 = vunpack.c.h.b16 %v107
    %v1036 = vunpack.c.l.b16 %v108
    %v1037 = vunpack.c.h.b16 %v108
    %v1038 = vunpack.c.l.b16 %v109
    %v1039 = vunpack.c.h.b16 %v109
    %v1040 = vunpack.c.l.b16 %v110
    %v1041 = vunpack.c.h.b16 %v110
    %v1042 = vunpack.c.l.b16 %v111
    %v1043 = vunpack.c.h.b16 %v111
    %v1044 = vunpack.c.l.b16 %v112
    %v1045 = vunpack.c.l.b16 %v113
    %v1046 = vunpack.c.h.b16 %v113
    %v1047 = vunpack.c.l.b16 %v114
    %v1048 = vunpack.c.h.b16 %v114
    %v1049 = vunpack.c.l.b16 %v115
    %v1050 = vunpack.c.h.b16 %v115
    %v1051 = vunpack.c.l.b16 %v116
    %v1052 = vunpack.c.h.b16 %v116
    %v1053 = vunpack.c.l.b16 %v117
    %v1054 = vunpack.c.h.b16 %v117
    %v1055 = vunpack.c.l.b16 %v118
    %v1056 = vunpack.c.h.b16 %v118
    %v1057 = vunpack.c.l.b16 %v119
    %v1058 = vunpack.c.l.b16 %v120
    %v1059 = vunpack.c.h.b16 %v120
    %v1060 = vunpack.c.l.b16 %v121
    %v1061 = vunpack.c.h.b16 %v121
    %v1062 = vunpack.c.l.b16 %v122
    %v1063 = vunpack.c.h.b16 %v122
    %v1064 = vunpack.c.l.b16 %v123
    %v1065 = vunpack.c.h.b16 %v123
    %v1066 = vunpack.c.l.b16 %v124
    %v1067 = vunpack.c.h.b16 %v124
    %v1068 = vunpack.c.l.b16 %v125
    %v1069 = vunpack.c.h.b16 %v125
    %v1070 = vunpack.c.l.b16 %v126
    %v1071 = vunpack.c.l.b16 %v127
    %v1072 = vunpack.c.h.b16 %v127
    %v1073 = vunpack.c.l.b16 %v128
    %v1074 = vunpack.c.h.b16 %v128
    %v1075 = vunpack.c.l.b16 %v129
    %v1076 = vunpack.c.h.b16 %v129
    %v1077 = vunpack.c.l.b16 %v130
    %v1078 = vunpack.c.h.b16 %v130
    %v1079 = vunpack.c.l.b16 %v131
    %v1080 = vunpack.c.h.b16 %v131
    %v1081 = vunpack.c.l.b16 %v132
    %v1082 = vunpack.c.h.b16 %v132
    %v1083 = vunpack.c.l.b16 %v133
    %v1084 = vunpack.c.l.b16 %v134
    %v1085 = vunpack.c.h.b16 %v134
    %v1086 = vunpack.c.l.b16 %v135
    %v1087 = vunpack.c.h.b16 %v135
    %v1088 = vunpack.c.l.b16 %v136
    %v1089 = vunpack.c.h.b16 %v136
    %v1090 = vunpack.c.l.b16 %v137
    %v1091 = vunpack.c.h.b16 %v137
    %v1092 = vunpack.c.l.b16 %v138
    %v1093 = vunpack.c.h.b16 %v138
    %v1094 = vunpack.c.l.b16 %v139
    %v1095 = vunpack.c.h.b16 %v139
    %v1096 = vunpack.c.l.b16 %v140
    %v1097 = vunpack.c.l.b16 %v141
    %v1098 = vunpack.c.h.b16 %v141
    %v1099 = vunpack.c.l.b16 %v142
    %v1100 = vunpack.c.h.b16 %v142
    %v1101 = vunpack.c.l.b16 %v143
    %v1102 = vunpack.c.h.b16 %v143
    %v1103 = vunpack.c.l.b16 %v144
    %v1104 = vunpack.c.h.b16 %v144
    %v1105 = vunpack.c.l.b16 %v145
    %v1106 = vunpack.c.h.b16 %v145
    %v1107 = vunpack.c.l.b16 %v146
    %v1108 = vunpack.c.h.b16 %v146
    %v1109 = vunpack.c.l.b16 %v147
    %v1110 = vunpack.c.l.b16 %v148
    %v1111 = vunpack.c.h.b16 %v148
    %v1112 = vunpack.c.l.b16 %v149
    %v1113 = vunpack.c.h.b16 %v149
    %v1114 = vunpack.c.l.b16 %v150
    %v1115 = vunpack.c.h.b16 %v150
    %v1116 = vunpack.c.l.b16 %v151
    %v1117 = vunpack.c.h.b16 %v151
    %v1118 = vunpack.c.l.b16 %v152
    %v1119 = vunpack.c.h.b16 %v152
    %v1120 = vunpack.c.l.b16 %v153
    %v1121 = vunpack.c.h.b16 %v153
    %v1122 = vunpack.c.l.b16 %v154
    %v1123 = vunpack.c.l.b16 %v155
    %v1124 = vunpack.c.h.b16 %v155
    %v1125 = vunpack.c.l.b16 %v156
    %v1126 = vunpack.c.h.b16 %v156
    %v1127 = vunpack.c.l.b16 %v157
    %v1128 = vunpack.c.h.b16 %v157
    %v1129 = vunpack.c.l.b16 %v158
    %v1130 = vunpack.c.h.b16 %v158
    %v1131 = vunpack.c.l.b16 %v159
    %v1132 = vunpack.c.h.b16 %v159
    %v1133 = vunpack.c.l.b16 %v160
    %v1134 = vunpack.c.h.b16 %v160
    %v1135 = vunpack.c.l.b16 %v161
    %v1136 = vunpack.c.l.b16 %v162
    %v1137 = vunpack.c.h.b16 %v162
    %v1138 = vunpack.c.l.b16 %v163
    %v1139 = vunpack.c.h.b16 %v163
    %v1140 = vunpack.c.l.b16 %v164
    %v1141 = vunpack.c.h.b16 %v164
    %v1142 = vunpack.c.l.b16 %v165
    %v1143 = vunpack.c.h.b16 %v165
    %v1144 = vunpack.c.l.b16 %v166
    %v1145 = vunpack.c.h.b16 %v166
    %v1146 = vunpack.c.l.b16 %v167
    %v1147 = vunpack.c.h.b16 %v167
    %v1148 = vunpack.c.l.b16 %v168
    %v1149 = vunpack.c.l.b16 %v169
    %v1150 = vunpack.c.h.b16 %v169
    %v1151 = vunpack.c.l.b16 %v170
    %v1152 = vunpack.c.h.b16 %v170
    %v1153 = vunpack.c.l.b16 %v171
    %v1154 = vunpack.c.h.b16 %v171
    %v1155 = vunpack.c.l.b16 %v172
    %v1156 = vunpack.c.h.b16 %v172
    %v1157 = vunpack.c.l.b16 %v173
    %v1158 = vunpack.c.h.b16 %v173
    %v1159 = vunpack.c.l.b16 %v174
    %v1160 = vunpack.c.h.b16 %v174
    %v1161 = vunpack.c.l.b16 %v175
    %v1162 = vunpack.c.l.b16 %v176
    %v1163 = vunpack.c.h.b16 %v176
    %v1164 = vunpack.c.l.b16 %v177
    %v1165 = vunpack.c.h.b16 %v177
    %v1166 = vunpack.c.l.b16 %v178
    %v1167 = vunpack.c.h.b16 %v178
    %v1168 = vunpack.c.l.b16 %v179
    %v1169 = vunpack.c.h.b16 %v179
    %v1170 = vunpack.c.l.b16 %v180
    %v1171 = vunpack.c.h.b16 %v180
    %v1172 = vunpack.c.l.b16 %v181
    %v1173 = vunpack.c.h.b16 %v181
    %v1174 = vunpack.c.l.b16 %v182
    %v1175 = vunpack.c.l.b16 %v183
    %v1176 = vunpack.c.h.b16 %v183
    %v1177 = vunpack.c.l.b16 %v184
    %v1178 = vunpack.c.h.b16 %v184
    %v1179 = vunpack.c.l.b16 %v185
    %v1180 = vunpack.c.h.b16 %v185
    %v1181 = vunpack.c.l.b16 %v186
    %v1182 = vunpack.c.h.b16 %v186
    %v1183 = vunpack.c.l.b16 %v187
    %v1184 = vunpack.c.h.b16 %v187
    %v1185 = vunpack.c.l.b16 %v188
    %v1186 = vunpack.c.h.b16 %v188
    %v1187 = vunpack.c.l.b16 %v189
    %v1188 = vunpack.c.l.b16 %v190
    %v1189 = vunpack.c.h.b16 %v190
    %v1190 = vunpack.c.l.b16 %v191
    %v1191 = vunpack.c.h.b16 %v191
    %v1192 = vunpack.c.l.b16 %v192
    %v1193 = vunpack.c.h.b16 %v192
    %v1194 = vunpack.c.l.b16 %v193
    %v1195 = vunpack.c.h.b16 %v193
    %v1196 = vunpack.c.l.b16 %v194
    %v1197 = vunpack.c.h.b16 %v194
    %v1198 = vunpack.c.l.b16 %v195
    %v1199 = vunpack.c.h.b16 %v195
    %v1200 = vunpack.c.l.b16 %v196
    %v1201 = vunpack.c.l.b16 %v197
    %v1202 = vunpack.c.h.b16 %v197
    %v1203 = vunpack.c.l.b16 %v198
    %v1204 = vunpack.c.h.b16 %v198
    %v1205 = vunpack.c.l.b16 %v199
    %v1206 = vunpack.c.h.b16 %v199
    %v1207 = vunpack.c.l.b16 %v200
    %v1208 = vunpack.c.h.b16 %v200
    %v1209 = vunpack.c.l.b16 %v201
    %v1210 = vunpack.c.h.b16 %v201
    %v1211 = vunpack.c.l.b16 %v202
    %v1212 = vunpack.c.h.b16 %v202
    %v1213 = vunpack.c.l.b16 %v203
    %v1214 = vunpack.c.l.b16 %v204
    %v1215 = vunpack.c.h.b16 %v204
    %v1216 = vunpack.c.l.b16 %v205
    %v1217 = vunpack.c.h.b16 %v205
    %v1218 = vunpack.c.l.b16 %v206
    %v1219 = vunpack.c.h.b16 %v206
    %v1220 = vunpack.c.l.b16 %v207
    %v1221 = vunpack.c.h.b16 %v207
    %v1222 = vunpack.c.l.b16 %v208
    %v1223 = vunpack.c.h.b16 %v208
    %v1224 = vunpack.c.l.b16 %v209
    %v1225 = vunpack.c.h.b16 %v209
    %v1226 = vunpack.c.l.b16 %v210
    %v1227 = vunpack.c.l.b16 %v211
    %v1228 = vunpack.c.h.b16 %v211
    %v1229 = vunpack.c.l.b16 %v212
    %v1230 = vunpack.c.h.b16 %v212
    %v1231 = vunpack.c.l.b16 %v213
    %v1232 = vunpack.c.h.b16 %v213
    %v1233 = vunpack.c.l.b16 %v214
    %v1234 = vunpack.c.h.b16 %v214
    %v1235 = vunpack.c.l.b16 %v215
    %v1236 = vunpack.c.h.b16 %v215
    %v1237 = vunpack.c.l.b16 %v216
    %v1238 = vunpack.c.h.b16 %v216
    %v1239 = vunpack.c.l.b16 %v217
    %v1240 = vunpack.c.l.b16 %v218
    %v1241 = vunpack.c.h.b16 %v218
    %v1242 = vunpack.c.l.b16 %v219
    %v1243 = vunpack.c.h.b16 %v219
    %v1244 = vunpack.c.l.b16 %v220
    %v1245 = vunpack.c.h.b16 %v220
    %v1246 = vunpack.c.l.b16 %v221
    %v1247 = vunpack.c.h.b16 %v221
    %v1248 = vunpack.c.l.b16 %v222
    %v1249 = vunpack.c.h.b16 %v222
    %v1250 = vunpack.c.l.b16 %v223
    %v1251 = vunpack.c.h.b16 %v223
    %v1252 = vunpack.c.l.b16 %v224
    %v1253 = vunpack.c.l.b16 %v225
    %v1254 = vunpack.c.h.b16 %v225
    %v1255 = vunpack.c.l.b16 %v226
    %v1256 = vunpack.c.h.b16 %v226
    %v1257 = vunpack.c.l.b16 %v227
    %v1258 = vunpack.c.h.b16 %v227
    %v1259 = vunpack.c.l.b16 %v228
    %v1260 = vunpack.c.h.b16 %v228
    %v1261 = vunpack.c.l.b16 %v229
    %v1262 = vunpack.c.h.b16 %v229
    %v1263 = vunpack.c.l.b16 %v230
    %v1264 = vunpack.c.h.b16 %v230
    %v1265 = vunpack.c.l.b16 %v231
    %v1266 = vunpack.c.l.b16 %v232
    %v1267 = vunpack.c.h.b16 %v232
    %v1268 = vunpack.c.l.b16 %v233
    %v1269 = vunpack.c.h.b16 %v233
    %v1270 = vunpack.c.l.b16 %v234
    %v1271 = vunpack.c.h.b16 %v234
    %v1272 = vunpack.c.l.b16 %v235
    %v1273 = vunpack.c.h.b16 %v235
    %v1274 = vunpack.c.l.b16 %v236
    %v1275 = vunpack.c.h.b16 %v236
    %v1276 = vunpack.c.l.b16 %v237
    %v1277 = vunpack.c.h.b16 %v237
    %v1278 = vunpack.c.l.b16 %v238
    %v1279 = vunpack.c.l.b16 %v239
    %v1280 = vunpack.c.h.b16 %v239
    %v1281 = vunpack.c.l.b16 %v240
    %v1282 = vunpack.c.h.b16 %v240
    %v1283 = vunpack.c.l.b16 %v241
    %v1284 = vunpack.c.h.b16 %v241
    %v1285 = vunpack.c.l.b16 %v242
    %v1286 = vunpack.c.h.b16 %v242
    %v1287 = vunpack.c.l.b16 %v243
    %v1288 = vunpack.c.h.b16 %v243
    %v1289 = vunpack.c.l.b16 %v244
    %v1290 = vunpack.c.h.b16 %v244
    %v1291 = vunpack.c.l.b16 %v245
    %v1292 = vunpack.c.l.b16 %v246
    %v1293 = vunpack.c.h.b16 %v246
    %v1294 = vunpack.c.l.b16 %v247
    %v1295 = vunpack.c.h.b16 %v247
    %v1296 = vunpack.c.l.b16 %v248
    %v1297 = vunpack.c.h.b16 %v248
    %v1298 = vunpack.c.l.b16 %v249
    %v1299 = vunpack.c.h.b16 %v249
    %v1300 = vunpack.c.l.b16 %v250
    %v1301 = vunpack.c.h.b16 %v250
    %v1302 = vunpack.c.l.b16 %v251
    %v1303 = vunpack.c.h.b16 %v251
    %v1304 = vunpack.c.l.b16 %v252
    %v1305 = vunpack.c.l.b16 %v253
    %v1306 = vunpack.c.h.b16 %v253
    %v1307 = vunpack.c.l.b16 %v254
    %v1308 = vunpack.c.h.b16 %v254
    %v1309 = vunpack.c.l.b16 %v255
    %v1310 = vunpack.c.h.b16 %v255
    %v1311 = vunpack.c.l.b16 %v256
    %v1312 = vunpack.c.h.b16 %v256
    %v1313 = vunpack.c.l.b16 %v257
    %v1314 = vunpack.c.h.b16 %v257
    %v1315 = vunpack.c.l.b16 %v258
    %v1316 = vunpack.c.h.b16 %v258
    %v1317 = vunpack.c.l.b16 %v259
    %v1318 = vunpack.c.l.b16 %v260
    %v1319 = vunpack.c.h.b16 %v260
    %v1320 = vunpack.c.l.b16 %v261
    %v1321 = vunpack.c.h.b16 %v261
    %v1322 = vunpack.c.l.b16 %v262
    %v1323 = vunpack.c.h.b16 %v262
    %v1324 = vunpack.c.l.b16 %v263
    %v1325 = vunpack.c.h.b16 %v263
    %v1326 = vunpack.c.l.b16 %v264
    %v1327 = vunpack.c.h.b16 %v264
    %v1328 = vunpack.c.l.b16 %v265
    %v1329 = vunpack.c.h.b16 %v265
    %v1330 = vunpack.c.l.b16 %v266
    %v1331 = vunpack.c.l.b16 %v267
    %v1332 = vunpack.c.h.b16 %v267
    %v1333 = vunpack.c.l.b16 %v268
    %v1334 = vunpack.c.h.b16 %v268
    %v1335 = vunpack.c.l.b16 %v269
    %v1336 = vunpack.c.h.b16 %v269
    %v1337 = vunpack.c.l.b16 %v270
    %v1338 = vunpack.c.h.b16 %v270
    %v1339 = vunpack.c.l.b16 %v271
    %v1340 = vunpack.c.h.b16 %v271
    %v1341 = vunpack.c.l.b16 %v272
    %v1342 = vunpack.c.h.b16 %v272
    %v1343 = vunpack.c.l.b16 %v273
    %v1344 = vunpack.c.l.b16 %v274
    %v1345 = vunpack.c.h.b16 %v274
    %v1346 = vunpack.c.l.b16 %v275
    %v1347 = vunpack.c.h.b16 %v275
    %v1348 = vunpack.c.l.b16 %v276
    %v1349 = vunpack.c.h.b16 %v276
    %v1350 = vunpack.c.l.b16 %v277
    %v1351 = vunpack.c.h.b16 %v277
    %v1352 = vunpack.c.l.b16 %v278
    %v1353 = vunpack.c.h.b16 %v278
    %v1354 = vunpack.c.l.b16 %v279
    %v1355 = vunpack.c.h.b16 %v279
    %v1356 = vunpack.c.l.b16 %v280
    %v1357 = vunpack.c.l.b16 %v281
    %v1358 = vunpack.c.h.b16 %v281
    %v1359 = vunpack.c.l.b16 %v282
    %v1360 = vunpack.c.h.b16 %v282
    %v1361 = vunpack.c.l.b16 %v283
    %v1362 = vunpack.c.h.b16 %v283
    %v1363 = vunpack.c.l.b16 %v284
    %v1364 = vunpack.c.h.b16 %v284
    %v1365 = vunpack.c.l.b16 %v285
    %v1366 = vunpack.c.h.b16 %v285
    %v1367 = vunpack.c.l.b16 %v286
    %v1368 = vunpack.c.h.b16 %v286
    %v1369 = vunpack.c.l.b16 %v287
    %v1370 = vunpack.c.l.b16 %v288
    %v1371 = vunpack.c.h.b16 %v288
    %v1372 = vunpack.c.l.b16 %v289
    %v1373 = vunpack.c.h.b16 %v289
    %v1374 = vunpack.c.l.b16 %v290
    %v1375 = vunpack.c.h.b16 %v290
    %v1376 = vunpack.c.l.b16 %v291
    %v1377 = vunpack.c.h.b16 %v291
    %v1378 = vunpack.c.l.b16 %v292
    %v1379 = vunpack.c.h.b16 %v292
    %v1380 = vunpack.c.l.b16 %v293
    %v1381 = vunpack.c.h.b16 %v293
    %v1382 = vunpack.c.l.b16 %v294
    %v1383 = vunpack.c.l.b16 %v295
    %v1384 = vunpack.c.h.b16 %v295
    %v1385 = vunpack.c.l.b16 %v296
    %v1386 = vunpack.c.h.b16 %v296
    %v1387 = vunpack.c.l.b16 %v297
    %v1388 = vunpack.c.h.b16 %v297
    %v1389 = vunpack.c.l.b16 %v298
    %v1390 = vunpack.c.h.b16 %v298
    %v1391 = vunpack.c.l.b16 %v299
    %v1392 = vunpack.c.h.b16 %v299
    %v1393 = vunpack.c.l.b16 %v300
    %v1394 = vunpack.c.h.b16 %v300
    %v1395 = vunpack.c.l.b16 %v301
    %v1396 = vunpack.c.l.b16 %v302
    %v1397 = vunpack.c.h.b16 %v302
    %v1398 = vunpack.c.l.b16 %v303
    %v1399 = vunpack.c.h.b16 %v303
    %v1400 = vunpack.c.l.b16 %v304
    %v1401 = vunpack.c.h.b16 %v304
    %v1402 = vunpack.c.l.b16 %v305
    %v1403 = vunpack.c.h.b16 %v305
    %v1404 = vunpack.c.l.b16 %v306
    %v1405 = vunpack.c.h.b16 %v306
    %v1406 = vunpack.c.l.b16 %v307
    %v1407 = vunpack.c.h.b16 %v307
    %v1408 = vunpack.c.l.b16 %v308
    %v1409 = vunpack.c.l.b16 %v309
    %v1410 = vunpack.c.h.b16 %v309
    %v1411 = vunpack.c.l.b16 %v310
    %v1412 = vunpack.c.h.b16 %v310
    %v1413 = vunpack.c.l.b16 %v311
    %v1414 = vunpack.c.h.b16 %v311
    %v1415 = vunpack.c.l.b16 %v312
    %v1416 = vunpack.c.h.b16 %v312
    %v1417 = vunpack.c.l.b16 %v313
    %v1418 = vunpack.c.h.b16 %v313
    %v1419 = vunpack.c.l.b16 %v314
    %v1420 = vunpack.c.h.b16 %v314
    %v1421 = vunpack.c.l.b16 %v315
    %v1422 = vunpack.c.l.b16 %v316
    %v1423 = vunpack.c.h.b16 %v316
    %v1424 = vunpack.c.l.b16 %v317
    %v1425 = vunpack.c.h.b16 %v317
    %v1426 = vunpack.c.l.b16 %v318
    %v1427 = vunpack.c.h.b16 %v318
    %v1428 = vunpack.c.l.b16 %v319
    %v1429 = vunpack.c.h.b16 %v319
    %v1430 = vunpack.c.l.b16 %v320
    %v1431 = vunpack.c.h.b16 %v320
    %v1432 = vunpack.c.l.b16 %v321
    %v1433 = vunpack.c.h.b16 %v321
    %v1434 = vunpack.c.l.b16 %v322
    %v1435 = vunpack.c.l.b16 %v323
    %v1436 = vunpack.c.h.b16 %v323
    %v1437 = vunpack.c.l.b16 %v324
    %v1438 = vunpack.c.h.b16 %v324
    %v1439 = vunpack.c.l.b16 %v325
    %v1440 = vunpack.c.h.b16 %v325
    %v1441 = vunpack.c.l.b16 %v326
    %v1442 = vunpack.c.h.b16 %v326
    %v1443 = vunpack.c.l.b16 %v327
    %v1444 = vunpack.c.h.b16 %v327
    %v1445 = vunpack.c.l.b16 %v328
    %v1446 = vunpack.c.h.b16 %v328
    %v1447 = vunpack.c.l.b16 %v329
    %v1448 = vunpack.c.l.b16 %v330
    %v1449 = vunpack.c.h.b16 %v330
    %v1450 = vunpack.c.l.b16 %v331
    %v1451 = vunpack.c.h.b16 %v331
    %v1452 = vunpack.c.l.b16 %v332
    %v1453 = vunpack.c.h.b16 %v332
    %v1454 = vunpack.c.l.b16 %v333
    %v1455 = vunpack.c.h.b16 %v333
    %v1456 = vunpack.c.l.b16 %v334
    %v1457 = vunpack.c.h.b16 %v334
    %v1458 = vunpack.c.l.b16 %v335
    %v1459 = vunpack.c.h.b16 %v335
    %v1460 = vunpack.c.l.b16 %v336
    %v1461 = vunpack.c.l.b16 %v337
    %v1462 = vunpack.c.h.b16 %v337
    %v1463 = vunpack.c.l.b16 %v338
    %v1464 = vunpack.c.h.b16 %v338
    %v1465 = vunpack.c.l.b16 %v339
    %v1466 = vunpack.c.h.b16 %v339
    %v1467 = vunpack.c.l.b16 %v340
    %v1468 = vunpack.c.h.b16 %v340
    %v1469 = vunpack.c.l.b16 %v341
    %v1470 = vunpack.c.h.b16 %v341
    %v1471 = vunpack.c.l.b16 %v342
    %v1472 = vunpack.c.h.b16 %v342
    %v1473 = vunpack.c.l.b16 %v343
    %v1474 = vunpack.c.l.b16 %v344
    %v1475 = vunpack.c.h.b16 %v344
    %v1476 = vunpack.c.l.b16 %v345
    %v1477 = vunpack.c.h.b16 %v345
    %v1478 = vunpack.c.l.b16 %v346
    %v1479 = vunpack.c.h.b16 %v346
    %v1480 = vunpack.c.l.b16 %v347
    %v1481 = vunpack.c.h.b16 %v347
    %v1482 = vunpack.c.l.b16 %v348
    %v1483 = vunpack.c.h.b16 %v348
    %v1484 = vunpack.c.l.b16 %v349
    %v1485 = vunpack.c.h.b16 %v349
    %v1486 = vunpack.c.l.b16 %v350
    %v1487 = vunpack.c.l.b16 %v351
    %v1488 = vunpack.c.h.b16 %v351
    %v1489 = vunpack.c.l.b16 %v352
    %v1490 = vunpack.c.h.b16 %v352
    %v1491 = vunpack.c.l.b16 %v353
    %v1492 = vunpack.c.h.b16 %v353
    %v1493 = vunpack.c.l.b16 %v354
    %v1494 = vunpack.c.h.b16 %v354
    %v1495 = vunpack.c.l.b16 %v355
    %v1496 = vunpack.c.h.b16 %v355
    %v1497 = vunpack.c.l.b16 %v356
    %v1498 = vunpack.c.h.b16 %v356
    %v1499 = vunpack.c.l.b16 %v357
    %v1500 = vunpack.c.l.b16 %v358
    %v1501 = vunpack.c.h.b16 %v358
    %v1502 = vunpack.c.l.b16 %v359
    %v1503 = vunpack.c.h.b16 %v359
    %v1504 = vunpack.c.l.b16 %v360
    %v1505 = vunpack.c.h.b16 %v360
    %v1506 = vunpack.c.l.b16 %v361
    %v1507 = vunpack.c.h.b16 %v361
    %v1508 = vunpack.c.l.b16 %v362
    %v1509 = vunpack.c.h.b16 %v362
    %v1510 = vunpack.c.l.b16 %v363
    %v1511 = vunpack.c.h.b16 %v363
    %v1512 = vunpack.c.l.b16 %v364
    %v1513 = vunpack.c.l.b16 %v365
    %v1514 = vunpack.c.h.b16 %v365
    %v1515 = vunpack.c.l.b16 %v366
    %v1516 = vunpack.c.h.b16 %v366
    %v1517 = vunpack.c.l.b16 %v367
    %v1518 = vunpack.c.h.b16 %v367
    %v1519 = vunpack.c.l.b16 %v368
    %v1520 = vunpack.c.h.b16 %v368
    %v1521 = vunpack.c.l.b16 %v369
    %v1522 = vunpack.c.h.b16 %v369
    %v1523 = vunpack.c.l.b16 %v370
    %v1524 = vunpack.c.h.b16 %v370
    %v1525 = vunpack.c.l.b16 %v371
    %v1526 = vunpack.c.l.b16 %v372
    %v1527 = vunpack.c.h.b16 %v372
    %v1528 = vunpack.c.l.b16 %v373
    %v1529 = vunpack.c.h.b16 %v373
    %v1530 = vunpack.c.l.b16 %v374
    %v1531 = vunpack.c.h.b16 %v374
    %v1532 = vunpack.c.l.b16 %v375
    %v1533 = vunpack.c.h.b16 %v375
    %v1534 = vunpack.c.l.b16 %v376
    %v1535 = vunpack.c.h.b16 %v376
    %v1536 = vunpack.c.l.b16 %v377
    %v1537 = vunpack.c.h.b16 %v377
    %v1538 = vunpack.c.l.b16 %v378
    %v1539 = vunpack.c.l.b16 %v379
    %v1540 = vunpack.c.h.b16 %v379
    %v1541 = vunpack.c.l.b16 %v380
    %v1542 = vunpack.c.h.b16 %v380
    %v1543 = vunpack.c.l.b16 %v381
    %v1544 = vunpack.c.h.b16 %v381
    %v1545 = vunpack.c.l.b16 %v382
    %v1546 = vunpack.c.h.b16 %v382
    %v1547 = vunpack.c.l.b16 %v383
    %v1548 = vunpack.c.h.b16 %v383
    %v1549 = vunpack.c.l.b16 %v384
    %v1550 = vunpack.c.h.b16 %v384
    %v1551 = vunpack.c.l.b16 %v385
    %v1552 = vunpack.c.l.b16 %v386
    %v1553 = vunpack.c.h.b16 %v386
    %v1554 = vunpack.c.l.b16 %v387
    %v1555 = vunpack.c.h.b16 %v387
    %v1556 = vunpack.c.l.b16 %v388
    %v1557 = vunpack.c.h.b16 %v388
    %v1558 = vunpack.c.l.b16 %v389
    %v1559 = vunpack.c.h.b16 %v389
    %v1560 = vunpack.c.l.b16 %v390
    %v1561 = vunpack.c.h.b16 %v390
    %v1562 = vunpack.c.l.b16 %v391
    %v1563 = vunpack.c.h.b16 %v391
    %v1564 = vunpack.c.l.b16 %v392
    %v1565 = vunpack.c.l.b16 %v393
    %v1566 = vunpack.c.h.b16 %v393
    %v1567 = vunpack.c.l.b16 %v394
    %v1568 = vunpack.c.h.b16 %v394
    %v1569 = vunpack.c.l.b16 %v395
    %v1570 = vunpack.c.h.b16 %v395
    %v1571 = vunpack.c.l.b16 %v396
    %v1572 = vunpack.c.h.b16 %v396
    %v1573 = vunpack.c.l.b16 %v397
    %v1574 = vunpack.c.h.b16 %v397
    %v1575 = vunpack.c.l.b16 %v398
    %v1576 = vunpack.c.h.b16 %v398
    %v1577 = vunpack.c.l.b16 %v399
    %v1578 = vunpack.c.l.b16 %v400
    %v1579 = vunpack.c.h.b16 %v400
    %v1580 = vunpack.c.l.b16 %v401
    %v1581 = vunpack.c.h.b16 %v401
    %v1582 = vunpack.c.l.b16 %v402
    %v1583 = vunpack.c.h.b16 %v402
    %v1584 = vunpack.c.l.b16 %v403
    %v1585 = vunpack.c.h.b16 %v403
    %v1586 = vunpack.c.l.b16 %v404
    %v1587 = vunpack.c.h.b16 %v404
    %v1588 = vunpack.c.l.b16 %v405
    %v1589 = vunpack.c.h.b16 %v405
    %v1590 = vunpack.c.l.b16 %v406
    %v1591 = vunpack.c.l.b16 %v407
    %v1592 = vunpack.c.h.b16 %v407
    %v1593 = vunpack.c.l.b16 %v408
    %v1594 = vunpack.c.h.b16 %v408
    %v1595 = vunpack.c.l.b16 %v409
    %v1596 = vunpack.c.h.b16 %v409
    %v1597 = vunpack.c.l.b16 %v410
    %v1598 = vunpack.c.h.b16 %v410
    %v1599 = vunpack.c.l.b16 %v411
    %v1600 = vunpack.c.h.b16 %v411
    %v1601 = vunpack.c.l.b16 %v412
    %v1602 = vunpack.c.h.b16 %v412
    %v1603 = vunpack.c.l.b16 %v413
    %v1604 = vunpack.c.l.b16 %v414
    %v1605 = vunpack.c.h.b16 %v414
    %v1606 = vunpack.c.l.b16 %v415
    %v1607 = vunpack.c.h.b16 %v415
    %v1608 = vunpack.c.l.b16 %v416
    %v1609 = vunpack.c.h.b16 %v416
    %v1610 = vunpack.c.l.b16 %v417
    %v1611 = vunpack.c.h.b16 %v417
    %v1612 = vunpack.c.l.b16 %v418
    %v1613 = vunpack.c.h.b16 %v418
    %v1614 = vunpack.c.l.b16 %v419
    %v1615 = vunpack.c.h.b16 %v419
    %v1616 = vunpack.c.l.b16 %v420
    %v1617 = vunpack.c.l.b16 %v421
    %v1618 = vunpack.c.h.b16 %v421
    %v1619 = vunpack.c.l.b16 %v422
    %v1620 = vunpack.c.h.b16 %v422
    %v1621 = vunpack.c.l.b16 %v423
    %v1622 = vunpack.c.h.b16 %v423
    %v1623 = vunpack.c.l.b16 %v424
    %v1624 = vunpack.c.h.b16 %v424
    %v1625 = vunpack.c.l.b16 %v425
    %v1626 = vunpack.c.h.b16 %v425
    %v1627 = vunpack.c.l.b16 %v426
    %v1628 = vunpack.c.h.b16 %v426
    %v1629 = vunpack.c.l.b16 %v427
    %v1630 = vunpack.c.l.b16 %v428
    %v1631 = vunpack.c.h.b16 %v428
    %v1632 = vunpack.c.l.b16 %v429
    %v1633 = vunpack.c.h.b16 %v429
    %v1634 = vunpack.c.l.b16 %v430
    %v1635 = vunpack.c.h.b16 %v430
    %v1636 = vunpack.c.l.b16 %v431
    %v1637 = vunpack.c.h.b16 %v431
    %v1638 = vunpack.c.l.b16 %v432
    %v1639 = vunpack.c.h.b16 %v432
    %v1640 = vunpack.c.l.b16 %v433
    %v1641 = vunpack.c.h.b16 %v433
    %v1642 = vunpack.c.l.b16 %v434
    %v1643 = vunpack.c.l.b16 %v435
    %v1644 = vunpack.c.h.b16 %v435
    %v1645 = vunpack.c.l.b16 %v436
    %v1646 = vunpack.c.h.b16 %v436
    %v1647 = vunpack.c.l.b16 %v437
    %v1648 = vunpack.c.h.b16 %v437
    %v1649 = vunpack.c.l.b16 %v438
    %v1650 = vunpack.c.h.b16 %v438
    %v1651 = vunpack.c.l.b16 %v439
    %v1652 = vunpack.c.h.b16 %v439
    %v1653 = vunpack.c.l.b16 %v440
    %v1654 = vunpack.c.h.b16 %v440
    %v1655 = vunpack.c.l.b16 %v441
    %v1656 = vunpack.c.l.b16 %v442
    %v1657 = vunpack.c.h.b16 %v442
    %v1658 = vunpack.c.l.b16 %v443
    %v1659 = vunpack.c.h.b16 %v443
    %v1660 = vunpack.c.l.b16 %v444
    %v1661 = vunpack.c.h.b16 %v444
    %v1662 = vunpack.c.l.b16 %v445
    %v1663 = vunpack.c.h.b16 %v445
    %v1664 = vunpack.c.l.b16 %v446
    %v1665 = vunpack.c.h.b16 %v446
    %v1666 = vunpack.c.l.b16 %v447
    %v1667 = vunpack.c.h.b16 %v447
    %v1668 = vunpack.c.l.b16 %v448
    %v1669 = vunpack.c.l.b16 %v449
    %v1670 = vunpack.c.h.b16 %v449
    %v1671 = vunpack.c.l.b16 %v450
    %v1672 = vunpack.c.h.b16 %v450
    %v1673 = vunpack.c.l.b16 %v451
    %v1674 = vunpack.c.h.b16 %v451
    %v1675 = vunpack.c.l.b16 %v452
    %v1676 = vunpack.c.h.b16 %v452
    %v1677 = vunpack.c.l.b16 %v453
    %v1678 = vunpack.c.h.b16 %v453
    %v1679 = vunpack.c.l.b16 %v454
    %v1680 = vunpack.c.h.b16 %v454
    %v1681 = vunpack.c.l.b16 %v455
    %v1682 = vunpack.c.l.b16 %v456
    %v1683 = vunpack.c.h.b16 %v456
    %v1684 = vunpack.c.l.b16 %v457
    %v1685 = vunpack.c.h.b16 %v457
    %v1686 = vunpack.c.l.b16 %v458
    %v1687 = vunpack.c.h.b16 %v458
    %v1688 = vunpack.c.l.b16 %v459
    %v1689 = vunpack.c.h.b16 %v459
    %v1690 = vunpack.c.l.b16 %v460
    %v1691 = vunpack.c.h.b16 %v460
    %v1692 = vunpack.c.l.b16 %v461
    %v1693 = vunpack.c.h.b16 %v461
    %v1694 = vunpack.c.l.b16 %v462
    %v1695 = vunpack.c.l.b16 %v463
    %v1696 = vunpack.c.h.b16 %v463
    %v1697 = vunpack.c.l.b16 %v464
    %v1698 = vunpack.c.h.b16 %v464
    %v1699 = vunpack.c.l.b16 %v465
    %v1700 = vunpack.c.h.b16 %v465
    %v1701 = vunpack.c.l.b16 %v466
    %v1702 = vunpack.c.h.b16 %v466
    %v1703 = vunpack.c.l.b16 %v467
    %v1704 = vunpack.c.h.b16 %v467
    %v1705 = vunpack.c.l.b16 %v468
    %v1706 = vunpack.c.h.b16 %v468
    %v1707 = vunpack.c.l.b16 %v469
    %v1708 = vunpack.c.l.b16 %v470
    %v1709 = vunpack.c.h.b16 %v470
    %v1710 = vunpack.c.l.b16 %v471
    %v1711 = vunpack.c.h.b16 %v471
    %v1712 = vunpack.c.l.b16 %v472
    %v1713 = vunpack.c.h.b16 %v472
    %v1714 = vunpack.c.l.b16 %v473
    %v1715 = vunpack.c.h.b16 %v473
    %v1716 = vunpack.c.l.b16 %v474
    %v1717 = vunpack.c.h.b16 %v474
    %v1718 = vunpack.c.l.b16 %v475
    %v1719 = vunpack.c.h.b16 %v475
    %v1720 = vunpack.c.l.b16 %v476
    %v1721 = vunpack.c.l.b16 %v477
    %v1722 = vunpack.c.h.b16 %v477
    %v1723 = vunpack.c.l.b16 %v478
    %v1724 = vunpack.c.h.b16 %v478
    %v1725 = vunpack.c.l.b16 %v479
    %v1726 = vunpack.c.h.b16 %v479
    %v1727 = vunpack.c.l.b16 %v480
    %v1728 = vunpack.c.h.b16 %v480
    %v1729 = vunpack.c.l.b16 %v481
    %v1730 = vunpack.c.h.b16 %v481
    %v1731 = vunpack.c.l.b16 %v482
    %v1732 = vunpack.c.h.b16 %v482
    %v1733 = vunpack.c.l.b16 %v483
    %v1734 = vunpack.c.l.b16 %v484
    %v1735 = vunpack.c.h.b16 %v484
    %v1736 = vunpack.c.l.b16 %v485
    %v1737 = vunpack.c.h.b16 %v485
    %v1738 = vunpack.c.l.b16 %v486
    %v1739 = vunpack.c.h.b16 %v486
    %v1740 = vunpack.c.l.b16 %v487
    %v1741 = vunpack.c.h.b16 %v487
    %v1742 = vunpack.c.l.b16 %v488
    %v1743 = vunpack.c.h.b16 %v488
    %v1744 = vunpack.c.l.b16 %v489
    %v1745 = vunpack.c.h.b16 %v489
    %v1746 = vunpack.c.l.b16 %v490
    %v1747 = vunpack.c.l.b16 %v491
    %v1748 = vunpack.c.h.b16 %v491
    %v1749 = vunpack.c.l.b16 %v492
    %v1750 = vunpack.c.h.b16 %v492
    %v1751 = vunpack.c.l.b16 %v493
    %v1752 = vunpack.c.h.b16 %v493
    %v1753 = vunpack.c.l.b16 %v494
    %v1754 = vunpack.c.h.b16 %v494
    %v1755 = vunpack.c.l.b16 %v495
    %v1756 = vunpack.c.h.b16 %v495
    %v1757 = vunpack.c.l.b16 %v496
    %v1758 = vunpack.c.h.b16 %v496
    %v1759 = vunpack.c.l.b16 %v497
    %v1760 = vunpack.c.l.b16 %v498
    %v1761 = vunpack.c.h.b16 %v498
    %v1762 = vunpack.c.l.b16 %v499
    %v1763 = vunpack.c.h.b16 %v499
    %v1764 = vunpack.c.l.b16 %v500
    %v1765 = vunpack.c.h.b16 %v500
    %v1766 = vunpack.c.l.b16 %v501
    %v1767 = vunpack.c.h.b16 %v501
    %v1768 = vunpack.c.l.b16 %v502
    %v1769 = vunpack.c.h.b16 %v502
    %v1770 = vunpack.c.l.b16 %v503
    %v1771 = vunpack.c.h.b16 %v503
    %v1772 = vunpack.c.l.b16 %v504
    %v1773 = vunpack.c.l.b16 %v505
    %v1774 = vunpack.c.h.b16 %v505
    %v1775 = vunpack.c.l.b16 %v506
    %v1776 = vunpack.c.h.b16 %v506
    %v1777 = vunpack.c.l.b16 %v507
    %v1778 = vunpack.c.h.b16 %v507
    %v1779 = vunpack.c.l.b16 %v508
    %v1780 = vunpack.c.h.b16 %v508
    %v1781 = vunpack.c.l.b16 %v509
    %v1782 = vunpack.c.h.b16 %v509
    %v1783 = vunpack.c.l.b16 %v510
    %v1784 = vunpack.c.h.b16 %v510
    %v1785 = vunpack.c.l.b16 %v511
    %v1786 = vunpack.c.l.b16 %v512
    %v1787 = vunpack.c.h.b16 %v512
    %v1788 = vunpack.c.l.b16 %v513
    %v1789 = vunpack.c.h.b16 %v513
    %v1790 = vunpack.c.l.b16 %v514
    %v1791 = vunpack.c.h.b16 %v514
    %v1792 = vunpack.c.l.b16 %v515
    %v1793 = vunpack.c.h.b16 %v515
    %v1794 = vunpack.c.l.b16 %v516
    %v1795 = vunpack.c.h.b16 %v516
    %v1796 = vunpack.c.l.b16 %v517
    %v1797 = vunpack.c.h.b16 %v517
    %v1798 = vunpack.c.l.b16 %v518
    %v1799 = vunpack.c.l.b16 %v519
    %v1800 = vunpack.c.h.b16 %v519
    %v1801 = vunpack.c.l.b16 %v520
    %v1802 = vunpack.c.h.b16 %v520
    %v1803 = vunpack.c.l.b16 %v521
    %v1804 = vunpack.c.h.b16 %v521
    %v1805 = vunpack.c.l.b16 %v522
    %v1806 = vunpack.c.h.b16 %v522
    %v1807 = vunpack.c.l.b16 %v523
    %v1808 = vunpack.c.h.b16 %v523
    %v1809 = vunpack.c.l.b16 %v524
    %v1810 = vunpack.c.h.b16 %v524
    %v1811 = vunpack.c.l.b16 %v525
    %v1812 = vunpack.c.l.b16 %v526
    %v1813 = vunpack.c.h.b16 %v526
    %v1814 = vunpack.c.l.b16 %v527
    %v1815 = vunpack.c.h.b16 %v527
    %v1816 = vunpack.c.l.b16 %v528
    %v1817 = vunpack.c.h.b16 %v528
    %v1818 = vunpack.c.l.b16 %v529
    %v1819 = vunpack.c.h.b16 %v529
    %v1820 = vunpack.c.l.b16 %v530
    %v1821 = vunpack.c.h.b16 %v530
    %v1822 = vunpack.c.l.b16 %v531
    %v1823 = vunpack.c.h.b16 %v531
    %v1824 = vunpack.c.l.b16 %v532
    %v1825 = vunpack.c.l.b16 %v533
    %v1826 = vunpack.c.h.b16 %v533
    %v1827 = vunpack.c.l.b16 %v534
    %v1828 = vunpack.c.h.b16 %v534
    %v1829 = vunpack.c.l.b16 %v535
    %v1830 = vunpack.c.h.b16 %v535
    %v1831 = vunpack.c.l.b16 %v536
    %v1832 = vunpack.c.h.b16 %v536
    %v1833 = vunpack.c.l.b16 %v537
    %v1834 = vunpack.c.h.b16 %v537
    %v1835 = vunpack.c.l.b16 %v538
    %v1836 = vunpack.c.h.b16 %v538
    %v1837 = vunpack.c.l.b16 %v539
    %v1838 = vunpack.c.l.b16 %v540
    %v1839 = vunpack.c.h.b16 %v540
    %v1840 = vunpack.c.l.b16 %v541
    %v1841 = vunpack.c.h.b16 %v541
    %v1842 = vunpack.c.l.b16 %v542
    %v1843 = vunpack.c.h.b16 %v542
    %v1844 = vunpack.c.l.b16 %v543
    %v1845 = vunpack.c.h.b16 %v543
    %v1846 = vunpack.c.l.b16 %v544
    %v1847 = vunpack.c.h.b16 %v544
    %v1848 = vunpack.c.l.b16 %v545
    %v1849 = vunpack.c.h.b16 %v545
    %v1850 = vunpack.c.l.b16 %v546
    %v1851 = vunpack.c.l.b16 %v547
    %v1852 = vunpack.c.h.b16 %v547
    %v1853 = vunpack.c.l.b16 %v548
    %v1854 = vunpack.c.h.b16 %v548
    %v1855 = vunpack.c.l.b16 %v549
    %v1856 = vunpack.c.h.b16 %v549
    %v1857 = vunpack.c.l.b16 %v550
    %v1858 = vunpack.c.h.b16 %v550
    %v1859 = vunpack.c.l.b16 %v551
    %v1860 = vunpack.c.h.b16 %v551
    %v1861 = vunpack.c.l.b16 %v552
    %v1862 = vunpack.c.h.b16 %v552
    %v1863 = vunpack.c.l.b16 %v553
    %v1864 = vpack.c.b16 %v1045, %v1032
    %v1865 = vpack.c.b16 %v1046, %v1033
    %v1866 = vpack.c.b16 %v1047, %v1034
    %v1867 = vpack.c.b16 %v1048, %v1035
    %v1868 = vpack.c.b16 %v1049, %v1036
    %v1869 = vpack.c.b16 %v1050, %v1037
    %v1870 = vpack.c.b16 %v1051, %v1038
    %v1871 = vpack.c.b16 %v1052, %v1039
    %v1872 = vpack.c.b16 %v1053, %v1040
    %v1873 = vpack.c.b16 %v1054, %v1041
    %v1874 = vpack.c.b16 %v1055, %v1042
    %v1875 = vpack.c.b16 %v1056, %v1043
    %v1876 = vpack.c.b16 %v1057, %v1044
    %v1877 = vpack.c.b16 %v1071, %v1058
    %v1878 = vpack.c.b16 %v1072, %v1059
    %v1879 = vpack.c.b16 %v1073, %v1060
    %v1880 = vpack.c.b16 %v1074, %v1061
    %v1881 = vpack.c.b16 %v1075, %v1062
    %v1882 = vpack.c.b16 %v1076, %v1063
    %v1883 = vpack.c.b16 %v1077, %v1064
    %v1884 = vpack.c.b16 %v1078, %v1065
    %v1885 = vpack.c.b16 %v1079, %v1066
    %v1886 = vpack.c.b16 %v1080, %v1067
    %v1887 = vpack.c.b16 %v1081, %v1068
    %v1888 = vpack.c.b16 %v1082, %v1069
    %v1889 = vpack.c.b16 %v1083, %v1070
    %v1890 = vpack.c.b16 %v1097, %v1084
    %v1891 = vpack.c.b16 %v1098, %v1085
    %v1892 = vpack.c.b16 %v1099, %v1086
    %v1893 = vpack.c.b16 %v1100, %v1087
    %v1894 = vpack.c.b16 %v1101, %v1088
    %v1895 = vpack.c.b16 %v1102, %v1089
    %v1896 = vpack.c.b16 %v1103, %v1090
    %v1897 = vpack.c.b16 %v1104, %v1091
    %v1898 = vpack.c.b16 %v1105, %v1092
    %v1899 = vpack.c.b16 %v1106, %v1093
    %v1900 = vpack.c.b16 %v1107, %v1094
    %v1901 = vpack.c.b16 %v1108, %v1095
    %v1902 = vpack.c.b16 %v1109, %v1096
    %v1903 = vpack.c.b16 %v1123, %v1110
    %v1904 = vpack.c.b16 %v1124, %v1111
    %v1905 = vpack.c.b16 %v1125, %v1112
    %v1906 = vpack.c.b16 %v1126, %v1113
    %v1907 = vpack.c.b16 %v1127, %v1114
    %v1908 = vpack.c.b16 %v1128, %v1115
    %v1909 = vpack.c.b16 %v1129, %v1116
    %v1910 = vpack.c.b16 %v1130, %v1117
    %v1911 = vpack.c.b16 %v1131, %v1118
    %v1912 = vpack.c.b16 %v1132, %v1119
    %v1913 = vpack.c.b16 %v1133, %v1120
    %v1914 = vpack.c.b16 %v1134, %v1121
    %v1915 = vpack.c.b16 %v1135, %v1122
    %v1916 = vpack.c.b16 %v1149, %v1136
    %v1917 = vpack.c.b16 %v1150, %v1137
    %v1918 = vpack.c.b16 %v1151, %v1138
    %v1919 = vpack.c.b16 %v1152, %v1139
    %v1920 = vpack.c.b16 %v1153, %v1140
    %v1921 = vpack.c.b16 %v1154, %v1141
    %v1922 = vpack.c.b16 %v1155, %v1142
    %v1923 = vpack.c.b16 %v1156, %v1143
    %v1924 = vpack.c.b16 %v1157, %v1144
    %v1925 = vpack.c.b16 %v1158, %v1145
    %v1926 = vpack.c.b16 %v1159, %v1146
    %v1927 = vpack.c.b16 %v1160, %v1147
    %v1928 = vpack.c.b16 %v1161, %v1148
    %v1929 = vpack.c.b16 %v1175, %v1162
    %v1930 = vpack.c.b16 %v1176, %v1163
    %v1931 = vpack.c.b16 %v1177, %v1164
    %v1932 = vpack.c.b16 %v1178, %v1165
    %v1933 = vpack.c.b16 %v1179, %v1166
    %v1934 = vpack.c.b16 %v1180, %v1167
    %v1935 = vpack.c.b16 %v1181, %v1168
    %v1936 = vpack.c.b16 %v1182, %v1169
    %v1937 = vpack.c.b16 %v1183, %v1170
    %v1938 = vpack.c.b16 %v1184, %v1171
    %v1939 = vpack.c.b16 %v1185, %v1172
    %v1940 = vpack.c.b16 %v1186, %v1173
    %v1941 = vpack.c.b16 %v1187, %v1174
    %v1942 = vpack.c.b16 %v1201, %v1188
    %v1943 = vpack.c.b16 %v1202, %v1189
    %v1944 = vpack.c.b16 %v1203, %v1190
    %v1945 = vpack.c.b16 %v1204, %v1191
    %v1946 = vpack.c.b16 %v1205, %v1192
    %v1947 = vpack.c.b16 %v1206, %v1193
    %v1948 = vpack.c.b16 %v1207, %v1194
    %v1949 = vpack.c.b16 %v1208, %v1195
    %v1950 = vpack.c.b16 %v1209, %v1196
    %v1951 = vpack.c.b16 %v1210, %v1197
    %v1952 = vpack.c.b16 %v1211, %v1198
    %v1953 = vpack.c.b16 %v1212, %v1199
    %v1954 = vpack.c.b16 %v1213, %v1200
    %v1955 = vpack.c.b16 %v1227, %v1214
    %v1956 = vpack.c.b16 %v1228, %v1215
    %v1957 = vpack.c.b16 %v1229, %v1216
    %v1958 = vpack.c.b16 %v1230, %v1217
    %v1959 = vpack.c.b16 %v1231, %v1218
    %v1960 = vpack.c.b16 %v1232, %v1219
    %v1961 = vpack.c.b16 %v1233, %v1220
    %v1962 = vpack.c.b16 %v1234, %v1221
    %v1963 = vpack.c.b16 %v1235, %v1222
    %v1964 = vpack.c.b16 %v1236, %v1223
    %v1965 = vpack.c.b16 %v1237, %v1224
    %v1966 = vpack.c.b16 %v1238, %v1225
    %v1967 = vpack.c.b16 %v1239, %v1226
    %v1968 = vpack.c.b16 %v1253, %v1240
    %v1969 = vpack.c.b16 %v1254, %v1241
    %v1970 = vpack.c.b16 %v1255, %v1242
    %v1971 = vpack.c.b16 %v1256, %v1243
    %v1972 = vpack.c.b16 %v1257, %v1244
    %v1973 = vpack.c.b16 %v1258, %v1245
    %v1974 = vpack.c.b16 %v1259, %v1246
    %v1975 = vpack.c.b16 %v1260, %v1247
    %v1976 = vpack.c.b16 %v1261, %v1248
    %v1977 = vpack.c.b16 %v1262, %v1249
    %v1978 = vpack.c.b16 %v1263, %v1250
    %v1979 = vpack.c.b16 %v1264, %v1251
    %v1980 = vpack.c.b16 %v1265, %v1252
    %v1981 = vpack.c.b16 %v1279, %v1266
    %v1982 = vpack.c.b16 %v1280, %v1267
    %v1983 = vpack.c.b16 %v1281, %v1268
    %v1984 = vpack.c.b16 %v1282, %v1269
    %v1985 = vpack.c.b16 %v1283, %v1270
    %v1986 = vpack.c.b16 %v1284, %v1271
    %v1987 = vpack.c.b16 %v1285, %v1272
    %v1988 = vpack.c.b16 %v1286, %v1273
    %v1989 = vpack.c.b16 %v1287, %v1274
    %v1990 = vpack.c.b16 %v1288, %v1275
    %v1991 = vpack.c.b16 %v1289, %v1276
    %v1992 = vpack.c.b16 %v1290, %v1277
    %v1993 = vpack.c.b16 %v1291, %v1278
    %v1994 = vpack.c.b16 %v1305, %v1292
    %v1995 = vpack.c.b16 %v1306, %v1293
    %v1996 = vpack.c.b16 %v1307, %v1294
    %v1997 = vpack.c.b16 %v1308, %v1295
    %v1998 = vpack.c.b16 %v1309, %v1296
    %v1999 = vpack.c.b16 %v1310, %v1297
    %v2000 = vpack.c.b16 %v1311, %v1298
    %v2001 = vpack.c.b16 %v1312, %v1299
    %v2002 = vpack.c.b16 %v1313, %v1300
    %v2003 = vpack.c.b16 %v1314, %v1301
    %v2004 = vpack.c.b16 %v1315, %v1302
    %v2005 = vpack.c.b16 %v1316, %v1303
    %v2006 = vpack.c.b16 %v1317, %v1304
    %v2007 = vpack.c.b16 %v1331, %v1318
    %v2008 = vpack.c.b16 %v1332, %v1319
    %v2009 = vpack.c.b16 %v1333, %v1320
    %v2010 = vpack.c.b16 %v1334, %v1321
    %v2011 = vpack.c.b16 %v1335, %v1322
    %v2012 = vpack.c.b16 %v1336, %v1323
    %v2013 = vpack.c.b16 %v1337, %v1324
    %v2014 = vpack.c.b16 %v1338, %v1325
    %v2015 = vpack.c.b16 %v1339, %v1326
    %v2016 = vpack.c.b16 %v1340, %v1327
    %v2017 = vpack.c.b16 %v1341, %v1328
    %v2018 = vpack.c.b16 %v1342, %v1329
    %v2019 = vpack.c.b16 %v1343, %v1330
    %v2020 = vpack.c.b16 %v1357, %v1344
    %v2021 = vpack.c.b16 %v1358, %v1345
    %v2022 = vpack.c.b16 %v1359, %v1346
    %v2023 = vpack.c.b16 %v1360, %v1347
    %v2024 = vpack.c.b16 %v1361, %v1348
    %v2025 = vpack.c.b16 %v1362, %v1349
    %v2026 = vpack.c.b16 %v1363, %v1350
    %v2027 = vpack.c.b16 %v1364, %v1351
    %v2028 = vpack.c.b16 %v1365, %v1352
    %v2029 = vpack.c.b16 %v1366, %v1353
    %v2030 = vpack.c.b16 %v1367, %v1354
    %v2031 = vpack.c.b16 %v1368, %v1355
    %v2032 = vpack.c.b16 %v1369, %v1356
    %v2033 = vpack.c.b16 %v1383, %v1370
    %v2034 = vpack.c.b16 %v1384, %v1371
    %v2035 = vpack.c.b16 %v1385, %v1372
    %v2036 = vpack.c.b16 %v1386, %v1373
    %v2037 = vpack.c.b16 %v1387, %v1374
    %v2038 = vpack.c.b16 %v1388, %v1375
    %v2039 = vpack.c.b16 %v1389, %v1376
    %v2040 = vpack.c.b16 %v1390, %v1377
    %v2041 = vpack.c.b16 %v1391, %v1378
    %v2042 = vpack.c.b16 %v1392, %v1379
    %v2043 = vpack.c.b16 %v1393, %v1380
    %v2044 = vpack.c.b16 %v1394, %v1381
    %v2045 = vpack.c.b16 %v1395, %v1382
    %v2046 = vpack.c.b16 %v1409, %v1396
    %v2047 = vpack.c.b16 %v1410, %v1397
    %v2048 = vpack.c.b16 %v1411, %v1398
    %v2049 = vpack.c.b16 %v1412, %v1399
    %v2050 = vpack.c.b16 %v1413, %v1400
    %v2051 = vpack.c.b16 %v1414, %v1401
    %v2052 = vpack.c.b16 %v1415, %v1402
    %v2053 = vpack.c.b16 %v1416, %v1403
    %v2054 = vpack.c.b16 %v1417, %v1404
    %v2055 = vpack.c.b16 %v1418, %v1405
    %v2056 = vpack.c.b16 %v1419, %v1406
    %v2057 = vpack.c.b16 %v1420, %v1407
    %v2058 = vpack.c.b16 %v1421, %v1408
    %v2059 = vpack.c.b16 %v1435, %v1422
    %v2060 = vpack.c.b16 %v1436, %v1423
    %v2061 = vpack.c.b16 %v1437, %v1424
    %v2062 = vpack.c.b16 %v1438, %v1425
    %v2063 = vpack.c.b16 %v1439, %v1426
    %v2064 = vpack.c.b16 %v1440, %v1427
    %v2065 = vpack.c.b16 %v1441, %v1428
    %v2066 = vpack.c.b16 %v1442, %v1429
    %v2067 = vpack.c.b16 %v1443, %v1430
    %v2068 = vpack.c.b16 %v1444, %v1431
    %v2069 = vpack.c.b16 %v1445, %v1432
    %v2070 = vpack.c.b16 %v1446, %v1433
    %v2071 = vpack.c.b16 %v1447, %v1434
    %v2072 = vpack.c.b16 %v1461, %v1448
    %v2073 = vpack.c.b16 %v1462, %v1449
    %v2074 = vpack.c.b16 %v1463, %v1450
    %v2075 = vpack.c.b16 %v1464, %v1451
    %v2076 = vpack.c.b16 %v1465, %v1452
    %v2077 = vpack.c.b16 %v1466, %v1453
    %v2078 = vpack.c.b16 %v1467, %v1454
    %v2079 = vpack.c.b16 %v1468, %v1455
    %v2080 = vpack.c.b16 %v1469, %v1456
    %v2081 = vpack.c.b16 %v1470, %v1457
    %v2082 = vpack.c.b16 %v1471, %v1458
    %v2083 = vpack.c.b16 %v1472, %v1459
    %v2084 = vpack.c.b16 %v1473, %v1460
    %v2085 = vpack.c.b16 %v1487, %v1474
    %v2086 = vpack.c.b16 %v1488, %v1475
    %v2087 = vpack.c.b16 %v1489, %v1476
    %v2088 = vpack.c.b16 %v1490, %v1477
    %v2089 = vpack.c.b16 %v1491, %v1478
    %v2090 = vpack.c.b16 %v1492, %v1479
    %v2091 = vpack.c.b16 %v1493, %v1480
    %v2092 = vpack.c.b16 %v1494, %v1481
    %v2093 = vpack.c.b16 %v1495, %v1482
    %v2094 = vpack.c.b16 %v1496, %v1483
    %v2095 = vpack.c.b16 %v1497, %v1484
    %v2096 = vpack.c.b16 %v1498, %v1485
    %v2097 = vpack.c.b16 %v1499, %v1486
    %v2098 = vpack.c.b16 %v1513, %v1500
    %v2099 = vpack.c.b16 %v1514, %v1501
    %v2100 = vpack.c.b16 %v1515, %v1502
    %v2101 = vpack.c.b16 %v1516, %v1503
    %v2102 = vpack.c.b16 %v1517, %v1504
    %v2103 = vpack.c.b16 %v1518, %v1505
    %v2104 = vpack.c.b16 %v1519, %v1506
    %v2105 = vpack.c.b16 %v1520, %v1507
    %v2106 = vpack.c.b16 %v1521, %v1508
    %v2107 = vpack.c.b16 %v1522, %v1509
    %v2108 = vpack.c.b16 %v1523, %v1510
    %v2109 = vpack.c.b16 %v1524, %v1511
    %v2110 = vpack.c.b16 %v1525, %v1512
    %v2111 = vpack.c.b16 %v1539, %v1526
    %v2112 = vpack.c.b16 %v1540, %v1527
    %v2113 = vpack.c.b16 %v1541, %v1528
    %v2114 = vpack.c.b16 %v1542, %v1529
    %v2115 = vpack.c.b16 %v1543, %v1530
    %v2116 = vpack.c.b16 %v1544, %v1531
    %v2117 = vpack.c.b16 %v1545, %v1532
    %v2118 = vpack.c.b16 %v1546, %v1533
    %v2119 = vpack.c.b16 %v1547, %v1534
    %v2120 = vpack.c.b16 %v1548, %v1535
    %v2121 = vpack.c.b16 %v1549, %v1536
    %v2122 = vpack.c.b16 %v1550, %v1537
    %v2123 = vpack.c.b16 %v1551, %v1538
    %v2124 = vpack.c.b16 %v1565, %v1552
    %v2125 = vpack.c.b16 %v1566, %v1553
    %v2126 = vpack.c.b16 %v1567, %v1554
    %v2127 = vpack.c.b16 %v1568, %v1555
    %v2128 = vpack.c.b16 %v1569, %v1556
    %v2129 = vpack.c.b16 %v1570, %v1557
    %v2130 = vpack.c.b16 %v1571, %v1558
    %v2131 = vpack.c.b16 %v1572, %v1559
    %v2132 = vpack.c.b16 %v1573, %v1560
    %v2133 = vpack.c.b16 %v1574, %v1561
    %v2134 = vpack.c.b16 %v1575, %v1562
    %v2135 = vpack.c.b16 %v1576, %v1563
    %v2136 = vpack.c.b16 %v1577, %v1564
    %v2137 = vpack.c.b16 %v1591, %v1578
    %v2138 = vpack.c.b16 %v1592, %v1579
    %v2139 = vpack.c.b16 %v1593, %v1580
    %v2140 = vpack.c.b16 %v1594, %v1581
    %v2141 = vpack.c.b16 %v1595, %v1582
    %v2142 = vpack.c.b16 %v1596, %v1583
    %v2143 = vpack.c.b16 %v1597, %v1584
    %v2144 = vpack.c.b16 %v1598, %v1585
    %v2145 = vpack.c.b16 %v1599, %v1586
    %v2146 = vpack.c.b16 %v1600, %v1587
    %v2147 = vpack.c.b16 %v1601, %v1588
    %v2148 = vpack.c.b16 %v1602, %v1589
    %v2149 = vpack.c.b16 %v1603, %v1590
    %v2150 = vpack.c.b16 %v1617, %v1604
    %v2151 = vpack.c.b16 %v1618, %v1605
    %v2152 = vpack.c.b16 %v1619, %v1606
    %v2153 = vpack.c.b16 %v1620, %v1607
    %v2154 = vpack.c.b16 %v1621, %v1608
    %v2155 = vpack.c.b16 %v1622, %v1609
    %v2156 = vpack.c.b16 %v1623, %v1610
    %v2157 = vpack.c.b16 %v1624, %v1611
    %v2158 = vpack.c.b16 %v1625, %v1612
    %v2159 = vpack.c.b16 %v1626, %v1613
    %v2160 = vpack.c.b16 %v1627, %v1614
    %v2161 = vpack.c.b16 %v1628, %v1615
    %v2162 = vpack.c.b16 %v1629, %v1616
    %v2163 = vpack.c.b16 %v1643, %v1630
    %v2164 = vpack.c.b16 %v1644, %v1631
    %v2165 = vpack.c.b16 %v1645, %v1632
    %v2166 = vpack.c.b16 %v1646, %v1633
    %v2167 = vpack.c.b16 %v1647, %v1634
    %v2168 = vpack.c.b16 %v1648, %v1635
    %v2169 = vpack.c.b16 %v1649, %v1636
    %v2170 = vpack.c.b16 %v1650, %v1637
    %v2171 = vpack.c.b16 %v1651, %v1638
    %v2172 = vpack.c.b16 %v1652, %v1639
    %v2173 = vpack.c.b16 %v1653, %v1640
    %v2174 = vpack.c.b16 %v1654, %v1641
    %v2175 = vpack.c.b16 %v1655, %v1642
    %v2176 = vpack.c.b16 %v1669, %v1656
    %v2177 = vpack.c.b16 %v1670, %v1657
    %v2178 = vpack.c.b16 %v1671, %v1658
    %v2179 = vpack.c.b16 %v1672, %v1659
    %v2180 = vpack.c.b16 %v1673, %v1660
    %v2181 = vpack.c.b16 %v1674, %v1661
    %v2182 = vpack.c.b16 %v1675, %v1662
    %v2183 = vpack.c.b16 %v1676, %v1663
    %v2184 = vpack.c.b16 %v1677, %v1664
    %v2185 = vpack.c.b16 %v1678, %v1665
    %v2186 = vpack.c.b16 %v1679, %v1666
    %v2187 = vpack.c.b16 %v1680, %v1667
    %v2188 = vpack.c.b16 %v1681, %v1668
    %v2189 = vpack.c.b16 %v1695, %v1682
    %v2190 = vpack.c.b16 %v1696, %v1683
    %v2191 = vpack.c.b16 %v1697, %v1684
    %v2192 = vpack.c.b16 %v1698, %v1685
    %v2193 = vpack.c.b16 %v1699, %v1686
    %v2194 = vpack.c.b16 %v1700, %v1687
    %v2195 = vpack.c.b16 %v1701, %v1688
    %v2196 = vpack.c.b16 %v1702, %v1689
    %v2197 = vpack.c.b16 %v1703, %v1690
    %v2198 = vpack.c.b16 %v1704, %v1691
    %v2199 = vpack.c.b16 %v1705, %v1692
    %v2200 = vpack.c.b16 %v1706, %v1693
    %v2201 = vpack.c.b16 %v1707, %v1694
    %v2202 = vpack.c.b16 %v1721, %v1708
    %v2203 = vpack.c.b16 %v1722, %v1709
    %v2204 = vpack.c.b16 %v1723, %v1710
    %v2205 = vpack.c.b16 %v1724, %v1711
    %v2206 = vpack.c.b16 %v1725, %v1712
    %v2207 = vpack.c.b16 %v1726, %v1713
    %v2208 = vpack.c.b16 %v1727, %v1714
    %v2209 = vpack.c.b16 %v1728, %v1715
    %v2210 = vpack.c.b16 %v1729, %v1716
    %v2211 = vpack.c.b16 %v1730, %v1717
    %v2212 = vpack.c.b16 %v1731, %v1718
    %v2213 = vpack.c.b16 %v1732, %v1719
    %v2214 = vpack.c.b16 %v1733, %v1720
    %v2215 = vpack.c.b16 %v1747, %v1734
    %v2216 = vpack.c.b16 %v1748, %v1735
    %v2217 = vpack.c.b16 %v1749, %v1736
    %v2218 = vpack.c.b16 %v1750, %v1737
    %v2219 = vpack.c.b16 %v1751, %v1738
    %v2220 = vpack.c.b16 %v1752, %v1739
    %v2221 = vpack.c.b16 %v1753, %v1740
    %v2222 = vpack.c.b16 %v1754, %v1741
    %v2223 = vpack.c.b16 %v1755, %v1742
    %v2224 = vpack.c.b16 %v1756, %v1743
    %v2225 = vpack.c.b16 %v1757, %v1744
    %v2226 = vpack.c.b16 %v1758, %v1745
    %v2227 = vpack.c.b16 %v1759, %v1746
    %v2228 = vpack.c.b16 %v1773, %v1760
    %v2229 = vpack.c.b16 %v1774, %v1761
    %v2230 = vpack.c.b16 %v1775, %v1762
    %v2231 = vpack.c.b16 %v1776, %v1763
    %v2232 = vpack.c.b16 %v1777, %v1764
    %v2233 = vpack.c.b16 %v1778, %v1765
    %v2234 = vpack.c.b16 %v1779, %v1766
    %v2235 = vpack.c.b16 %v1780, %v1767
    %v2236 = vpack.c.b16 %v1781, %v1768
    %v2237 = vpack.c.b16 %v1782, %v1769
    %v2238 = vpack.c.b16 %v1783, %v1770
    %v2239 = vpack.c.b16 %v1784, %v1771
    %v2240 = vpack.c.b16 %v1785, %v1772
    %v2241 = vpack.c.b16 %v1799, %v1786
    %v2242 = vpack.c.b16 %v1800, %v1787
    %v2243 = vpack.c.b16 %v1801, %v1788
    %v2244 = vpack.c.b16 %v1802, %v1789
    %v2245 = vpack.c.b16 %v1803, %v1790
    %v2246 = vpack.c.b16 %v1804, %v1791
    %v2247 = vpack.c.b16 %v1805, %v1792
    %v2248 = vpack.c.b16 %v1806, %v1793
    %v2249 = vpack.c.b16 %v1807, %v1794
    %v2250 = vpack.c.b16 %v1808, %v1795
    %v2251 = vpack.c.b16 %v1809, %v1796
    %v2252 = vpack.c.b16 %v1810, %v1797
    %v2253 = vpack.c.b16 %v1811, %v1798
    %v2254 = vpack.c.b16 %v1825, %v1812
    %v2255 = vpack.c.b16 %v1826, %v1813
    %v2256 = vpack.c.b16 %v1827, %v1814
    %v2257 = vpack.c.b16 %v1828, %v1815
    %v2258 = vpack.c.b16 %v1829, %v1816
    %v2259 = vpack.c.b16 %v1830, %v1817
    %v2260 = vpack.c.b16 %v1831, %v1818
    %v2261 = vpack.c.b16 %v1832, %v1819
    %v2262 = vpack.c.b16 %v1833, %v1820
    %v2263 = vpack.c.b16 %v1834, %v1821
    %v2264 = vpack.c.b16 %v1835, %v1822
    %v2265 = vpack.c.b16 %v1836, %v1823
    %v2266 = vpack.c.b16 %v1837, %v1824
    %v2267 = vpack.c.b16 %v1851, %v1838
    %v2268 = vpack.c.b16 %v1852, %v1839
    %v2269 = vpack.c.b16 %v1853, %v1840
    %v2270 = vpack.c.b16 %v1854, %v1841
    %v2271 = vpack.c.b16 %v1855, %v1842
    %v2272 = vpack.c.b16 %v1856, %v1843
    %v2273 = vpack.c.b16 %v1857, %v1844
    %v2274 = vpack.c.b16 %v1858, %v1845
    %v2275 = vpack.c.b16 %v1859, %v1846
    %v2276 = vpack.c.b16 %v1860, %v1847
    %v2277 = vpack.c.b16 %v1861, %v1848
    %v2278 = vpack.c.b16 %v1862, %v1849
    %v2279 = vpack.c.b16 %v1863, %v1850
    %2696 = vmatpush.bf16.msra.mxu0 %v1955
    %2697 = vmatpush.bf16.msra.mxu0 %v1942
    %2698 = vmatpush.bf16.msra.mxu0 %v1929
    %2699 = vmatpush.bf16.msra.mxu0 %v1916
    %2700 = vmatpush.bf16.msra.mxu0 %v1903
    %2701 = vmatpush.bf16.msra.mxu0 %v1890
    %2702 = vmatpush.bf16.msra.mxu0 %v1877
    %2703 = vmatpush.bf16.msra.mxu0 %v1864
    %2704 = vmatmul.bf16.gmra.mxu0 %v102
    %v2705 = vpop.f32.mrf.mxu0
    %v2706 = vadd.f32 %v558, %v2705
    %v2707 = vpop.f32.mrf.mxu0
    %2708 = vdwg.mxu0
    %2709 = vmatpush.bf16.msra.mxu0 %v2059
    %2710 = vmatpush.bf16.msra.mxu0 %v2046
    %2711 = vmatpush.bf16.msra.mxu0 %v2033
    %2712 = vmatpush.bf16.msra.mxu0 %v2020
    %2713 = vmatpush.bf16.msra.mxu0 %v2007
    %2714 = vmatpush.bf16.msra.mxu0 %v1994
    %2715 = vmatpush.bf16.msra.mxu0 %v1981
    %2716 = vmatpush.bf16.msra.mxu0 %v1968
    %2717 = vmatmul.bf16.gmra.mxu0 %v103
    %v2718 = vpop.f32.mrf.mxu0
    %v2719 = vadd.f32 %v2706, %v2718
    %v2720 = vpop.f32.mrf.mxu0
    %2721 = vdwg.mxu0
    %2722 = vmatpush.bf16.msra.mxu0 %v2163
    %2723 = vmatpush.bf16.msra.mxu0 %v2150
    %2724 = vmatpush.bf16.msra.mxu0 %v2137
    %2725 = vmatpush.bf16.msra.mxu0 %v2124
    %2726 = vmatpush.bf16.msra.mxu0 %v2111
    %2727 = vmatpush.bf16.msra.mxu0 %v2098
    %2728 = vmatpush.bf16.msra.mxu0 %v2085
    %2729 = vmatpush.bf16.msra.mxu0 %v2072
    %2730 = vmatmul.bf16.gmra.mxu0 %v104
    %v2731 = vpop.f32.mrf.mxu0
    %v2732 = vadd.f32 %v2719, %v2731
    %v2733 = vpop.f32.mrf.mxu0
    %2734 = vdwg.mxu0
    %2735 = vmatpush.bf16.msra.mxu0 %v2267
    %2736 = vmatpush.bf16.msra.mxu0 %v2254
    %2737 = vmatpush.bf16.msra.mxu0 %v2241
    %2738 = vmatpush.bf16.msra.mxu0 %v2228
    %2739 = vmatpush.bf16.msra.mxu0 %v2215
    %2740 = vmatpush.bf16.msra.mxu0 %v2202
    %2741 = vmatpush.bf16.msra.mxu0 %v2189
    %2742 = vmatpush.bf16.msra.mxu0 %v2176
    %2743 = vmatmul.bf16.gmra.mxu0 %v105
    %v2744 = vpop.f32.mrf.mxu0
    %v2745 = vadd.f32 %v2732, %v2744
    %v2746 = vpop.f32.mrf.mxu0
    %2747 = vdwg.mxu0
    %2748 = vmatpush.bf16.msra.mxu0 %v1956
    %2749 = vmatpush.bf16.msra.mxu0 %v1943
    %2750 = vmatpush.bf16.msra.mxu0 %v1930
    %2751 = vmatpush.bf16.msra.mxu0 %v1917
    %2752 = vmatpush.bf16.msra.mxu0 %v1904
    %2753 = vmatpush.bf16.msra.mxu0 %v1891
    %2754 = vmatpush.bf16.msra.mxu0 %v1878
    %2755 = vmatpush.bf16.msra.mxu0 %v1865
    %2756 = vmatmul.bf16.gmra.mxu0 %v102
    %v2757 = vpop.f32.mrf.mxu0
    %v2758 = vadd.f32 %v559, %v2757
    %v2759 = vpop.f32.mrf.mxu0
    %2760 = vdwg.mxu0
    %2761 = vmatpush.bf16.msra.mxu0 %v2060
    %2762 = vmatpush.bf16.msra.mxu0 %v2047
    %2763 = vmatpush.bf16.msra.mxu0 %v2034
    %2764 = vmatpush.bf16.msra.mxu0 %v2021
    %2765 = vmatpush.bf16.msra.mxu0 %v2008
    %2766 = vmatpush.bf16.msra.mxu0 %v1995
    %2767 = vmatpush.bf16.msra.mxu0 %v1982
    %2768 = vmatpush.bf16.msra.mxu0 %v1969
    %2769 = vmatmul.bf16.gmra.mxu0 %v103
    %v2770 = vpop.f32.mrf.mxu0
    %v2771 = vadd.f32 %v2758, %v2770
    %v2772 = vpop.f32.mrf.mxu0
    %2773 = vdwg.mxu0
    %2774 = vmatpush.bf16.msra.mxu0 %v2164
    %2775 = vmatpush.bf16.msra.mxu0 %v2151
    %2776 = vmatpush.bf16.msra.mxu0 %v2138
    %2777 = vmatpush.bf16.msra.mxu0 %v2125
    %2778 = vmatpush.bf16.msra.mxu0 %v2112
    %2779 = vmatpush.bf16.msra.mxu0 %v2099
    %2780 = vmatpush.bf16.msra.mxu0 %v2086
    %2781 = vmatpush.bf16.msra.mxu0 %v2073
    %2782 = vmatmul.bf16.gmra.mxu0 %v104
    %v2783 = vpop.f32.mrf.mxu0
    %v2784 = vadd.f32 %v2771, %v2783
    %v2785 = vpop.f32.mrf.mxu0
    %2786 = vdwg.mxu0
    %2787 = vmatpush.bf16.msra.mxu0 %v2268
    %2788 = vmatpush.bf16.msra.mxu0 %v2255
    %2789 = vmatpush.bf16.msra.mxu0 %v2242
    %2790 = vmatpush.bf16.msra.mxu0 %v2229
    %2791 = vmatpush.bf16.msra.mxu0 %v2216
    %2792 = vmatpush.bf16.msra.mxu0 %v2203
    %2793 = vmatpush.bf16.msra.mxu0 %v2190
    %2794 = vmatpush.bf16.msra.mxu0 %v2177
    %2795 = vmatmul.bf16.gmra.mxu0 %v105
    %v2796 = vpop.f32.mrf.mxu0
    %v2797 = vadd.f32 %v2784, %v2796
    %v2798 = vpop.f32.mrf.mxu0
    %2799 = vdwg.mxu0
    %2800 = vmatpush.bf16.msra.mxu0 %v1957
    %2801 = vmatpush.bf16.msra.mxu0 %v1944
    %2802 = vmatpush.bf16.msra.mxu0 %v1931
    %2803 = vmatpush.bf16.msra.mxu0 %v1918
    %2804 = vmatpush.bf16.msra.mxu0 %v1905
    %2805 = vmatpush.bf16.msra.mxu0 %v1892
    %2806 = vmatpush.bf16.msra.mxu0 %v1879
    %2807 = vmatpush.bf16.msra.mxu0 %v1866
    %2808 = vmatmul.bf16.gmra.mxu0 %v102
    %v2809 = vpop.f32.mrf.mxu0
    %v2810 = vadd.f32 %v560, %v2809
    %v2811 = vpop.f32.mrf.mxu0
    %2812 = vdwg.mxu0
    %2813 = vmatpush.bf16.msra.mxu0 %v2061
    %2814 = vmatpush.bf16.msra.mxu0 %v2048
    %2815 = vmatpush.bf16.msra.mxu0 %v2035
    %2816 = vmatpush.bf16.msra.mxu0 %v2022
    %2817 = vmatpush.bf16.msra.mxu0 %v2009
    %2818 = vmatpush.bf16.msra.mxu0 %v1996
    %2819 = vmatpush.bf16.msra.mxu0 %v1983
    %2820 = vmatpush.bf16.msra.mxu0 %v1970
    %2821 = vmatmul.bf16.gmra.mxu0 %v103
    %v2822 = vpop.f32.mrf.mxu0
    %v2823 = vadd.f32 %v2810, %v2822
    %v2824 = vpop.f32.mrf.mxu0
    %2825 = vdwg.mxu0
    %2826 = vmatpush.bf16.msra.mxu0 %v2165
    %2827 = vmatpush.bf16.msra.mxu0 %v2152
    %2828 = vmatpush.bf16.msra.mxu0 %v2139
    %2829 = vmatpush.bf16.msra.mxu0 %v2126
    %2830 = vmatpush.bf16.msra.mxu0 %v2113
    %2831 = vmatpush.bf16.msra.mxu0 %v2100
    %2832 = vmatpush.bf16.msra.mxu0 %v2087
    %2833 = vmatpush.bf16.msra.mxu0 %v2074
    %2834 = vmatmul.bf16.gmra.mxu0 %v104
    %v2835 = vpop.f32.mrf.mxu0
    %v2836 = vadd.f32 %v2823, %v2835
    %v2837 = vpop.f32.mrf.mxu0
    %2838 = vdwg.mxu0
    %2839 = vmatpush.bf16.msra.mxu0 %v2269
    %2840 = vmatpush.bf16.msra.mxu0 %v2256
    %2841 = vmatpush.bf16.msra.mxu0 %v2243
    %2842 = vmatpush.bf16.msra.mxu0 %v2230
    %2843 = vmatpush.bf16.msra.mxu0 %v2217
    %2844 = vmatpush.bf16.msra.mxu0 %v2204
    %2845 = vmatpush.bf16.msra.mxu0 %v2191
    %2846 = vmatpush.bf16.msra.mxu0 %v2178
    %2847 = vmatmul.bf16.gmra.mxu0 %v105
    %v2848 = vpop.f32.mrf.mxu0
    %v2849 = vadd.f32 %v2836, %v2848
    %v2850 = vpop.f32.mrf.mxu0
    %2851 = vdwg.mxu0
    %2852 = vmatpush.bf16.msra.mxu0 %v1958
    %2853 = vmatpush.bf16.msra.mxu0 %v1945
    %2854 = vmatpush.bf16.msra.mxu0 %v1932
    %2855 = vmatpush.bf16.msra.mxu0 %v1919
    %2856 = vmatpush.bf16.msra.mxu0 %v1906
    %2857 = vmatpush.bf16.msra.mxu0 %v1893
    %2858 = vmatpush.bf16.msra.mxu0 %v1880
    %2859 = vmatpush.bf16.msra.mxu0 %v1867
    %2860 = vmatmul.bf16.gmra.mxu0 %v102
    %v2861 = vpop.f32.mrf.mxu0
    %v2862 = vadd.f32 %v561, %v2861
    %v2863 = vpop.f32.mrf.mxu0
    %2864 = vdwg.mxu0
    %2865 = vmatpush.bf16.msra.mxu0 %v2062
    %2866 = vmatpush.bf16.msra.mxu0 %v2049
    %2867 = vmatpush.bf16.msra.mxu0 %v2036
    %2868 = vmatpush.bf16.msra.mxu0 %v2023
    %2869 = vmatpush.bf16.msra.mxu0 %v2010
    %2870 = vmatpush.bf16.msra.mxu0 %v1997
    %2871 = vmatpush.bf16.msra.mxu0 %v1984
    %2872 = vmatpush.bf16.msra.mxu0 %v1971
    %2873 = vmatmul.bf16.gmra.mxu0 %v103
    %v2874 = vpop.f32.mrf.mxu0
    %v2875 = vadd.f32 %v2862, %v2874
    %v2876 = vpop.f32.mrf.mxu0
    %2877 = vdwg.mxu0
    %2878 = vmatpush.bf16.msra.mxu0 %v2166
    %2879 = vmatpush.bf16.msra.mxu0 %v2153
    %2880 = vmatpush.bf16.msra.mxu0 %v2140
    %2881 = vmatpush.bf16.msra.mxu0 %v2127
    %2882 = vmatpush.bf16.msra.mxu0 %v2114
    %2883 = vmatpush.bf16.msra.mxu0 %v2101
    %2884 = vmatpush.bf16.msra.mxu0 %v2088
    %2885 = vmatpush.bf16.msra.mxu0 %v2075
    %2886 = vmatmul.bf16.gmra.mxu0 %v104
    %v2887 = vpop.f32.mrf.mxu0
    %v2888 = vadd.f32 %v2875, %v2887
    %v2889 = vpop.f32.mrf.mxu0
    %2890 = vdwg.mxu0
    %2891 = vmatpush.bf16.msra.mxu0 %v2270
    %2892 = vmatpush.bf16.msra.mxu0 %v2257
    %2893 = vmatpush.bf16.msra.mxu0 %v2244
    %2894 = vmatpush.bf16.msra.mxu0 %v2231
    %2895 = vmatpush.bf16.msra.mxu0 %v2218
    %2896 = vmatpush.bf16.msra.mxu0 %v2205
    %2897 = vmatpush.bf16.msra.mxu0 %v2192
    %2898 = vmatpush.bf16.msra.mxu0 %v2179
    %2899 = vmatmul.bf16.gmra.mxu0 %v105
    %v2900 = vpop.f32.mrf.mxu0
    %v2901 = vadd.f32 %v2888, %v2900
    %v2902 = vpop.f32.mrf.mxu0
    %2903 = vdwg.mxu0
    %2904 = vmatpush.bf16.msra.mxu0 %v1959
    %2905 = vmatpush.bf16.msra.mxu0 %v1946
    %2906 = vmatpush.bf16.msra.mxu0 %v1933
    %2907 = vmatpush.bf16.msra.mxu0 %v1920
    %2908 = vmatpush.bf16.msra.mxu0 %v1907
    %2909 = vmatpush.bf16.msra.mxu0 %v1894
    %2910 = vmatpush.bf16.msra.mxu0 %v1881
    %2911 = vmatpush.bf16.msra.mxu0 %v1868
    %2912 = vmatmul.bf16.gmra.mxu0 %v102
    %v2913 = vpop.f32.mrf.mxu0
    %v2914 = vadd.f32 %v562, %v2913
    %v2915 = vpop.f32.mrf.mxu0
    %2916 = vdwg.mxu0
    %2917 = vmatpush.bf16.msra.mxu0 %v2063
    %2918 = vmatpush.bf16.msra.mxu0 %v2050
    %2919 = vmatpush.bf16.msra.mxu0 %v2037
    %2920 = vmatpush.bf16.msra.mxu0 %v2024
    %2921 = vmatpush.bf16.msra.mxu0 %v2011
    %2922 = vmatpush.bf16.msra.mxu0 %v1998
    %2923 = vmatpush.bf16.msra.mxu0 %v1985
    %2924 = vmatpush.bf16.msra.mxu0 %v1972
    %2925 = vmatmul.bf16.gmra.mxu0 %v103
    %v2926 = vpop.f32.mrf.mxu0
    %v2927 = vadd.f32 %v2914, %v2926
    %v2928 = vpop.f32.mrf.mxu0
    %2929 = vdwg.mxu0
    %2930 = vmatpush.bf16.msra.mxu0 %v2167
    %2931 = vmatpush.bf16.msra.mxu0 %v2154
    %2932 = vmatpush.bf16.msra.mxu0 %v2141
    %2933 = vmatpush.bf16.msra.mxu0 %v2128
    %2934 = vmatpush.bf16.msra.mxu0 %v2115
    %2935 = vmatpush.bf16.msra.mxu0 %v2102
    %2936 = vmatpush.bf16.msra.mxu0 %v2089
    %2937 = vmatpush.bf16.msra.mxu0 %v2076
    %2938 = vmatmul.bf16.gmra.mxu0 %v104
    %v2939 = vpop.f32.mrf.mxu0
    %v2940 = vadd.f32 %v2927, %v2939
    %v2941 = vpop.f32.mrf.mxu0
    %2942 = vdwg.mxu0
    %2943 = vmatpush.bf16.msra.mxu0 %v2271
    %2944 = vmatpush.bf16.msra.mxu0 %v2258
    %2945 = vmatpush.bf16.msra.mxu0 %v2245
    %2946 = vmatpush.bf16.msra.mxu0 %v2232
    %2947 = vmatpush.bf16.msra.mxu0 %v2219
    %2948 = vmatpush.bf16.msra.mxu0 %v2206
    %2949 = vmatpush.bf16.msra.mxu0 %v2193
    %2950 = vmatpush.bf16.msra.mxu0 %v2180
    %2951 = vmatmul.bf16.gmra.mxu0 %v105
    %v2952 = vpop.f32.mrf.mxu0
    %v2953 = vadd.f32 %v2940, %v2952
    %v2954 = vpop.f32.mrf.mxu0
    %2955 = vdwg.mxu0
    %2956 = vmatpush.bf16.msra.mxu0 %v1960
    %2957 = vmatpush.bf16.msra.mxu0 %v1947
    %2958 = vmatpush.bf16.msra.mxu0 %v1934
    %2959 = vmatpush.bf16.msra.mxu0 %v1921
    %2960 = vmatpush.bf16.msra.mxu0 %v1908
    %2961 = vmatpush.bf16.msra.mxu0 %v1895
    %2962 = vmatpush.bf16.msra.mxu0 %v1882
    %2963 = vmatpush.bf16.msra.mxu0 %v1869
    %2964 = vmatmul.bf16.gmra.mxu0 %v102
    %v2965 = vpop.f32.mrf.mxu0
    %v2966 = vadd.f32 %v563, %v2965
    %v2967 = vpop.f32.mrf.mxu0
    %2968 = vdwg.mxu0
    %2969 = vmatpush.bf16.msra.mxu0 %v2064
    %2970 = vmatpush.bf16.msra.mxu0 %v2051
    %2971 = vmatpush.bf16.msra.mxu0 %v2038
    %2972 = vmatpush.bf16.msra.mxu0 %v2025
    %2973 = vmatpush.bf16.msra.mxu0 %v2012
    %2974 = vmatpush.bf16.msra.mxu0 %v1999
    %2975 = vmatpush.bf16.msra.mxu0 %v1986
    %2976 = vmatpush.bf16.msra.mxu0 %v1973
    %2977 = vmatmul.bf16.gmra.mxu0 %v103
    %v2978 = vpop.f32.mrf.mxu0
    %v2979 = vadd.f32 %v2966, %v2978
    %v2980 = vpop.f32.mrf.mxu0
    %2981 = vdwg.mxu0
    %2982 = vmatpush.bf16.msra.mxu0 %v2168
    %2983 = vmatpush.bf16.msra.mxu0 %v2155
    %2984 = vmatpush.bf16.msra.mxu0 %v2142
    %2985 = vmatpush.bf16.msra.mxu0 %v2129
    %2986 = vmatpush.bf16.msra.mxu0 %v2116
    %2987 = vmatpush.bf16.msra.mxu0 %v2103
    %2988 = vmatpush.bf16.msra.mxu0 %v2090
    %2989 = vmatpush.bf16.msra.mxu0 %v2077
    %2990 = vmatmul.bf16.gmra.mxu0 %v104
    %v2991 = vpop.f32.mrf.mxu0
    %v2992 = vadd.f32 %v2979, %v2991
    %v2993 = vpop.f32.mrf.mxu0
    %2994 = vdwg.mxu0
    %2995 = vmatpush.bf16.msra.mxu0 %v2272
    %2996 = vmatpush.bf16.msra.mxu0 %v2259
    %2997 = vmatpush.bf16.msra.mxu0 %v2246
    %2998 = vmatpush.bf16.msra.mxu0 %v2233
    %2999 = vmatpush.bf16.msra.mxu0 %v2220
    %3000 = vmatpush.bf16.msra.mxu0 %v2207
    %3001 = vmatpush.bf16.msra.mxu0 %v2194
    %3002 = vmatpush.bf16.msra.mxu0 %v2181
    %3003 = vmatmul.bf16.gmra.mxu0 %v105
    %v3004 = vpop.f32.mrf.mxu0
    %v3005 = vadd.f32 %v2992, %v3004
    %v3006 = vpop.f32.mrf.mxu0
    %3007 = vdwg.mxu0
    %3008 = vmatpush.bf16.msra.mxu0 %v1961
    %3009 = vmatpush.bf16.msra.mxu0 %v1948
    %3010 = vmatpush.bf16.msra.mxu0 %v1935
    %3011 = vmatpush.bf16.msra.mxu0 %v1922
    %3012 = vmatpush.bf16.msra.mxu0 %v1909
    %3013 = vmatpush.bf16.msra.mxu0 %v1896
    %3014 = vmatpush.bf16.msra.mxu0 %v1883
    %3015 = vmatpush.bf16.msra.mxu0 %v1870
    %3016 = vmatmul.bf16.gmra.mxu0 %v102
    %v3017 = vpop.f32.mrf.mxu0
    %v3018 = vadd.f32 %v564, %v3017
    %v3019 = vpop.f32.mrf.mxu0
    %3020 = vdwg.mxu0
    %3021 = vmatpush.bf16.msra.mxu0 %v2065
    %3022 = vmatpush.bf16.msra.mxu0 %v2052
    %3023 = vmatpush.bf16.msra.mxu0 %v2039
    %3024 = vmatpush.bf16.msra.mxu0 %v2026
    %3025 = vmatpush.bf16.msra.mxu0 %v2013
    %3026 = vmatpush.bf16.msra.mxu0 %v2000
    %3027 = vmatpush.bf16.msra.mxu0 %v1987
    %3028 = vmatpush.bf16.msra.mxu0 %v1974
    %3029 = vmatmul.bf16.gmra.mxu0 %v103
    %v3030 = vpop.f32.mrf.mxu0
    %v3031 = vadd.f32 %v3018, %v3030
    %v3032 = vpop.f32.mrf.mxu0
    %3033 = vdwg.mxu0
    %3034 = vmatpush.bf16.msra.mxu0 %v2169
    %3035 = vmatpush.bf16.msra.mxu0 %v2156
    %3036 = vmatpush.bf16.msra.mxu0 %v2143
    %3037 = vmatpush.bf16.msra.mxu0 %v2130
    %3038 = vmatpush.bf16.msra.mxu0 %v2117
    %3039 = vmatpush.bf16.msra.mxu0 %v2104
    %3040 = vmatpush.bf16.msra.mxu0 %v2091
    %3041 = vmatpush.bf16.msra.mxu0 %v2078
    %3042 = vmatmul.bf16.gmra.mxu0 %v104
    %v3043 = vpop.f32.mrf.mxu0
    %v3044 = vadd.f32 %v3031, %v3043
    %v3045 = vpop.f32.mrf.mxu0
    %3046 = vdwg.mxu0
    %3047 = vmatpush.bf16.msra.mxu0 %v2273
    %3048 = vmatpush.bf16.msra.mxu0 %v2260
    %3049 = vmatpush.bf16.msra.mxu0 %v2247
    %3050 = vmatpush.bf16.msra.mxu0 %v2234
    %3051 = vmatpush.bf16.msra.mxu0 %v2221
    %3052 = vmatpush.bf16.msra.mxu0 %v2208
    %3053 = vmatpush.bf16.msra.mxu0 %v2195
    %3054 = vmatpush.bf16.msra.mxu0 %v2182
    %3055 = vmatmul.bf16.gmra.mxu0 %v105
    %v3056 = vpop.f32.mrf.mxu0
    %v3057 = vadd.f32 %v3044, %v3056
    %v3058 = vpop.f32.mrf.mxu0
    %3059 = vdwg.mxu0
    %3060 = vmatpush.bf16.msra.mxu0 %v1962
    %3061 = vmatpush.bf16.msra.mxu0 %v1949
    %3062 = vmatpush.bf16.msra.mxu0 %v1936
    %3063 = vmatpush.bf16.msra.mxu0 %v1923
    %3064 = vmatpush.bf16.msra.mxu0 %v1910
    %3065 = vmatpush.bf16.msra.mxu0 %v1897
    %3066 = vmatpush.bf16.msra.mxu0 %v1884
    %3067 = vmatpush.bf16.msra.mxu0 %v1871
    %3068 = vmatmul.bf16.gmra.mxu0 %v102
    %v3069 = vpop.f32.mrf.mxu0
    %v3070 = vadd.f32 %v565, %v3069
    %v3071 = vpop.f32.mrf.mxu0
    %3072 = vdwg.mxu0
    %3073 = vmatpush.bf16.msra.mxu0 %v2066
    %3074 = vmatpush.bf16.msra.mxu0 %v2053
    %3075 = vmatpush.bf16.msra.mxu0 %v2040
    %3076 = vmatpush.bf16.msra.mxu0 %v2027
    %3077 = vmatpush.bf16.msra.mxu0 %v2014
    %3078 = vmatpush.bf16.msra.mxu0 %v2001
    %3079 = vmatpush.bf16.msra.mxu0 %v1988
    %3080 = vmatpush.bf16.msra.mxu0 %v1975
    %3081 = vmatmul.bf16.gmra.mxu0 %v103
    %v3082 = vpop.f32.mrf.mxu0
    %v3083 = vadd.f32 %v3070, %v3082
    %v3084 = vpop.f32.mrf.mxu0
    %3085 = vdwg.mxu0
    %3086 = vmatpush.bf16.msra.mxu0 %v2170
    %3087 = vmatpush.bf16.msra.mxu0 %v2157
    %3088 = vmatpush.bf16.msra.mxu0 %v2144
    %3089 = vmatpush.bf16.msra.mxu0 %v2131
    %3090 = vmatpush.bf16.msra.mxu0 %v2118
    %3091 = vmatpush.bf16.msra.mxu0 %v2105
    %3092 = vmatpush.bf16.msra.mxu0 %v2092
    %3093 = vmatpush.bf16.msra.mxu0 %v2079
    %3094 = vmatmul.bf16.gmra.mxu0 %v104
    %v3095 = vpop.f32.mrf.mxu0
    %v3096 = vadd.f32 %v3083, %v3095
    %v3097 = vpop.f32.mrf.mxu0
    %3098 = vdwg.mxu0
    %3099 = vmatpush.bf16.msra.mxu0 %v2274
    %3100 = vmatpush.bf16.msra.mxu0 %v2261
    %3101 = vmatpush.bf16.msra.mxu0 %v2248
    %3102 = vmatpush.bf16.msra.mxu0 %v2235
    %3103 = vmatpush.bf16.msra.mxu0 %v2222
    %3104 = vmatpush.bf16.msra.mxu0 %v2209
    %3105 = vmatpush.bf16.msra.mxu0 %v2196
    %3106 = vmatpush.bf16.msra.mxu0 %v2183
    %3107 = vmatmul.bf16.gmra.mxu0 %v105
    %v3108 = vpop.f32.mrf.mxu0
    %v3109 = vadd.f32 %v3096, %v3108
    %v3110 = vpop.f32.mrf.mxu0
    %3111 = vdwg.mxu0
    %3112 = vmatpush.bf16.msra.mxu0 %v1963
    %3113 = vmatpush.bf16.msra.mxu0 %v1950
    %3114 = vmatpush.bf16.msra.mxu0 %v1937
    %3115 = vmatpush.bf16.msra.mxu0 %v1924
    %3116 = vmatpush.bf16.msra.mxu0 %v1911
    %3117 = vmatpush.bf16.msra.mxu0 %v1898
    %3118 = vmatpush.bf16.msra.mxu0 %v1885
    %3119 = vmatpush.bf16.msra.mxu0 %v1872
    %3120 = vmatmul.bf16.gmra.mxu0 %v102
    %v3121 = vpop.f32.mrf.mxu0
    %v3122 = vadd.f32 %v566, %v3121
    %v3123 = vpop.f32.mrf.mxu0
    %3124 = vdwg.mxu0
    %3125 = vmatpush.bf16.msra.mxu0 %v2067
    %3126 = vmatpush.bf16.msra.mxu0 %v2054
    %3127 = vmatpush.bf16.msra.mxu0 %v2041
    %3128 = vmatpush.bf16.msra.mxu0 %v2028
    %3129 = vmatpush.bf16.msra.mxu0 %v2015
    %3130 = vmatpush.bf16.msra.mxu0 %v2002
    %3131 = vmatpush.bf16.msra.mxu0 %v1989
    %3132 = vmatpush.bf16.msra.mxu0 %v1976
    %3133 = vmatmul.bf16.gmra.mxu0 %v103
    %v3134 = vpop.f32.mrf.mxu0
    %v3135 = vadd.f32 %v3122, %v3134
    %v3136 = vpop.f32.mrf.mxu0
    %3137 = vdwg.mxu0
    %3138 = vmatpush.bf16.msra.mxu0 %v2171
    %3139 = vmatpush.bf16.msra.mxu0 %v2158
    %3140 = vmatpush.bf16.msra.mxu0 %v2145
    %3141 = vmatpush.bf16.msra.mxu0 %v2132
    %3142 = vmatpush.bf16.msra.mxu0 %v2119
    %3143 = vmatpush.bf16.msra.mxu0 %v2106
    %3144 = vmatpush.bf16.msra.mxu0 %v2093
    %3145 = vmatpush.bf16.msra.mxu0 %v2080
    %3146 = vmatmul.bf16.gmra.mxu0 %v104
    %v3147 = vpop.f32.mrf.mxu0
    %v3148 = vadd.f32 %v3135, %v3147
    %v3149 = vpop.f32.mrf.mxu0
    %3150 = vdwg.mxu0
    %3151 = vmatpush.bf16.msra.mxu0 %v2275
    %3152 = vmatpush.bf16.msra.mxu0 %v2262
    %3153 = vmatpush.bf16.msra.mxu0 %v2249
    %3154 = vmatpush.bf16.msra.mxu0 %v2236
    %3155 = vmatpush.bf16.msra.mxu0 %v2223
    %3156 = vmatpush.bf16.msra.mxu0 %v2210
    %3157 = vmatpush.bf16.msra.mxu0 %v2197
    %3158 = vmatpush.bf16.msra.mxu0 %v2184
    %3159 = vmatmul.bf16.gmra.mxu0 %v105
    %v3160 = vpop.f32.mrf.mxu0
    %v3161 = vadd.f32 %v3148, %v3160
    %v3162 = vpop.f32.mrf.mxu0
    %3163 = vdwg.mxu0
    %3164 = vmatpush.bf16.msra.mxu0 %v1964
    %3165 = vmatpush.bf16.msra.mxu0 %v1951
    %3166 = vmatpush.bf16.msra.mxu0 %v1938
    %3167 = vmatpush.bf16.msra.mxu0 %v1925
    %3168 = vmatpush.bf16.msra.mxu0 %v1912
    %3169 = vmatpush.bf16.msra.mxu0 %v1899
    %3170 = vmatpush.bf16.msra.mxu0 %v1886
    %3171 = vmatpush.bf16.msra.mxu0 %v1873
    %3172 = vmatmul.bf16.gmra.mxu0 %v102
    %v3173 = vpop.f32.mrf.mxu0
    %v3174 = vadd.f32 %v567, %v3173
    %v3175 = vpop.f32.mrf.mxu0
    %3176 = vdwg.mxu0
    %3177 = vmatpush.bf16.msra.mxu0 %v2068
    %3178 = vmatpush.bf16.msra.mxu0 %v2055
    %3179 = vmatpush.bf16.msra.mxu0 %v2042
    %3180 = vmatpush.bf16.msra.mxu0 %v2029
    %3181 = vmatpush.bf16.msra.mxu0 %v2016
    %3182 = vmatpush.bf16.msra.mxu0 %v2003
    %3183 = vmatpush.bf16.msra.mxu0 %v1990
    %3184 = vmatpush.bf16.msra.mxu0 %v1977
    %3185 = vmatmul.bf16.gmra.mxu0 %v103
    %v3186 = vpop.f32.mrf.mxu0
    %v3187 = vadd.f32 %v3174, %v3186
    %v3188 = vpop.f32.mrf.mxu0
    %3189 = vdwg.mxu0
    %3190 = vmatpush.bf16.msra.mxu0 %v2172
    %3191 = vmatpush.bf16.msra.mxu0 %v2159
    %3192 = vmatpush.bf16.msra.mxu0 %v2146
    %3193 = vmatpush.bf16.msra.mxu0 %v2133
    %3194 = vmatpush.bf16.msra.mxu0 %v2120
    %3195 = vmatpush.bf16.msra.mxu0 %v2107
    %3196 = vmatpush.bf16.msra.mxu0 %v2094
    %3197 = vmatpush.bf16.msra.mxu0 %v2081
    %3198 = vmatmul.bf16.gmra.mxu0 %v104
    %v3199 = vpop.f32.mrf.mxu0
    %v3200 = vadd.f32 %v3187, %v3199
    %v3201 = vpop.f32.mrf.mxu0
    %3202 = vdwg.mxu0
    %3203 = vmatpush.bf16.msra.mxu0 %v2276
    %3204 = vmatpush.bf16.msra.mxu0 %v2263
    %3205 = vmatpush.bf16.msra.mxu0 %v2250
    %3206 = vmatpush.bf16.msra.mxu0 %v2237
    %3207 = vmatpush.bf16.msra.mxu0 %v2224
    %3208 = vmatpush.bf16.msra.mxu0 %v2211
    %3209 = vmatpush.bf16.msra.mxu0 %v2198
    %3210 = vmatpush.bf16.msra.mxu0 %v2185
    %3211 = vmatmul.bf16.gmra.mxu0 %v105
    %v3212 = vpop.f32.mrf.mxu0
    %v3213 = vadd.f32 %v3200, %v3212
    %v3214 = vpop.f32.mrf.mxu0
    %3215 = vdwg.mxu0
    %3216 = vmatpush.bf16.msra.mxu0 %v1965
    %3217 = vmatpush.bf16.msra.mxu0 %v1952
    %3218 = vmatpush.bf16.msra.mxu0 %v1939
    %3219 = vmatpush.bf16.msra.mxu0 %v1926
    %3220 = vmatpush.bf16.msra.mxu0 %v1913
    %3221 = vmatpush.bf16.msra.mxu0 %v1900
    %3222 = vmatpush.bf16.msra.mxu0 %v1887
    %3223 = vmatpush.bf16.msra.mxu0 %v1874
    %3224 = vmatmul.bf16.gmra.mxu0 %v102
    %v3225 = vpop.f32.mrf.mxu0
    %v3226 = vadd.f32 %v568, %v3225
    %v3227 = vpop.f32.mrf.mxu0
    %3228 = vdwg.mxu0
    %3229 = vmatpush.bf16.msra.mxu0 %v2069
    %3230 = vmatpush.bf16.msra.mxu0 %v2056
    %3231 = vmatpush.bf16.msra.mxu0 %v2043
    %3232 = vmatpush.bf16.msra.mxu0 %v2030
    %3233 = vmatpush.bf16.msra.mxu0 %v2017
    %3234 = vmatpush.bf16.msra.mxu0 %v2004
    %3235 = vmatpush.bf16.msra.mxu0 %v1991
    %3236 = vmatpush.bf16.msra.mxu0 %v1978
    %3237 = vmatmul.bf16.gmra.mxu0 %v103
    %v3238 = vpop.f32.mrf.mxu0
    %v3239 = vadd.f32 %v3226, %v3238
    %v3240 = vpop.f32.mrf.mxu0
    %3241 = vdwg.mxu0
    %3242 = vmatpush.bf16.msra.mxu0 %v2173
    %3243 = vmatpush.bf16.msra.mxu0 %v2160
    %3244 = vmatpush.bf16.msra.mxu0 %v2147
    %3245 = vmatpush.bf16.msra.mxu0 %v2134
    %3246 = vmatpush.bf16.msra.mxu0 %v2121
    %3247 = vmatpush.bf16.msra.mxu0 %v2108
    %3248 = vmatpush.bf16.msra.mxu0 %v2095
    %3249 = vmatpush.bf16.msra.mxu0 %v2082
    %3250 = vmatmul.bf16.gmra.mxu0 %v104
    %v3251 = vpop.f32.mrf.mxu0
    %v3252 = vadd.f32 %v3239, %v3251
    %v3253 = vpop.f32.mrf.mxu0
    %3254 = vdwg.mxu0
    %3255 = vmatpush.bf16.msra.mxu0 %v2277
    %3256 = vmatpush.bf16.msra.mxu0 %v2264
    %3257 = vmatpush.bf16.msra.mxu0 %v2251
    %3258 = vmatpush.bf16.msra.mxu0 %v2238
    %3259 = vmatpush.bf16.msra.mxu0 %v2225
    %3260 = vmatpush.bf16.msra.mxu0 %v2212
    %3261 = vmatpush.bf16.msra.mxu0 %v2199
    %3262 = vmatpush.bf16.msra.mxu0 %v2186
    %3263 = vmatmul.bf16.gmra.mxu0 %v105
    %v3264 = vpop.f32.mrf.mxu0
    %v3265 = vadd.f32 %v3252, %v3264
    %v3266 = vpop.f32.mrf.mxu0
    %3267 = vdwg.mxu0
    %3268 = vmatpush.bf16.msra.mxu0 %v1966
    %3269 = vmatpush.bf16.msra.mxu0 %v1953
    %3270 = vmatpush.bf16.msra.mxu0 %v1940
    %3271 = vmatpush.bf16.msra.mxu0 %v1927
    %3272 = vmatpush.bf16.msra.mxu0 %v1914
    %3273 = vmatpush.bf16.msra.mxu0 %v1901
    %3274 = vmatpush.bf16.msra.mxu0 %v1888
    %3275 = vmatpush.bf16.msra.mxu0 %v1875
    %3276 = vmatmul.bf16.gmra.mxu0 %v102
    %v3277 = vpop.f32.mrf.mxu0
    %v3278 = vadd.f32 %v569, %v3277
    %v3279 = vpop.f32.mrf.mxu0
    %3280 = vdwg.mxu0
    %3281 = vmatpush.bf16.msra.mxu0 %v2070
    %3282 = vmatpush.bf16.msra.mxu0 %v2057
    %3283 = vmatpush.bf16.msra.mxu0 %v2044
    %3284 = vmatpush.bf16.msra.mxu0 %v2031
    %3285 = vmatpush.bf16.msra.mxu0 %v2018
    %3286 = vmatpush.bf16.msra.mxu0 %v2005
    %3287 = vmatpush.bf16.msra.mxu0 %v1992
    %3288 = vmatpush.bf16.msra.mxu0 %v1979
    %3289 = vmatmul.bf16.gmra.mxu0 %v103
    %v3290 = vpop.f32.mrf.mxu0
    %v3291 = vadd.f32 %v3278, %v3290
    %v3292 = vpop.f32.mrf.mxu0
    %3293 = vdwg.mxu0
    %3294 = vmatpush.bf16.msra.mxu0 %v2174
    %3295 = vmatpush.bf16.msra.mxu0 %v2161
    %3296 = vmatpush.bf16.msra.mxu0 %v2148
    %3297 = vmatpush.bf16.msra.mxu0 %v2135
    %3298 = vmatpush.bf16.msra.mxu0 %v2122
    %3299 = vmatpush.bf16.msra.mxu0 %v2109
    %3300 = vmatpush.bf16.msra.mxu0 %v2096
    %3301 = vmatpush.bf16.msra.mxu0 %v2083
    %3302 = vmatmul.bf16.gmra.mxu0 %v104
    %v3303 = vpop.f32.mrf.mxu0
    %v3304 = vadd.f32 %v3291, %v3303
    %v3305 = vpop.f32.mrf.mxu0
    %3306 = vdwg.mxu0
    %3307 = vmatpush.bf16.msra.mxu0 %v2278
    %3308 = vmatpush.bf16.msra.mxu0 %v2265
    %3309 = vmatpush.bf16.msra.mxu0 %v2252
    %3310 = vmatpush.bf16.msra.mxu0 %v2239
    %3311 = vmatpush.bf16.msra.mxu0 %v2226
    %3312 = vmatpush.bf16.msra.mxu0 %v2213
    %3313 = vmatpush.bf16.msra.mxu0 %v2200
    %3314 = vmatpush.bf16.msra.mxu0 %v2187
    %3315 = vmatmul.bf16.gmra.mxu0 %v105
    %v3316 = vpop.f32.mrf.mxu0
    %v3317 = vadd.f32 %v3304, %v3316
    %v3318 = vpop.f32.mrf.mxu0
    %3319 = vdwg.mxu0
    %3320 = vmatpush.bf16.msra.mxu0 %v1967
    %3321 = vmatpush.bf16.msra.mxu0 %v1954
    %3322 = vmatpush.bf16.msra.mxu0 %v1941
    %3323 = vmatpush.bf16.msra.mxu0 %v1928
    %3324 = vmatpush.bf16.msra.mxu0 %v1915
    %3325 = vmatpush.bf16.msra.mxu0 %v1902
    %3326 = vmatpush.bf16.msra.mxu0 %v1889
    %3327 = vmatpush.bf16.msra.mxu0 %v1876
    %3328 = vmatmul.bf16.gmra.mxu0 %v102
    %v3329 = vpop.f32.mrf.mxu0
    %v3330 = vadd.f32 %v570, %v3329
    %v3331 = vpop.f32.mrf.mxu0
    %3332 = vdwg.mxu0
    %3333 = vmatpush.bf16.msra.mxu0 %v2071
    %3334 = vmatpush.bf16.msra.mxu0 %v2058
    %3335 = vmatpush.bf16.msra.mxu0 %v2045
    %3336 = vmatpush.bf16.msra.mxu0 %v2032
    %3337 = vmatpush.bf16.msra.mxu0 %v2019
    %3338 = vmatpush.bf16.msra.mxu0 %v2006
    %3339 = vmatpush.bf16.msra.mxu0 %v1993
    %3340 = vmatpush.bf16.msra.mxu0 %v1980
    %3341 = vmatmul.bf16.gmra.mxu0 %v103
    %v3342 = vpop.f32.mrf.mxu0
    %v3343 = vadd.f32 %v3330, %v3342
    %v3344 = vpop.f32.mrf.mxu0
    %3345 = vdwg.mxu0
    %3346 = vmatpush.bf16.msra.mxu0 %v2175
    %3347 = vmatpush.bf16.msra.mxu0 %v2162
    %3348 = vmatpush.bf16.msra.mxu0 %v2149
    %3349 = vmatpush.bf16.msra.mxu0 %v2136
    %3350 = vmatpush.bf16.msra.mxu0 %v2123
    %3351 = vmatpush.bf16.msra.mxu0 %v2110
    %3352 = vmatpush.bf16.msra.mxu0 %v2097
    %3353 = vmatpush.bf16.msra.mxu0 %v2084
    %3354 = vmatmul.bf16.gmra.mxu0 %v104
    %v3355 = vpop.f32.mrf.mxu0
    %v3356 = vadd.f32 %v3343, %v3355
    %v3357 = vpop.f32.mrf.mxu0
    %3358 = vdwg.mxu0
    %3359 = vmatpush.bf16.msra.mxu0 %v2279
    %3360 = vmatpush.bf16.msra.mxu0 %v2266
    %3361 = vmatpush.bf16.msra.mxu0 %v2253
    %3362 = vmatpush.bf16.msra.mxu0 %v2240
    %3363 = vmatpush.bf16.msra.mxu0 %v2227
    %3364 = vmatpush.bf16.msra.mxu0 %v2214
    %3365 = vmatpush.bf16.msra.mxu0 %v2201
    %3366 = vmatpush.bf16.msra.mxu0 %v2188
    %3367 = vmatmul.bf16.gmra.mxu0 %v105
    %v3368 = vpop.f32.mrf.mxu0
    %v3369 = vadd.f32 %v3356, %v3368
    %v3370 = vpop.f32.mrf.mxu0
    %3371 = vdwg.mxu0
    %v3372 = vmax.f32 %v2745, 0.0
    %v3373 = vmax.f32 %v2797, 0.0
    %v3374 = vmax.f32 %v2849, 0.0
    %v3375 = vmax.f32 %v2901, 0.0
    %v3376 = vmax.f32 %v2953, 0.0
    %v3377 = vmax.f32 %v3005, 0.0
    %v3378 = vmax.f32 %v3057, 0.0
    %v3379 = vmax.f32 %v3109, 0.0
    %v3380 = vmax.f32 %v3161, 0.0
    %v3381 = vmax.f32 %v3213, 0.0
    %v3382 = vmax.f32 %v3265, 0.0
    %v3383 = vmax.f32 %v3317, 0.0
    %v3384 = vmax.f32 %v3369, 0.0
    %v3385 = vpack.c.bf16 %v3372, %v3372
    %v3386 = vpack.c.bf16 %v3373, %v3373
    %v3387 = vpack.c.bf16 %v3374, %v3374
    %v3388 = vpack.c.bf16 %v3375, %v3375
    %v3389 = vpack.c.bf16 %v3376, %v3376
    %v3390 = vpack.c.bf16 %v3377, %v3377
    %v3391 = vpack.c.bf16 %v3378, %v3378
    %v3392 = vpack.c.bf16 %v3379, %v3379
    %v3393 = vpack.c.bf16 %v3380, %v3380
    %v3394 = vpack.c.bf16 %v3381, %v3381
    %v3395 = vpack.c.bf16 %v3382, %v3382
    %v3396 = vpack.c.bf16 %v3383, %v3383
    %v3397 = vpack.c.bf16 %v3384, %v3384
    %v3398 = vld [vmem:[#allocation6] sm:$0xff]
    %v3399 = vld [vmem:[#allocation6 + $0x8] sm:$0xff]
    %v3400 = vld [vmem:[#allocation6 + $0x10] sm:$0xff]
    %v3401 = vld [vmem:[#allocation6 + $0x18] sm:$0xff]
    %v3402 = vld [vmem:[#allocation6 + $0x20] sm:$0xff]
    %v3403 = vld [vmem:[#allocation6 + $0x28] sm:$0xff]
    %v3404 = vld [vmem:[#allocation6 + $0x30] sm:$0xff]
    %v3405 = vld [vmem:[#allocation6 + $0x38] sm:$0xff]
    %v3406 = vld [vmem:[#allocation6 + $0x40] sm:$0xff]
    %v3407 = vld [vmem:[#allocation6 + $0x48] sm:$0xff]
    %v3408 = vld [vmem:[#allocation6 + $0x50] sm:$0xff]
    %v3409 = vld [vmem:[#allocation6 + $0x58] sm:$0xff]
    %v3410 = vld [vmem:[#allocation6 + $0x60] sm:$0xff]
    %v3411 = vld [vmem:[#allocation6 + $0x68] sm:$0xff]
    %v3412 = vld [vmem:[#allocation6 + $0x70] sm:$0xff]
    %v3413 = vld [vmem:[#allocation6 + $0x78] sm:$0xff]
    %v3414 = vld [vmem:[#allocation6 + $0x80] sm:$0xff]
    %v3415 = vld [vmem:[#allocation6 + $0x88] sm:$0xff]
    %v3416 = vld [vmem:[#allocation6 + $0x90] sm:$0xff]
    %v3417 = vld [vmem:[#allocation6 + $0x98] sm:$0xff]
    %v3418 = vld [vmem:[#allocation6 + $0xa0] sm:$0xff]
    %v3419 = vld [vmem:[#allocation6 + $0xa8] sm:$0xff]
    %v3420 = vld [vmem:[#allocation6 + $0xb0] sm:$0xff]
    %v3421 = vld [vmem:[#allocation6 + $0xb8] sm:$0xff]
    %v3422 = vld [vmem:[#allocation6 + $0xc0] sm:$0xff]
    %v3423 = vld [vmem:[#allocation6 + $0xc8] sm:$0xff]
    %v3424 = vld [vmem:[#allocation6 + $0xd0] sm:$0xff]
    %v3425 = vld [vmem:[#allocation6 + $0xd8] sm:$0xff]
    %v3426 = vld [vmem:[#allocation6 + $0xe0] sm:$0xff]
    %v3427 = vld [vmem:[#allocation6 + $0xe8] sm:$0xff]
    %v3428 = vld [vmem:[#allocation6 + $0xf0] sm:$0xff]
    %v3429 = vld [vmem:[#allocation6 + $0xf8] sm:$0xff]
    %v3430 = vld [vmem:[#allocation6 + $0x100] sm:$0xff]
    %v3431 = vld [vmem:[#allocation6 + $0x108] sm:$0xff]
    %v3432 = vld [vmem:[#allocation6 + $0x110] sm:$0xff]
    %v3433 = vld [vmem:[#allocation6 + $0x118] sm:$0xff]
    %v3434 = vld [vmem:[#allocation6 + $0x120] sm:$0xff]
    %v3435 = vld [vmem:[#allocation6 + $0x128] sm:$0xff]
    %v3436 = vld [vmem:[#allocation6 + $0x130] sm:$0xff]
    %v3437 = vld [vmem:[#allocation6 + $0x138] sm:$0xff]
    %v3438 = vld [vmem:[#allocation6 + $0x140] sm:$0xff]
    %v3439 = vld [vmem:[#allocation6 + $0x148] sm:$0xff]
    %v3440 = vld [vmem:[#allocation6 + $0x150] sm:$0xff]
    %v3441 = vld [vmem:[#allocation6 + $0x158] sm:$0xff]
    %v3442 = vld [vmem:[#allocation6 + $0x160] sm:$0xff]
    %v3443 = vld [vmem:[#allocation6 + $0x168] sm:$0xff]
    %v3444 = vld [vmem:[#allocation6 + $0x170] sm:$0xff]
    %v3445 = vld [vmem:[#allocation6 + $0x178] sm:$0xff]
    %v3446 = vld [vmem:[#allocation6 + $0x180] sm:$0xff]
    %v3447 = vld [vmem:[#allocation6 + $0x188] sm:$0xff]
    %v3448 = vld [vmem:[#allocation6 + $0x190] sm:$0xff]
    %v3449 = vld [vmem:[#allocation6 + $0x198] sm:$0xff]
    %v3450 = vld [vmem:[#allocation6 + $0x1a0] sm:$0xff]
    %v3451 = vld [vmem:[#allocation6 + $0x1a8] sm:$0xff]
    %v3452 = vld [vmem:[#allocation6 + $0x1b0] sm:$0xff]
    %v3453 = vld [vmem:[#allocation6 + $0x1b8] sm:$0xff]
    %v3454 = vld [vmem:[#allocation6 + $0x1c0] sm:$0xff]
    %v3455 = vld [vmem:[#allocation6 + $0x1c8] sm:$0xff]
    %v3456 = vld [vmem:[#allocation6 + $0x1d0] sm:$0xff]
    %v3457 = vld [vmem:[#allocation6 + $0x1d8] sm:$0xff]
    %v3458 = vld [vmem:[#allocation6 + $0x1e0] sm:$0xff]
    %v3459 = vld [vmem:[#allocation6 + $0x1e8] sm:$0xff]
    %v3460 = vld [vmem:[#allocation6 + $0x1f0] sm:$0xff]
    %v3461 = vld [vmem:[#allocation6 + $0x1f8] sm:$0xff]
    %v3462 = vld [vmem:[#allocation6 + $0x200] sm:$0xff]
    %v3463 = vld [vmem:[#allocation6 + $0x208] sm:$0xff]
    %v3464 = vld [vmem:[#allocation6 + $0x210] sm:$0xff]
    %v3465 = vld [vmem:[#allocation6 + $0x218] sm:$0xff]
    %v3466 = vld [vmem:[#allocation6 + $0x220] sm:$0xff]
    %v3467 = vld [vmem:[#allocation6 + $0x228] sm:$0xff]
    %v3468 = vld [vmem:[#allocation6 + $0x230] sm:$0xff]
    %v3469 = vld [vmem:[#allocation6 + $0x238] sm:$0xff]
    %v3470 = vld [vmem:[#allocation6 + $0x240] sm:$0xff]
    %v3471 = vld [vmem:[#allocation6 + $0x248] sm:$0xff]
    %v3472 = vld [vmem:[#allocation6 + $0x250] sm:$0xff]
    %v3473 = vld [vmem:[#allocation6 + $0x258] sm:$0xff]
    %v3474 = vld [vmem:[#allocation6 + $0x260] sm:$0xff]
    %v3475 = vld [vmem:[#allocation6 + $0x268] sm:$0xff]
    %v3476 = vld [vmem:[#allocation6 + $0x270] sm:$0xff]
    %v3477 = vld [vmem:[#allocation6 + $0x278] sm:$0xff]
    %v3478 = vld [vmem:[#allocation6 + $0x280] sm:$0xff]
    %v3479 = vld [vmem:[#allocation6 + $0x288] sm:$0xff]
    %v3480 = vld [vmem:[#allocation6 + $0x290] sm:$0xff]
    %v3481 = vld [vmem:[#allocation6 + $0x298] sm:$0xff]
    %v3482 = vld [vmem:[#allocation6 + $0x2a0] sm:$0xff]
    %v3483 = vld [vmem:[#allocation6 + $0x2a8] sm:$0xff]
    %v3484 = vld [vmem:[#allocation6 + $0x2b0] sm:$0xff]
    %v3485 = vld [vmem:[#allocation6 + $0x2b8] sm:$0xff]
    %v3486 = vld [vmem:[#allocation6 + $0x2c0] sm:$0xff]
    %v3487 = vld [vmem:[#allocation6 + $0x2c8] sm:$0xff]
    %v3488 = vld [vmem:[#allocation6 + $0x2d0] sm:$0xff]
    %v3489 = vld [vmem:[#allocation6 + $0x2d8] sm:$0xff]
    %v3490 = vld [vmem:[#allocation6 + $0x2e0] sm:$0xff]
    %v3491 = vld [vmem:[#allocation6 + $0x2e8] sm:$0xff]
    %v3492 = vld [vmem:[#allocation6 + $0x2f0] sm:$0xff]
    %v3493 = vld [vmem:[#allocation6 + $0x2f8] sm:$0xff]
    %v3494 = vld [vmem:[#allocation6 + $0x300] sm:$0xff]
    %v3495 = vld [vmem:[#allocation6 + $0x308] sm:$0xff]
    %v3496 = vld [vmem:[#allocation6 + $0x310] sm:$0xff]
    %v3497 = vld [vmem:[#allocation6 + $0x318] sm:$0xff]
    %v3498 = vld [vmem:[#allocation6 + $0x320] sm:$0xff]
    %v3499 = vld [vmem:[#allocation6 + $0x328] sm:$0xff]
    %v3500 = vld [vmem:[#allocation6 + $0x330] sm:$0xff]
    %v3501 = vld [vmem:[#allocation6 + $0x338] sm:$0xff]
    %v3502 = vld [vmem:[#allocation6 + $0x340] sm:$0xff]
    %v3503 = vld [vmem:[#allocation6 + $0x348] sm:$0xff]
    %v3504 = vld [vmem:[#allocation6 + $0x350] sm:$0xff]
    %v3505 = vld [vmem:[#allocation6 + $0x358] sm:$0xff]
    %v3506 = vld [vmem:[#allocation6 + $0x360] sm:$0xff]
    %v3507 = vld [vmem:[#allocation6 + $0x368] sm:$0xff]
    %v3508 = vld [vmem:[#allocation6 + $0x370] sm:$0xff]
    %v3509 = vld [vmem:[#allocation6 + $0x378] sm:$0xff]
    %v3510 = vld [vmem:[#allocation6 + $0x380] sm:$0xff]
    %v3511 = vld [vmem:[#allocation6 + $0x388] sm:$0xff]
    %v3512 = vld [vmem:[#allocation6 + $0x390] sm:$0xff]
    %v3513 = vld [vmem:[#allocation6 + $0x398] sm:$0xff]
    %v3514 = vld [vmem:[#allocation6 + $0x3a0] sm:$0xff]
    %v3515 = vld [vmem:[#allocation6 + $0x3a8] sm:$0xff]
    %v3516 = vld [vmem:[#allocation6 + $0x3b0] sm:$0xff]
    %v3517 = vld [vmem:[#allocation6 + $0x3b8] sm:$0xff]
    %v3518 = vld [vmem:[#allocation6 + $0x3c0] sm:$0xff]
    %v3519 = vld [vmem:[#allocation6 + $0x3c8] sm:$0xff]
    %v3520 = vld [vmem:[#allocation6 + $0x3d0] sm:$0xff]
    %v3521 = vld [vmem:[#allocation6 + $0x3d8] sm:$0xff]
    %v3522 = vld [vmem:[#allocation6 + $0x3e0] sm:$0xff]
    %v3523 = vld [vmem:[#allocation6 + $0x3e8] sm:$0xff]
    %v3524 = vld [vmem:[#allocation6 + $0x3f0] sm:$0xff]
    %v3525 = vld [vmem:[#allocation6 + $0x3f8] sm:$0xff]
    %v3526 = vld [vmem:[#allocation6 + $0x400] sm:$0xff]
    %v3527 = vld [vmem:[#allocation6 + $0x408] sm:$0xff]
    %v3528 = vld [vmem:[#allocation6 + $0x410] sm:$0xff]
    %v3529 = vld [vmem:[#allocation6 + $0x418] sm:$0xff]
    %v3530 = vld [vmem:[#allocation6 + $0x420] sm:$0xff]
    %v3531 = vld [vmem:[#allocation6 + $0x428] sm:$0xff]
    %v3532 = vld [vmem:[#allocation6 + $0x430] sm:$0xff]
    %v3533 = vld [vmem:[#allocation6 + $0x438] sm:$0xff]
    %v3534 = vld [vmem:[#allocation6 + $0x440] sm:$0xff]
    %v3535 = vld [vmem:[#allocation6 + $0x448] sm:$0xff]
    %v3536 = vld [vmem:[#allocation6 + $0x450] sm:$0xff]
    %v3537 = vld [vmem:[#allocation6 + $0x458] sm:$0xff]
    %v3538 = vld [vmem:[#allocation6 + $0x460] sm:$0xff]
    %v3539 = vld [vmem:[#allocation6 + $0x468] sm:$0xff]
    %v3540 = vld [vmem:[#allocation6 + $0x470] sm:$0xff]
    %v3541 = vld [vmem:[#allocation6 + $0x478] sm:$0xff]
    %v3542 = vld [vmem:[#allocation6 + $0x480] sm:$0xff]
    %v3543 = vld [vmem:[#allocation6 + $0x488] sm:$0xff]
    %v3544 = vld [vmem:[#allocation6 + $0x490] sm:$0xff]
    %v3545 = vld [vmem:[#allocation6 + $0x498] sm:$0xff]
    %v3546 = vld [vmem:[#allocation6 + $0x4a0] sm:$0xff]
    %v3547 = vld [vmem:[#allocation6 + $0x4a8] sm:$0xff]
    %v3548 = vld [vmem:[#allocation6 + $0x4b0] sm:$0xff]
    %v3549 = vld [vmem:[#allocation6 + $0x4b8] sm:$0xff]
    %v3550 = vld [vmem:[#allocation6 + $0x4c0] sm:$0xff]
    %v3551 = vld [vmem:[#allocation6 + $0x4c8] sm:$0xff]
    %v3552 = vld [vmem:[#allocation6 + $0x4d0] sm:$0xff]
    %v3553 = vld [vmem:[#allocation6 + $0x4d8] sm:$0xff]
    %v3554 = vld [vmem:[#allocation6 + $0x4e0] sm:$0xff]
    %v3555 = vld [vmem:[#allocation6 + $0x4e8] sm:$0xff]
    %v3556 = vld [vmem:[#allocation6 + $0x4f0] sm:$0xff]
    %v3557 = vld [vmem:[#allocation6 + $0x4f8] sm:$0xff]
    %v3558 = vld [vmem:[#allocation6 + $0x500] sm:$0xff]
    %v3559 = vld [vmem:[#allocation6 + $0x508] sm:$0xff]
    %v3560 = vld [vmem:[#allocation6 + $0x510] sm:$0xff]
    %v3561 = vld [vmem:[#allocation6 + $0x518] sm:$0xff]
    %v3562 = vld [vmem:[#allocation6 + $0x520] sm:$0xff]
    %v3563 = vld [vmem:[#allocation6 + $0x528] sm:$0xff]
    %v3564 = vld [vmem:[#allocation6 + $0x530] sm:$0xff]
    %v3565 = vld [vmem:[#allocation6 + $0x538] sm:$0xff]
    %v3566 = vld [vmem:[#allocation6 + $0x540] sm:$0xff]
    %v3567 = vld [vmem:[#allocation6 + $0x548] sm:$0xff]
    %v3568 = vld [vmem:[#allocation6 + $0x550] sm:$0xff]
    %v3569 = vld [vmem:[#allocation6 + $0x558] sm:$0xff]
    %v3570 = vld [vmem:[#allocation6 + $0x560] sm:$0xff]
    %v3571 = vld [vmem:[#allocation6 + $0x568] sm:$0xff]
    %v3572 = vld [vmem:[#allocation6 + $0x570] sm:$0xff]
    %v3573 = vld [vmem:[#allocation6 + $0x578] sm:$0xff]
    %v3574 = vld [vmem:[#allocation6 + $0x580] sm:$0xff]
    %v3575 = vld [vmem:[#allocation6 + $0x588] sm:$0xff]
    %v3576 = vld [vmem:[#allocation6 + $0x590] sm:$0xff]
    %v3577 = vld [vmem:[#allocation6 + $0x598] sm:$0xff]
    %v3578 = vld [vmem:[#allocation6 + $0x5a0] sm:$0xff]
    %v3579 = vld [vmem:[#allocation6 + $0x5a8] sm:$0xff]
    %v3580 = vld [vmem:[#allocation6 + $0x5b0] sm:$0xff]
    %v3581 = vld [vmem:[#allocation6 + $0x5b8] sm:$0xff]
    %v3582 = vld [vmem:[#allocation6 + $0x5c0] sm:$0xff]
    %v3583 = vld [vmem:[#allocation6 + $0x5c8] sm:$0xff]
    %v3584 = vld [vmem:[#allocation6 + $0x5d0] sm:$0xff]
    %v3585 = vld [vmem:[#allocation6 + $0x5d8] sm:$0xff]
    %v3586 = vld [vmem:[#allocation6 + $0x5e0] sm:$0xff]
    %v3587 = vld [vmem:[#allocation6 + $0x5e8] sm:$0xff]
    %v3588 = vld [vmem:[#allocation6 + $0x5f0] sm:$0xff]
    %v3589 = vld [vmem:[#allocation6 + $0x5f8] sm:$0xff]
    %v3590 = vld [vmem:[#allocation6 + $0x600] sm:$0xff]
    %v3591 = vld [vmem:[#allocation6 + $0x608] sm:$0xff]
    %v3592 = vld [vmem:[#allocation6 + $0x610] sm:$0xff]
    %v3593 = vld [vmem:[#allocation6 + $0x618] sm:$0xff]
    %v3594 = vld [vmem:[#allocation6 + $0x620] sm:$0xff]
    %v3595 = vld [vmem:[#allocation6 + $0x628] sm:$0xff]
    %v3596 = vld [vmem:[#allocation6 + $0x630] sm:$0xff]
    %v3597 = vld [vmem:[#allocation6 + $0x638] sm:$0xff]
    %v3598 = vld [vmem:[#allocation6 + $0x640] sm:$0xff]
    %v3599 = vld [vmem:[#allocation6 + $0x648] sm:$0xff]
    %v3600 = vld [vmem:[#allocation6 + $0x650] sm:$0xff]
    %v3601 = vld [vmem:[#allocation6 + $0x658] sm:$0xff]
    %v3602 = vld [vmem:[#allocation6 + $0x660] sm:$0xff]
    %v3603 = vld [vmem:[#allocation6 + $0x668] sm:$0xff]
    %v3604 = vld [vmem:[#allocation6 + $0x670] sm:$0xff]
    %v3605 = vld [vmem:[#allocation6 + $0x678] sm:$0xff]
    %v3606 = vld [vmem:[#allocation7] sm:$0x3]
    %v3608 = vperm.slane %v3606, 0
    %v3609 = vperm.slane %v3606, 1
    %v3820 = vunpack.c.l.b16 %v3398
    %v3821 = vunpack.c.h.b16 %v3398
    %v3822 = vunpack.c.l.b16 %v3399
    %v3823 = vunpack.c.h.b16 %v3399
    %v3824 = vunpack.c.l.b16 %v3400
    %v3825 = vunpack.c.h.b16 %v3400
    %v3826 = vunpack.c.l.b16 %v3401
    %v3827 = vunpack.c.h.b16 %v3401
    %v3828 = vunpack.c.l.b16 %v3402
    %v3829 = vunpack.c.h.b16 %v3402
    %v3830 = vunpack.c.l.b16 %v3403
    %v3831 = vunpack.c.h.b16 %v3403
    %v3832 = vunpack.c.l.b16 %v3404
    %v3833 = vunpack.c.h.b16 %v3404
    %v3834 = vunpack.c.l.b16 %v3405
    %v3835 = vunpack.c.h.b16 %v3405
    %v3836 = vunpack.c.l.b16 %v3406
    %v3837 = vunpack.c.h.b16 %v3406
    %v3838 = vunpack.c.l.b16 %v3407
    %v3839 = vunpack.c.h.b16 %v3407
    %v3840 = vunpack.c.l.b16 %v3408
    %v3841 = vunpack.c.h.b16 %v3408
    %v3842 = vunpack.c.l.b16 %v3409
    %v3843 = vunpack.c.h.b16 %v3409
    %v3844 = vunpack.c.l.b16 %v3410
    %v3845 = vunpack.c.h.b16 %v3410
    %v3846 = vunpack.c.l.b16 %v3411
    %v3847 = vunpack.c.h.b16 %v3411
    %v3848 = vunpack.c.l.b16 %v3412
    %v3849 = vunpack.c.h.b16 %v3412
    %v3850 = vunpack.c.l.b16 %v3413
    %v3851 = vunpack.c.h.b16 %v3413
    %v3852 = vunpack.c.l.b16 %v3414
    %v3853 = vunpack.c.h.b16 %v3414
    %v3854 = vunpack.c.l.b16 %v3415
    %v3855 = vunpack.c.h.b16 %v3415
    %v3856 = vunpack.c.l.b16 %v3416
    %v3857 = vunpack.c.h.b16 %v3416
    %v3858 = vunpack.c.l.b16 %v3417
    %v3859 = vunpack.c.h.b16 %v3417
    %v3860 = vunpack.c.l.b16 %v3418
    %v3861 = vunpack.c.h.b16 %v3418
    %v3862 = vunpack.c.l.b16 %v3419
    %v3863 = vunpack.c.h.b16 %v3419
    %v3864 = vunpack.c.l.b16 %v3420
    %v3865 = vunpack.c.h.b16 %v3420
    %v3866 = vunpack.c.l.b16 %v3421
    %v3867 = vunpack.c.h.b16 %v3421
    %v3868 = vunpack.c.l.b16 %v3422
    %v3869 = vunpack.c.h.b16 %v3422
    %v3870 = vunpack.c.l.b16 %v3423
    %v3871 = vunpack.c.h.b16 %v3423
    %v3872 = vunpack.c.l.b16 %v3424
    %v3873 = vunpack.c.h.b16 %v3424
    %v3874 = vunpack.c.l.b16 %v3425
    %v3875 = vunpack.c.h.b16 %v3425
    %v3876 = vunpack.c.l.b16 %v3426
    %v3877 = vunpack.c.h.b16 %v3426
    %v3878 = vunpack.c.l.b16 %v3427
    %v3879 = vunpack.c.h.b16 %v3427
    %v3880 = vunpack.c.l.b16 %v3428
    %v3881 = vunpack.c.h.b16 %v3428
    %v3882 = vunpack.c.l.b16 %v3429
    %v3883 = vunpack.c.h.b16 %v3429
    %v3884 = vunpack.c.l.b16 %v3430
    %v3885 = vunpack.c.h.b16 %v3430
    %v3886 = vunpack.c.l.b16 %v3431
    %v3887 = vunpack.c.h.b16 %v3431
    %v3888 = vunpack.c.l.b16 %v3432
    %v3889 = vunpack.c.h.b16 %v3432
    %v3890 = vunpack.c.l.b16 %v3433
    %v3891 = vunpack.c.h.b16 %v3433
    %v3892 = vunpack.c.l.b16 %v3434
    %v3893 = vunpack.c.h.b16 %v3434
    %v3894 = vunpack.c.l.b16 %v3435
    %v3895 = vunpack.c.h.b16 %v3435
    %v3896 = vunpack.c.l.b16 %v3436
    %v3897 = vunpack.c.h.b16 %v3436
    %v3898 = vunpack.c.l.b16 %v3437
    %v3899 = vunpack.c.h.b16 %v3437
    %v3900 = vunpack.c.l.b16 %v3438
    %v3901 = vunpack.c.h.b16 %v3438
    %v3902 = vunpack.c.l.b16 %v3439
    %v3903 = vunpack.c.h.b16 %v3439
    %v3904 = vunpack.c.l.b16 %v3440
    %v3905 = vunpack.c.h.b16 %v3440
    %v3906 = vunpack.c.l.b16 %v3441
    %v3907 = vunpack.c.h.b16 %v3441
    %v3908 = vunpack.c.l.b16 %v3442
    %v3909 = vunpack.c.h.b16 %v3442
    %v3910 = vunpack.c.l.b16 %v3443
    %v3911 = vunpack.c.h.b16 %v3443
    %v3912 = vunpack.c.l.b16 %v3444
    %v3913 = vunpack.c.h.b16 %v3444
    %v3914 = vunpack.c.l.b16 %v3445
    %v3915 = vunpack.c.h.b16 %v3445
    %v3916 = vunpack.c.l.b16 %v3446
    %v3917 = vunpack.c.h.b16 %v3446
    %v3918 = vunpack.c.l.b16 %v3447
    %v3919 = vunpack.c.h.b16 %v3447
    %v3920 = vunpack.c.l.b16 %v3448
    %v3921 = vunpack.c.h.b16 %v3448
    %v3922 = vunpack.c.l.b16 %v3449
    %v3923 = vunpack.c.h.b16 %v3449
    %v3924 = vunpack.c.l.b16 %v3450
    %v3925 = vunpack.c.h.b16 %v3450
    %v3926 = vunpack.c.l.b16 %v3451
    %v3927 = vunpack.c.h.b16 %v3451
    %v3928 = vunpack.c.l.b16 %v3452
    %v3929 = vunpack.c.h.b16 %v3452
    %v3930 = vunpack.c.l.b16 %v3453
    %v3931 = vunpack.c.h.b16 %v3453
    %v3932 = vunpack.c.l.b16 %v3454
    %v3933 = vunpack.c.h.b16 %v3454
    %v3934 = vunpack.c.l.b16 %v3455
    %v3935 = vunpack.c.h.b16 %v3455
    %v3936 = vunpack.c.l.b16 %v3456
    %v3937 = vunpack.c.h.b16 %v3456
    %v3938 = vunpack.c.l.b16 %v3457
    %v3939 = vunpack.c.h.b16 %v3457
    %v3940 = vunpack.c.l.b16 %v3458
    %v3941 = vunpack.c.h.b16 %v3458
    %v3942 = vunpack.c.l.b16 %v3459
    %v3943 = vunpack.c.h.b16 %v3459
    %v3944 = vunpack.c.l.b16 %v3460
    %v3945 = vunpack.c.h.b16 %v3460
    %v3946 = vunpack.c.l.b16 %v3461
    %v3947 = vunpack.c.h.b16 %v3461
    %v3948 = vunpack.c.l.b16 %v3462
    %v3949 = vunpack.c.h.b16 %v3462
    %v3950 = vunpack.c.l.b16 %v3463
    %v3951 = vunpack.c.h.b16 %v3463
    %v3952 = vunpack.c.l.b16 %v3464
    %v3953 = vunpack.c.h.b16 %v3464
    %v3954 = vunpack.c.l.b16 %v3465
    %v3955 = vunpack.c.h.b16 %v3465
    %v3956 = vunpack.c.l.b16 %v3466
    %v3957 = vunpack.c.h.b16 %v3466
    %v3958 = vunpack.c.l.b16 %v3467
    %v3959 = vunpack.c.h.b16 %v3467
    %v3960 = vunpack.c.l.b16 %v3468
    %v3961 = vunpack.c.h.b16 %v3468
    %v3962 = vunpack.c.l.b16 %v3469
    %v3963 = vunpack.c.h.b16 %v3469
    %v3964 = vunpack.c.l.b16 %v3470
    %v3965 = vunpack.c.h.b16 %v3470
    %v3966 = vunpack.c.l.b16 %v3471
    %v3967 = vunpack.c.h.b16 %v3471
    %v3968 = vunpack.c.l.b16 %v3472
    %v3969 = vunpack.c.h.b16 %v3472
    %v3970 = vunpack.c.l.b16 %v3473
    %v3971 = vunpack.c.h.b16 %v3473
    %v3972 = vunpack.c.l.b16 %v3474
    %v3973 = vunpack.c.h.b16 %v3474
    %v3974 = vunpack.c.l.b16 %v3475
    %v3975 = vunpack.c.h.b16 %v3475
    %v3976 = vunpack.c.l.b16 %v3476
    %v3977 = vunpack.c.h.b16 %v3476
    %v3978 = vunpack.c.l.b16 %v3477
    %v3979 = vunpack.c.h.b16 %v3477
    %v3980 = vunpack.c.l.b16 %v3478
    %v3981 = vunpack.c.h.b16 %v3478
    %v3982 = vunpack.c.l.b16 %v3479
    %v3983 = vunpack.c.h.b16 %v3479
    %v3984 = vunpack.c.l.b16 %v3480
    %v3985 = vunpack.c.h.b16 %v3480
    %v3986 = vunpack.c.l.b16 %v3481
    %v3987 = vunpack.c.h.b16 %v3481
    %v3988 = vunpack.c.l.b16 %v3482
    %v3989 = vunpack.c.h.b16 %v3482
    %v3990 = vunpack.c.l.b16 %v3483
    %v3991 = vunpack.c.h.b16 %v3483
    %v3992 = vunpack.c.l.b16 %v3484
    %v3993 = vunpack.c.h.b16 %v3484
    %v3994 = vunpack.c.l.b16 %v3485
    %v3995 = vunpack.c.h.b16 %v3485
    %v3996 = vunpack.c.l.b16 %v3486
    %v3997 = vunpack.c.h.b16 %v3486
    %v3998 = vunpack.c.l.b16 %v3487
    %v3999 = vunpack.c.h.b16 %v3487
    %v4000 = vunpack.c.l.b16 %v3488
    %v4001 = vunpack.c.h.b16 %v3488
    %v4002 = vunpack.c.l.b16 %v3489
    %v4003 = vunpack.c.h.b16 %v3489
    %v4004 = vunpack.c.l.b16 %v3490
    %v4005 = vunpack.c.h.b16 %v3490
    %v4006 = vunpack.c.l.b16 %v3491
    %v4007 = vunpack.c.h.b16 %v3491
    %v4008 = vunpack.c.l.b16 %v3492
    %v4009 = vunpack.c.h.b16 %v3492
    %v4010 = vunpack.c.l.b16 %v3493
    %v4011 = vunpack.c.h.b16 %v3493
    %v4012 = vunpack.c.l.b16 %v3494
    %v4013 = vunpack.c.h.b16 %v3494
    %v4014 = vunpack.c.l.b16 %v3495
    %v4015 = vunpack.c.h.b16 %v3495
    %v4016 = vunpack.c.l.b16 %v3496
    %v4017 = vunpack.c.h.b16 %v3496
    %v4018 = vunpack.c.l.b16 %v3497
    %v4019 = vunpack.c.h.b16 %v3497
    %v4020 = vunpack.c.l.b16 %v3498
    %v4021 = vunpack.c.h.b16 %v3498
    %v4022 = vunpack.c.l.b16 %v3499
    %v4023 = vunpack.c.h.b16 %v3499
    %v4024 = vunpack.c.l.b16 %v3500
    %v4025 = vunpack.c.h.b16 %v3500
    %v4026 = vunpack.c.l.b16 %v3501
    %v4027 = vunpack.c.h.b16 %v3501
    %v4028 = vunpack.c.l.b16 %v3502
    %v4029 = vunpack.c.h.b16 %v3502
    %v4030 = vunpack.c.l.b16 %v3503
    %v4031 = vunpack.c.h.b16 %v3503
    %v4032 = vunpack.c.l.b16 %v3504
    %v4033 = vunpack.c.h.b16 %v3504
    %v4034 = vunpack.c.l.b16 %v3505
    %v4035 = vunpack.c.h.b16 %v3505
    %v4036 = vunpack.c.l.b16 %v3506
    %v4037 = vunpack.c.h.b16 %v3506
    %v4038 = vunpack.c.l.b16 %v3507
    %v4039 = vunpack.c.h.b16 %v3507
    %v4040 = vunpack.c.l.b16 %v3508
    %v4041 = vunpack.c.h.b16 %v3508
    %v4042 = vunpack.c.l.b16 %v3509
    %v4043 = vunpack.c.h.b16 %v3509
    %v4044 = vunpack.c.l.b16 %v3510
    %v4045 = vunpack.c.h.b16 %v3510
    %v4046 = vunpack.c.l.b16 %v3511
    %v4047 = vunpack.c.h.b16 %v3511
    %v4048 = vunpack.c.l.b16 %v3512
    %v4049 = vunpack.c.h.b16 %v3512
    %v4050 = vunpack.c.l.b16 %v3513
    %v4051 = vunpack.c.h.b16 %v3513
    %v4052 = vunpack.c.l.b16 %v3514
    %v4053 = vunpack.c.h.b16 %v3514
    %v4054 = vunpack.c.l.b16 %v3515
    %v4055 = vunpack.c.h.b16 %v3515
    %v4056 = vunpack.c.l.b16 %v3516
    %v4057 = vunpack.c.h.b16 %v3516
    %v4058 = vunpack.c.l.b16 %v3517
    %v4059 = vunpack.c.h.b16 %v3517
    %v4060 = vunpack.c.l.b16 %v3518
    %v4061 = vunpack.c.h.b16 %v3518
    %v4062 = vunpack.c.l.b16 %v3519
    %v4063 = vunpack.c.h.b16 %v3519
    %v4064 = vunpack.c.l.b16 %v3520
    %v4065 = vunpack.c.h.b16 %v3520
    %v4066 = vunpack.c.l.b16 %v3521
    %v4067 = vunpack.c.h.b16 %v3521
    %v4068 = vunpack.c.l.b16 %v3522
    %v4069 = vunpack.c.h.b16 %v3522
    %v4070 = vunpack.c.l.b16 %v3523
    %v4071 = vunpack.c.h.b16 %v3523
    %v4072 = vunpack.c.l.b16 %v3524
    %v4073 = vunpack.c.h.b16 %v3524
    %v4074 = vunpack.c.l.b16 %v3525
    %v4075 = vunpack.c.h.b16 %v3525
    %v4076 = vunpack.c.l.b16 %v3526
    %v4077 = vunpack.c.h.b16 %v3526
    %v4078 = vunpack.c.l.b16 %v3527
    %v4079 = vunpack.c.h.b16 %v3527
    %v4080 = vunpack.c.l.b16 %v3528
    %v4081 = vunpack.c.h.b16 %v3528
    %v4082 = vunpack.c.l.b16 %v3529
    %v4083 = vunpack.c.h.b16 %v3529
    %v4084 = vunpack.c.l.b16 %v3530
    %v4085 = vunpack.c.h.b16 %v3530
    %v4086 = vunpack.c.l.b16 %v3531
    %v4087 = vunpack.c.h.b16 %v3531
    %v4088 = vunpack.c.l.b16 %v3532
    %v4089 = vunpack.c.h.b16 %v3532
    %v4090 = vunpack.c.l.b16 %v3533
    %v4091 = vunpack.c.h.b16 %v3533
    %v4092 = vunpack.c.l.b16 %v3534
    %v4093 = vunpack.c.h.b16 %v3534
    %v4094 = vunpack.c.l.b16 %v3535
    %v4095 = vunpack.c.h.b16 %v3535
    %v4096 = vunpack.c.l.b16 %v3536
    %v4097 = vunpack.c.h.b16 %v3536
    %v4098 = vunpack.c.l.b16 %v3537
    %v4099 = vunpack.c.h.b16 %v3537
    %v4100 = vunpack.c.l.b16 %v3538
    %v4101 = vunpack.c.h.b16 %v3538
    %v4102 = vunpack.c.l.b16 %v3539
    %v4103 = vunpack.c.h.b16 %v3539
    %v4104 = vunpack.c.l.b16 %v3540
    %v4105 = vunpack.c.h.b16 %v3540
    %v4106 = vunpack.c.l.b16 %v3541
    %v4107 = vunpack.c.h.b16 %v3541
    %v4108 = vunpack.c.l.b16 %v3542
    %v4109 = vunpack.c.h.b16 %v3542
    %v4110 = vunpack.c.l.b16 %v3543
    %v4111 = vunpack.c.h.b16 %v3543
    %v4112 = vunpack.c.l.b16 %v3544
    %v4113 = vunpack.c.h.b16 %v3544
    %v4114 = vunpack.c.l.b16 %v3545
    %v4115 = vunpack.c.h.b16 %v3545
    %v4116 = vunpack.c.l.b16 %v3546
    %v4117 = vunpack.c.h.b16 %v3546
    %v4118 = vunpack.c.l.b16 %v3547
    %v4119 = vunpack.c.h.b16 %v3547
    %v4120 = vunpack.c.l.b16 %v3548
    %v4121 = vunpack.c.h.b16 %v3548
    %v4122 = vunpack.c.l.b16 %v3549
    %v4123 = vunpack.c.h.b16 %v3549
    %v4124 = vunpack.c.l.b16 %v3550
    %v4125 = vunpack.c.h.b16 %v3550
    %v4126 = vunpack.c.l.b16 %v3551
    %v4127 = vunpack.c.h.b16 %v3551
    %v4128 = vunpack.c.l.b16 %v3552
    %v4129 = vunpack.c.h.b16 %v3552
    %v4130 = vunpack.c.l.b16 %v3553
    %v4131 = vunpack.c.h.b16 %v3553
    %v4132 = vunpack.c.l.b16 %v3554
    %v4133 = vunpack.c.h.b16 %v3554
    %v4134 = vunpack.c.l.b16 %v3555
    %v4135 = vunpack.c.h.b16 %v3555
    %v4136 = vunpack.c.l.b16 %v3556
    %v4137 = vunpack.c.h.b16 %v3556
    %v4138 = vunpack.c.l.b16 %v3557
    %v4139 = vunpack.c.h.b16 %v3557
    %v4140 = vunpack.c.l.b16 %v3558
    %v4141 = vunpack.c.h.b16 %v3558
    %v4142 = vunpack.c.l.b16 %v3559
    %v4143 = vunpack.c.h.b16 %v3559
    %v4144 = vunpack.c.l.b16 %v3560
    %v4145 = vunpack.c.h.b16 %v3560
    %v4146 = vunpack.c.l.b16 %v3561
    %v4147 = vunpack.c.h.b16 %v3561
    %v4148 = vunpack.c.l.b16 %v3562
    %v4149 = vunpack.c.h.b16 %v3562
    %v4150 = vunpack.c.l.b16 %v3563
    %v4151 = vunpack.c.h.b16 %v3563
    %v4152 = vunpack.c.l.b16 %v3564
    %v4153 = vunpack.c.h.b16 %v3564
    %v4154 = vunpack.c.l.b16 %v3565
    %v4155 = vunpack.c.h.b16 %v3565
    %v4156 = vunpack.c.l.b16 %v3566
    %v4157 = vunpack.c.h.b16 %v3566
    %v4158 = vunpack.c.l.b16 %v3567
    %v4159 = vunpack.c.h.b16 %v3567
    %v4160 = vunpack.c.l.b16 %v3568
    %v4161 = vunpack.c.h.b16 %v3568
    %v4162 = vunpack.c.l.b16 %v3569
    %v4163 = vunpack.c.h.b16 %v3569
    %v4164 = vunpack.c.l.b16 %v3570
    %v4165 = vunpack.c.h.b16 %v3570
    %v4166 = vunpack.c.l.b16 %v3571
    %v4167 = vunpack.c.h.b16 %v3571
    %v4168 = vunpack.c.l.b16 %v3572
    %v4169 = vunpack.c.h.b16 %v3572
    %v4170 = vunpack.c.l.b16 %v3573
    %v4171 = vunpack.c.h.b16 %v3573
    %v4172 = vunpack.c.l.b16 %v3574
    %v4173 = vunpack.c.h.b16 %v3574
    %v4174 = vunpack.c.l.b16 %v3575
    %v4175 = vunpack.c.h.b16 %v3575
    %v4176 = vunpack.c.l.b16 %v3576
    %v4177 = vunpack.c.h.b16 %v3576
    %v4178 = vunpack.c.l.b16 %v3577
    %v4179 = vunpack.c.h.b16 %v3577
    %v4180 = vunpack.c.l.b16 %v3578
    %v4181 = vunpack.c.h.b16 %v3578
    %v4182 = vunpack.c.l.b16 %v3579
    %v4183 = vunpack.c.h.b16 %v3579
    %v4184 = vunpack.c.l.b16 %v3580
    %v4185 = vunpack.c.h.b16 %v3580
    %v4186 = vunpack.c.l.b16 %v3581
    %v4187 = vunpack.c.h.b16 %v3581
    %v4188 = vunpack.c.l.b16 %v3582
    %v4189 = vunpack.c.h.b16 %v3582
    %v4190 = vunpack.c.l.b16 %v3583
    %v4191 = vunpack.c.h.b16 %v3583
    %v4192 = vunpack.c.l.b16 %v3584
    %v4193 = vunpack.c.h.b16 %v3584
    %v4194 = vunpack.c.l.b16 %v3585
    %v4195 = vunpack.c.h.b16 %v3585
    %v4196 = vunpack.c.l.b16 %v3586
    %v4197 = vunpack.c.h.b16 %v3586
    %v4198 = vunpack.c.l.b16 %v3587
    %v4199 = vunpack.c.h.b16 %v3587
    %v4200 = vunpack.c.l.b16 %v3588
    %v4201 = vunpack.c.h.b16 %v3588
    %v4202 = vunpack.c.l.b16 %v3589
    %v4203 = vunpack.c.h.b16 %v3589
    %v4204 = vunpack.c.l.b16 %v3590
    %v4205 = vunpack.c.h.b16 %v3590
    %v4206 = vunpack.c.l.b16 %v3591
    %v4207 = vunpack.c.h.b16 %v3591
    %v4208 = vunpack.c.l.b16 %v3592
    %v4209 = vunpack.c.h.b16 %v3592
    %v4210 = vunpack.c.l.b16 %v3593
    %v4211 = vunpack.c.h.b16 %v3593
    %v4212 = vunpack.c.l.b16 %v3594
    %v4213 = vunpack.c.h.b16 %v3594
    %v4214 = vunpack.c.l.b16 %v3595
    %v4215 = vunpack.c.h.b16 %v3595
    %v4216 = vunpack.c.l.b16 %v3596
    %v4217 = vunpack.c.h.b16 %v3596
    %v4218 = vunpack.c.l.b16 %v3597
    %v4219 = vunpack.c.h.b16 %v3597
    %v4220 = vunpack.c.l.b16 %v3598
    %v4221 = vunpack.c.h.b16 %v3598
    %v4222 = vunpack.c.l.b16 %v3599
    %v4223 = vunpack.c.h.b16 %v3599
    %v4224 = vunpack.c.l.b16 %v3600
    %v4225 = vunpack.c.h.b16 %v3600
    %v4226 = vunpack.c.l.b16 %v3601
    %v4227 = vunpack.c.h.b16 %v3601
    %v4228 = vunpack.c.l.b16 %v3602
    %v4229 = vunpack.c.h.b16 %v3602
    %v4230 = vunpack.c.l.b16 %v3603
    %v4231 = vunpack.c.h.b16 %v3603
    %v4232 = vunpack.c.l.b16 %v3604
    %v4233 = vunpack.c.h.b16 %v3604
    %v4234 = vunpack.c.l.b16 %v3605
    %v4235 = vunpack.c.h.b16 %v3605
    %v4236 = vpack.c.b16 %v3822, %v3820
    %v4237 = vpack.c.b16 %v3823, %v3821
    %v4238 = vpack.c.b16 %v3826, %v3824
    %v4239 = vpack.c.b16 %v3827, %v3825
    %v4240 = vpack.c.b16 %v3830, %v3828
    %v4241 = vpack.c.b16 %v3831, %v3829
    %v4242 = vpack.c.b16 %v3834, %v3832
    %v4243 = vpack.c.b16 %v3835, %v3833
    %v4244 = vpack.c.b16 %v3838, %v3836
    %v4245 = vpack.c.b16 %v3839, %v3837
    %v4246 = vpack.c.b16 %v3842, %v3840
    %v4247 = vpack.c.b16 %v3843, %v3841
    %v4248 = vpack.c.b16 %v3846, %v3844
    %v4249 = vpack.c.b16 %v3847, %v3845
    %v4250 = vpack.c.b16 %v3850, %v3848
    %v4251 = vpack.c.b16 %v3851, %v3849
    %v4252 = vpack.c.b16 %v3854, %v3852
    %v4253 = vpack.c.b16 %v3855, %v3853
    %v4254 = vpack.c.b16 %v3858, %v3856
    %v4255 = vpack.c.b16 %v3859, %v3857
    %v4256 = vpack.c.b16 %v3862, %v3860
    %v4257 = vpack.c.b16 %v3863, %v3861
    %v4258 = vpack.c.b16 %v3866, %v3864
    %v4259 = vpack.c.b16 %v3867, %v3865
    %v4260 = vpack.c.b16 %v3870, %v3868
    %v4261 = vpack.c.b16 %v3871, %v3869
    %v4262 = vpack.c.b16 %v3874, %v3872
    %v4263 = vpack.c.b16 %v3875, %v3873
    %v4264 = vpack.c.b16 %v3878, %v3876
    %v4265 = vpack.c.b16 %v3879, %v3877
    %v4266 = vpack.c.b16 %v3882, %v3880
    %v4267 = vpack.c.b16 %v3883, %v3881
    %v4268 = vpack.c.b16 %v3886, %v3884
    %v4269 = vpack.c.b16 %v3887, %v3885
    %v4270 = vpack.c.b16 %v3890, %v3888
    %v4271 = vpack.c.b16 %v3891, %v3889
    %v4272 = vpack.c.b16 %v3894, %v3892
    %v4273 = vpack.c.b16 %v3895, %v3893
    %v4274 = vpack.c.b16 %v3898, %v3896
    %v4275 = vpack.c.b16 %v3899, %v3897
    %v4276 = vpack.c.b16 %v3902, %v3900
    %v4277 = vpack.c.b16 %v3903, %v3901
    %v4278 = vpack.c.b16 %v3906, %v3904
    %v4279 = vpack.c.b16 %v3907, %v3905
    %v4280 = vpack.c.b16 %v3910, %v3908
    %v4281 = vpack.c.b16 %v3911, %v3909
    %v4282 = vpack.c.b16 %v3914, %v3912
    %v4283 = vpack.c.b16 %v3915, %v3913
    %v4284 = vpack.c.b16 %v3918, %v3916
    %v4285 = vpack.c.b16 %v3919, %v3917
    %v4286 = vpack.c.b16 %v3922, %v3920
    %v4287 = vpack.c.b16 %v3923, %v3921
    %v4288 = vpack.c.b16 %v3926, %v3924
    %v4289 = vpack.c.b16 %v3927, %v3925
    %v4290 = vpack.c.b16 %v3930, %v3928
    %v4291 = vpack.c.b16 %v3931, %v3929
    %v4292 = vpack.c.b16 %v3934, %v3932
    %v4293 = vpack.c.b16 %v3935, %v3933
    %v4294 = vpack.c.b16 %v3938, %v3936
    %v4295 = vpack.c.b16 %v3939, %v3937
    %v4296 = vpack.c.b16 %v3942, %v3940
    %v4297 = vpack.c.b16 %v3943, %v3941
    %v4298 = vpack.c.b16 %v3946, %v3944
    %v4299 = vpack.c.b16 %v3947, %v3945
    %v4300 = vpack.c.b16 %v3950, %v3948
    %v4301 = vpack.c.b16 %v3951, %v3949
    %v4302 = vpack.c.b16 %v3954, %v3952
    %v4303 = vpack.c.b16 %v3955, %v3953
    %v4304 = vpack.c.b16 %v3958, %v3956
    %v4305 = vpack.c.b16 %v3959, %v3957
    %v4306 = vpack.c.b16 %v3962, %v3960
    %v4307 = vpack.c.b16 %v3963, %v3961
    %v4308 = vpack.c.b16 %v3966, %v3964
    %v4309 = vpack.c.b16 %v3967, %v3965
    %v4310 = vpack.c.b16 %v3970, %v3968
    %v4311 = vpack.c.b16 %v3971, %v3969
    %v4312 = vpack.c.b16 %v3974, %v3972
    %v4313 = vpack.c.b16 %v3975, %v3973
    %v4314 = vpack.c.b16 %v3978, %v3976
    %v4315 = vpack.c.b16 %v3979, %v3977
    %v4316 = vpack.c.b16 %v3982, %v3980
    %v4317 = vpack.c.b16 %v3983, %v3981
    %v4318 = vpack.c.b16 %v3986, %v3984
    %v4319 = vpack.c.b16 %v3987, %v3985
    %v4320 = vpack.c.b16 %v3990, %v3988
    %v4321 = vpack.c.b16 %v3991, %v3989
    %v4322 = vpack.c.b16 %v3994, %v3992
    %v4323 = vpack.c.b16 %v3995, %v3993
    %v4324 = vpack.c.b16 %v3998, %v3996
    %v4325 = vpack.c.b16 %v3999, %v3997
    %v4326 = vpack.c.b16 %v4002, %v4000
    %v4327 = vpack.c.b16 %v4003, %v4001
    %v4328 = vpack.c.b16 %v4006, %v4004
    %v4329 = vpack.c.b16 %v4007, %v4005
    %v4330 = vpack.c.b16 %v4010, %v4008
    %v4331 = vpack.c.b16 %v4011, %v4009
    %v4332 = vpack.c.b16 %v4014, %v4012
    %v4333 = vpack.c.b16 %v4015, %v4013
    %v4334 = vpack.c.b16 %v4018, %v4016
    %v4335 = vpack.c.b16 %v4019, %v4017
    %v4336 = vpack.c.b16 %v4022, %v4020
    %v4337 = vpack.c.b16 %v4023, %v4021
    %v4338 = vpack.c.b16 %v4026, %v4024
    %v4339 = vpack.c.b16 %v4027, %v4025
    %v4340 = vpack.c.b16 %v4030, %v4028
    %v4341 = vpack.c.b16 %v4031, %v4029
    %v4342 = vpack.c.b16 %v4034, %v4032
    %v4343 = vpack.c.b16 %v4035, %v4033
    %v4344 = vpack.c.b16 %v4038, %v4036
    %v4345 = vpack.c.b16 %v4039, %v4037
    %v4346 = vpack.c.b16 %v4042, %v4040
    %v4347 = vpack.c.b16 %v4043, %v4041
    %v4348 = vpack.c.b16 %v4046, %v4044
    %v4349 = vpack.c.b16 %v4047, %v4045
    %v4350 = vpack.c.b16 %v4050, %v4048
    %v4351 = vpack.c.b16 %v4051, %v4049
    %v4352 = vpack.c.b16 %v4054, %v4052
    %v4353 = vpack.c.b16 %v4055, %v4053
    %v4354 = vpack.c.b16 %v4058, %v4056
    %v4355 = vpack.c.b16 %v4059, %v4057
    %v4356 = vpack.c.b16 %v4062, %v4060
    %v4357 = vpack.c.b16 %v4063, %v4061
    %v4358 = vpack.c.b16 %v4066, %v4064
    %v4359 = vpack.c.b16 %v4067, %v4065
    %v4360 = vpack.c.b16 %v4070, %v4068
    %v4361 = vpack.c.b16 %v4071, %v4069
    %v4362 = vpack.c.b16 %v4074, %v4072
    %v4363 = vpack.c.b16 %v4075, %v4073
    %v4364 = vpack.c.b16 %v4078, %v4076
    %v4365 = vpack.c.b16 %v4079, %v4077
    %v4366 = vpack.c.b16 %v4082, %v4080
    %v4367 = vpack.c.b16 %v4083, %v4081
    %v4368 = vpack.c.b16 %v4086, %v4084
    %v4369 = vpack.c.b16 %v4087, %v4085
    %v4370 = vpack.c.b16 %v4090, %v4088
    %v4371 = vpack.c.b16 %v4091, %v4089
    %v4372 = vpack.c.b16 %v4094, %v4092
    %v4373 = vpack.c.b16 %v4095, %v4093
    %v4374 = vpack.c.b16 %v4098, %v4096
    %v4375 = vpack.c.b16 %v4099, %v4097
    %v4376 = vpack.c.b16 %v4102, %v4100
    %v4377 = vpack.c.b16 %v4103, %v4101
    %v4378 = vpack.c.b16 %v4106, %v4104
    %v4379 = vpack.c.b16 %v4107, %v4105
    %v4380 = vpack.c.b16 %v4110, %v4108
    %v4381 = vpack.c.b16 %v4111, %v4109
    %v4382 = vpack.c.b16 %v4114, %v4112
    %v4383 = vpack.c.b16 %v4115, %v4113
    %v4384 = vpack.c.b16 %v4118, %v4116
    %v4385 = vpack.c.b16 %v4119, %v4117
    %v4386 = vpack.c.b16 %v4122, %v4120
    %v4387 = vpack.c.b16 %v4123, %v4121
    %v4388 = vpack.c.b16 %v4126, %v4124
    %v4389 = vpack.c.b16 %v4127, %v4125
    %v4390 = vpack.c.b16 %v4130, %v4128
    %v4391 = vpack.c.b16 %v4131, %v4129
    %v4392 = vpack.c.b16 %v4134, %v4132
    %v4393 = vpack.c.b16 %v4135, %v4133
    %v4394 = vpack.c.b16 %v4138, %v4136
    %v4395 = vpack.c.b16 %v4139, %v4137
    %v4396 = vpack.c.b16 %v4142, %v4140
    %v4397 = vpack.c.b16 %v4143, %v4141
    %v4398 = vpack.c.b16 %v4146, %v4144
    %v4399 = vpack.c.b16 %v4147, %v4145
    %v4400 = vpack.c.b16 %v4150, %v4148
    %v4401 = vpack.c.b16 %v4151, %v4149
    %v4402 = vpack.c.b16 %v4154, %v4152
    %v4403 = vpack.c.b16 %v4155, %v4153
    %v4404 = vpack.c.b16 %v4158, %v4156
    %v4405 = vpack.c.b16 %v4159, %v4157
    %v4406 = vpack.c.b16 %v4162, %v4160
    %v4407 = vpack.c.b16 %v4163, %v4161
    %v4408 = vpack.c.b16 %v4166, %v4164
    %v4409 = vpack.c.b16 %v4167, %v4165
    %v4410 = vpack.c.b16 %v4170, %v4168
    %v4411 = vpack.c.b16 %v4171, %v4169
    %v4412 = vpack.c.b16 %v4174, %v4172
    %v4413 = vpack.c.b16 %v4175, %v4173
    %v4414 = vpack.c.b16 %v4178, %v4176
    %v4415 = vpack.c.b16 %v4179, %v4177
    %v4416 = vpack.c.b16 %v4182, %v4180
    %v4417 = vpack.c.b16 %v4183, %v4181
    %v4418 = vpack.c.b16 %v4186, %v4184
    %v4419 = vpack.c.b16 %v4187, %v4185
    %v4420 = vpack.c.b16 %v4190, %v4188
    %v4421 = vpack.c.b16 %v4191, %v4189
    %v4422 = vpack.c.b16 %v4194, %v4192
    %v4423 = vpack.c.b16 %v4195, %v4193
    %v4424 = vpack.c.b16 %v4198, %v4196
    %v4425 = vpack.c.b16 %v4199, %v4197
    %v4426 = vpack.c.b16 %v4202, %v4200
    %v4427 = vpack.c.b16 %v4203, %v4201
    %v4428 = vpack.c.b16 %v4206, %v4204
    %v4429 = vpack.c.b16 %v4207, %v4205
    %v4430 = vpack.c.b16 %v4210, %v4208
    %v4431 = vpack.c.b16 %v4211, %v4209
    %v4432 = vpack.c.b16 %v4214, %v4212
    %v4433 = vpack.c.b16 %v4215, %v4213
    %v4434 = vpack.c.b16 %v4218, %v4216
    %v4435 = vpack.c.b16 %v4219, %v4217
    %v4436 = vpack.c.b16 %v4222, %v4220
    %v4437 = vpack.c.b16 %v4223, %v4221
    %v4438 = vpack.c.b16 %v4226, %v4224
    %v4439 = vpack.c.b16 %v4227, %v4225
    %v4440 = vpack.c.b16 %v4230, %v4228
    %v4441 = vpack.c.b16 %v4231, %v4229
    %v4442 = vpack.c.b16 %v4234, %v4232
    %v4443 = vpack.c.b16 %v4235, %v4233
    %4652 = vmatpush.bf16.msra.mxu0 %v4250
    %4653 = vmatpush.bf16.msra.mxu0 %v4248
    %4654 = vmatpush.bf16.msra.mxu0 %v4246
    %4655 = vmatpush.bf16.msra.mxu0 %v4244
    %4656 = vmatpush.bf16.msra.mxu0 %v4242
    %4657 = vmatpush.bf16.msra.mxu0 %v4240
    %4658 = vmatpush.bf16.msra.mxu0 %v4238
    %4659 = vmatpush.bf16.msra.mxu0 %v4236
    %4660 = vmatmul.bf16.gmra.mxu0 %v3385
    %v4661 = vpop.f32.mrf.mxu0
    %v4662 = vadd.f32 %v3608, %v4661
    %v4663 = vpop.f32.mrf.mxu0
    %4664 = vdwg.mxu0
    %4665 = vmatpush.bf16.msra.mxu0 %v4266
    %4666 = vmatpush.bf16.msra.mxu0 %v4264
    %4667 = vmatpush.bf16.msra.mxu0 %v4262
    %4668 = vmatpush.bf16.msra.mxu0 %v4260
    %4669 = vmatpush.bf16.msra.mxu0 %v4258
    %4670 = vmatpush.bf16.msra.mxu0 %v4256
    %4671 = vmatpush.bf16.msra.mxu0 %v4254
    %4672 = vmatpush.bf16.msra.mxu0 %v4252
    %4673 = vmatmul.bf16.gmra.mxu0 %v3386
    %v4674 = vpop.f32.mrf.mxu0
    %v4675 = vadd.f32 %v4662, %v4674
    %v4676 = vpop.f32.mrf.mxu0
    %4677 = vdwg.mxu0
    %4678 = vmatpush.bf16.msra.mxu0 %v4282
    %4679 = vmatpush.bf16.msra.mxu0 %v4280
    %4680 = vmatpush.bf16.msra.mxu0 %v4278
    %4681 = vmatpush.bf16.msra.mxu0 %v4276
    %4682 = vmatpush.bf16.msra.mxu0 %v4274
    %4683 = vmatpush.bf16.msra.mxu0 %v4272
    %4684 = vmatpush.bf16.msra.mxu0 %v4270
    %4685 = vmatpush.bf16.msra.mxu0 %v4268
    %4686 = vmatmul.bf16.gmra.mxu0 %v3387
    %v4687 = vpop.f32.mrf.mxu0
    %v4688 = vadd.f32 %v4675, %v4687
    %v4689 = vpop.f32.mrf.mxu0
    %4690 = vdwg.mxu0
    %4691 = vmatpush.bf16.msra.mxu0 %v4298
    %4692 = vmatpush.bf16.msra.mxu0 %v4296
    %4693 = vmatpush.bf16.msra.mxu0 %v4294
    %4694 = vmatpush.bf16.msra.mxu0 %v4292
    %4695 = vmatpush.bf16.msra.mxu0 %v4290
    %4696 = vmatpush.bf16.msra.mxu0 %v4288
    %4697 = vmatpush.bf16.msra.mxu0 %v4286
    %4698 = vmatpush.bf16.msra.mxu0 %v4284
    %4699 = vmatmul.bf16.gmra.mxu0 %v3388
    %v4700 = vpop.f32.mrf.mxu0
    %v4701 = vadd.f32 %v4688, %v4700
    %v4702 = vpop.f32.mrf.mxu0
    %4703 = vdwg.mxu0
    %4704 = vmatpush.bf16.msra.mxu0 %v4314
    %4705 = vmatpush.bf16.msra.mxu0 %v4312
    %4706 = vmatpush.bf16.msra.mxu0 %v4310
    %4707 = vmatpush.bf16.msra.mxu0 %v4308
    %4708 = vmatpush.bf16.msra.mxu0 %v4306
    %4709 = vmatpush.bf16.msra.mxu0 %v4304
    %4710 = vmatpush.bf16.msra.mxu0 %v4302
    %4711 = vmatpush.bf16.msra.mxu0 %v4300
    %4712 = vmatmul.bf16.gmra.mxu0 %v3389
    %v4713 = vpop.f32.mrf.mxu0
    %v4714 = vadd.f32 %v4701, %v4713
    %v4715 = vpop.f32.mrf.mxu0
    %4716 = vdwg.mxu0
    %4717 = vmatpush.bf16.msra.mxu0 %v4330
    %4718 = vmatpush.bf16.msra.mxu0 %v4328
    %4719 = vmatpush.bf16.msra.mxu0 %v4326
    %4720 = vmatpush.bf16.msra.mxu0 %v4324
    %4721 = vmatpush.bf16.msra.mxu0 %v4322
    %4722 = vmatpush.bf16.msra.mxu0 %v4320
    %4723 = vmatpush.bf16.msra.mxu0 %v4318
    %4724 = vmatpush.bf16.msra.mxu0 %v4316
    %4725 = vmatmul.bf16.gmra.mxu0 %v3390
    %v4726 = vpop.f32.mrf.mxu0
    %v4727 = vadd.f32 %v4714, %v4726
    %v4728 = vpop.f32.mrf.mxu0
    %4729 = vdwg.mxu0
    %4730 = vmatpush.bf16.msra.mxu0 %v4346
    %4731 = vmatpush.bf16.msra.mxu0 %v4344
    %4732 = vmatpush.bf16.msra.mxu0 %v4342
    %4733 = vmatpush.bf16.msra.mxu0 %v4340
    %4734 = vmatpush.bf16.msra.mxu0 %v4338
    %4735 = vmatpush.bf16.msra.mxu0 %v4336
    %4736 = vmatpush.bf16.msra.mxu0 %v4334
    %4737 = vmatpush.bf16.msra.mxu0 %v4332
    %4738 = vmatmul.bf16.gmra.mxu0 %v3391
    %v4739 = vpop.f32.mrf.mxu0
    %v4740 = vadd.f32 %v4727, %v4739
    %v4741 = vpop.f32.mrf.mxu0
    %4742 = vdwg.mxu0
    %4743 = vmatpush.bf16.msra.mxu0 %v4362
    %4744 = vmatpush.bf16.msra.mxu0 %v4360
    %4745 = vmatpush.bf16.msra.mxu0 %v4358
    %4746 = vmatpush.bf16.msra.mxu0 %v4356
    %4747 = vmatpush.bf16.msra.mxu0 %v4354
    %4748 = vmatpush.bf16.msra.mxu0 %v4352
    %4749 = vmatpush.bf16.msra.mxu0 %v4350
    %4750 = vmatpush.bf16.msra.mxu0 %v4348
    %4751 = vmatmul.bf16.gmra.mxu0 %v3392
    %v4752 = vpop.f32.mrf.mxu0
    %v4753 = vadd.f32 %v4740, %v4752
    %v4754 = vpop.f32.mrf.mxu0
    %4755 = vdwg.mxu0
    %4756 = vmatpush.bf16.msra.mxu0 %v4378
    %4757 = vmatpush.bf16.msra.mxu0 %v4376
    %4758 = vmatpush.bf16.msra.mxu0 %v4374
    %4759 = vmatpush.bf16.msra.mxu0 %v4372
    %4760 = vmatpush.bf16.msra.mxu0 %v4370
    %4761 = vmatpush.bf16.msra.mxu0 %v4368
    %4762 = vmatpush.bf16.msra.mxu0 %v4366
    %4763 = vmatpush.bf16.msra.mxu0 %v4364
    %4764 = vmatmul.bf16.gmra.mxu0 %v3393
    %v4765 = vpop.f32.mrf.mxu0
    %v4766 = vadd.f32 %v4753, %v4765
    %v4767 = vpop.f32.mrf.mxu0
    %4768 = vdwg.mxu0
    %4769 = vmatpush.bf16.msra.mxu0 %v4394
    %4770 = vmatpush.bf16.msra.mxu0 %v4392
    %4771 = vmatpush.bf16.msra.mxu0 %v4390
    %4772 = vmatpush.bf16.msra.mxu0 %v4388
    %4773 = vmatpush.bf16.msra.mxu0 %v4386
    %4774 = vmatpush.bf16.msra.mxu0 %v4384
    %4775 = vmatpush.bf16.msra.mxu0 %v4382
    %4776 = vmatpush.bf16.msra.mxu0 %v4380
    %4777 = vmatmul.bf16.gmra.mxu0 %v3394
    %v4778 = vpop.f32.mrf.mxu0
    %v4779 = vadd.f32 %v4766, %v4778
    %v4780 = vpop.f32.mrf.mxu0
    %4781 = vdwg.mxu0
    %4782 = vmatpush.bf16.msra.mxu0 %v4410
    %4783 = vmatpush.bf16.msra.mxu0 %v4408
    %4784 = vmatpush.bf16.msra.mxu0 %v4406
    %4785 = vmatpush.bf16.msra.mxu0 %v4404
    %4786 = vmatpush.bf16.msra.mxu0 %v4402
    %4787 = vmatpush.bf16.msra.mxu0 %v4400
    %4788 = vmatpush.bf16.msra.mxu0 %v4398
    %4789 = vmatpush.bf16.msra.mxu0 %v4396
    %4790 = vmatmul.bf16.gmra.mxu0 %v3395
    %v4791 = vpop.f32.mrf.mxu0
    %v4792 = vadd.f32 %v4779, %v4791
    %v4793 = vpop.f32.mrf.mxu0
    %4794 = vdwg.mxu0
    %4795 = vmatpush.bf16.msra.mxu0 %v4426
    %4796 = vmatpush.bf16.msra.mxu0 %v4424
    %4797 = vmatpush.bf16.msra.mxu0 %v4422
    %4798 = vmatpush.bf16.msra.mxu0 %v4420
    %4799 = vmatpush.bf16.msra.mxu0 %v4418
    %4800 = vmatpush.bf16.msra.mxu0 %v4416
    %4801 = vmatpush.bf16.msra.mxu0 %v4414
    %4802 = vmatpush.bf16.msra.mxu0 %v4412
    %4803 = vmatmul.bf16.gmra.mxu0 %v3396
    %v4804 = vpop.f32.mrf.mxu0
    %v4805 = vadd.f32 %v4792, %v4804
    %v4806 = vpop.f32.mrf.mxu0
    %4807 = vdwg.mxu0
    %4808 = vmatpush.bf16.msra.mxu0 %v4442
    %4809 = vmatpush.bf16.msra.mxu0 %v4440
    %4810 = vmatpush.bf16.msra.mxu0 %v4438
    %4811 = vmatpush.bf16.msra.mxu0 %v4436
    %4812 = vmatpush.bf16.msra.mxu0 %v4434
    %4813 = vmatpush.bf16.msra.mxu0 %v4432
    %4814 = vmatpush.bf16.msra.mxu0 %v4430
    %4815 = vmatpush.bf16.msra.mxu0 %v4428
    %4816 = vmatmul.bf16.gmra.mxu0 %v3397
    %v4817 = vpop.f32.mrf.mxu0
    %v4818 = vadd.f32 %v4805, %v4817
    %v4819 = vpop.f32.mrf.mxu0
    %4820 = vdwg.mxu0
    %4821 = vmatpush.bf16.msra.mxu0 %v4251
    %4822 = vmatpush.bf16.msra.mxu0 %v4249
    %4823 = vmatpush.bf16.msra.mxu0 %v4247
    %4824 = vmatpush.bf16.msra.mxu0 %v4245
    %4825 = vmatpush.bf16.msra.mxu0 %v4243
    %4826 = vmatpush.bf16.msra.mxu0 %v4241
    %4827 = vmatpush.bf16.msra.mxu0 %v4239
    %4828 = vmatpush.bf16.msra.mxu0 %v4237
    %4829 = vmatmul.bf16.gmra.mxu0 %v3385
    %v4830 = vpop.f32.mrf.mxu0
    %v4831 = vadd.f32 %v3609, %v4830
    %v4832 = vpop.f32.mrf.mxu0
    %4833 = vdwg.mxu0
    %4834 = vmatpush.bf16.msra.mxu0 %v4267
    %4835 = vmatpush.bf16.msra.mxu0 %v4265
    %4836 = vmatpush.bf16.msra.mxu0 %v4263
    %4837 = vmatpush.bf16.msra.mxu0 %v4261
    %4838 = vmatpush.bf16.msra.mxu0 %v4259
    %4839 = vmatpush.bf16.msra.mxu0 %v4257
    %4840 = vmatpush.bf16.msra.mxu0 %v4255
    %4841 = vmatpush.bf16.msra.mxu0 %v4253
    %4842 = vmatmul.bf16.gmra.mxu0 %v3386
    %v4843 = vpop.f32.mrf.mxu0
    %v4844 = vadd.f32 %v4831, %v4843
    %v4845 = vpop.f32.mrf.mxu0
    %4846 = vdwg.mxu0
    %4847 = vmatpush.bf16.msra.mxu0 %v4283
    %4848 = vmatpush.bf16.msra.mxu0 %v4281
    %4849 = vmatpush.bf16.msra.mxu0 %v4279
    %4850 = vmatpush.bf16.msra.mxu0 %v4277
    %4851 = vmatpush.bf16.msra.mxu0 %v4275
    %4852 = vmatpush.bf16.msra.mxu0 %v4273
    %4853 = vmatpush.bf16.msra.mxu0 %v4271
    %4854 = vmatpush.bf16.msra.mxu0 %v4269
    %4855 = vmatmul.bf16.gmra.mxu0 %v3387
    %v4856 = vpop.f32.mrf.mxu0
    %v4857 = vadd.f32 %v4844, %v4856
    %v4858 = vpop.f32.mrf.mxu0
    %4859 = vdwg.mxu0
    %4860 = vmatpush.bf16.msra.mxu0 %v4299
    %4861 = vmatpush.bf16.msra.mxu0 %v4297
    %4862 = vmatpush.bf16.msra.mxu0 %v4295
    %4863 = vmatpush.bf16.msra.mxu0 %v4293
    %4864 = vmatpush.bf16.msra.mxu0 %v4291
    %4865 = vmatpush.bf16.msra.mxu0 %v4289
    %4866 = vmatpush.bf16.msra.mxu0 %v4287
    %4867 = vmatpush.bf16.msra.mxu0 %v4285
    %4868 = vmatmul.bf16.gmra.mxu0 %v3388
    %v4869 = vpop.f32.mrf.mxu0
    %v4870 = vadd.f32 %v4857, %v4869
    %v4871 = vpop.f32.mrf.mxu0
    %4872 = vdwg.mxu0
    %4873 = vmatpush.bf16.msra.mxu0 %v4315
    %4874 = vmatpush.bf16.msra.mxu0 %v4313
    %4875 = vmatpush.bf16.msra.mxu0 %v4311
    %4876 = vmatpush.bf16.msra.mxu0 %v4309
    %4877 = vmatpush.bf16.msra.mxu0 %v4307
    %4878 = vmatpush.bf16.msra.mxu0 %v4305
    %4879 = vmatpush.bf16.msra.mxu0 %v4303
    %4880 = vmatpush.bf16.msra.mxu0 %v4301
    %4881 = vmatmul.bf16.gmra.mxu0 %v3389
    %v4882 = vpop.f32.mrf.mxu0
    %v4883 = vadd.f32 %v4870, %v4882
    %v4884 = vpop.f32.mrf.mxu0
    %4885 = vdwg.mxu0
    %4886 = vmatpush.bf16.msra.mxu0 %v4331
    %4887 = vmatpush.bf16.msra.mxu0 %v4329
    %4888 = vmatpush.bf16.msra.mxu0 %v4327
    %4889 = vmatpush.bf16.msra.mxu0 %v4325
    %4890 = vmatpush.bf16.msra.mxu0 %v4323
    %4891 = vmatpush.bf16.msra.mxu0 %v4321
    %4892 = vmatpush.bf16.msra.mxu0 %v4319
    %4893 = vmatpush.bf16.msra.mxu0 %v4317
    %4894 = vmatmul.bf16.gmra.mxu0 %v3390
    %v4895 = vpop.f32.mrf.mxu0
    %v4896 = vadd.f32 %v4883, %v4895
    %v4897 = vpop.f32.mrf.mxu0
    %4898 = vdwg.mxu0
    %4899 = vmatpush.bf16.msra.mxu0 %v4347
    %4900 = vmatpush.bf16.msra.mxu0 %v4345
    %4901 = vmatpush.bf16.msra.mxu0 %v4343
    %4902 = vmatpush.bf16.msra.mxu0 %v4341
    %4903 = vmatpush.bf16.msra.mxu0 %v4339
    %4904 = vmatpush.bf16.msra.mxu0 %v4337
    %4905 = vmatpush.bf16.msra.mxu0 %v4335
    %4906 = vmatpush.bf16.msra.mxu0 %v4333
    %4907 = vmatmul.bf16.gmra.mxu0 %v3391
    %v4908 = vpop.f32.mrf.mxu0
    %v4909 = vadd.f32 %v4896, %v4908
    %v4910 = vpop.f32.mrf.mxu0
    %4911 = vdwg.mxu0
    %4912 = vmatpush.bf16.msra.mxu0 %v4363
    %4913 = vmatpush.bf16.msra.mxu0 %v4361
    %4914 = vmatpush.bf16.msra.mxu0 %v4359
    %4915 = vmatpush.bf16.msra.mxu0 %v4357
    %4916 = vmatpush.bf16.msra.mxu0 %v4355
    %4917 = vmatpush.bf16.msra.mxu0 %v4353
    %4918 = vmatpush.bf16.msra.mxu0 %v4351
    %4919 = vmatpush.bf16.msra.mxu0 %v4349
    %4920 = vmatmul.bf16.gmra.mxu0 %v3392
    %v4921 = vpop.f32.mrf.mxu0
    %v4922 = vadd.f32 %v4909, %v4921
    %v4923 = vpop.f32.mrf.mxu0
    %4924 = vdwg.mxu0
    %4925 = vmatpush.bf16.msra.mxu0 %v4379
    %4926 = vmatpush.bf16.msra.mxu0 %v4377
    %4927 = vmatpush.bf16.msra.mxu0 %v4375
    %4928 = vmatpush.bf16.msra.mxu0 %v4373
    %4929 = vmatpush.bf16.msra.mxu0 %v4371
    %4930 = vmatpush.bf16.msra.mxu0 %v4369
    %4931 = vmatpush.bf16.msra.mxu0 %v4367
    %4932 = vmatpush.bf16.msra.mxu0 %v4365
    %4933 = vmatmul.bf16.gmra.mxu0 %v3393
    %v4934 = vpop.f32.mrf.mxu0
    %v4935 = vadd.f32 %v4922, %v4934
    %v4936 = vpop.f32.mrf.mxu0
    %4937 = vdwg.mxu0
    %4938 = vmatpush.bf16.msra.mxu0 %v4395
    %4939 = vmatpush.bf16.msra.mxu0 %v4393
    %4940 = vmatpush.bf16.msra.mxu0 %v4391
    %4941 = vmatpush.bf16.msra.mxu0 %v4389
    %4942 = vmatpush.bf16.msra.mxu0 %v4387
    %4943 = vmatpush.bf16.msra.mxu0 %v4385
    %4944 = vmatpush.bf16.msra.mxu0 %v4383
    %4945 = vmatpush.bf16.msra.mxu0 %v4381
    %4946 = vmatmul.bf16.gmra.mxu0 %v3394
    %v4947 = vpop.f32.mrf.mxu0
    %v4948 = vadd.f32 %v4935, %v4947
    %v4949 = vpop.f32.mrf.mxu0
    %4950 = vdwg.mxu0
    %4951 = vmatpush.bf16.msra.mxu0 %v4411
    %4952 = vmatpush.bf16.msra.mxu0 %v4409
    %4953 = vmatpush.bf16.msra.mxu0 %v4407
    %4954 = vmatpush.bf16.msra.mxu0 %v4405
    %4955 = vmatpush.bf16.msra.mxu0 %v4403
    %4956 = vmatpush.bf16.msra.mxu0 %v4401
    %4957 = vmatpush.bf16.msra.mxu0 %v4399
    %4958 = vmatpush.bf16.msra.mxu0 %v4397
    %4959 = vmatmul.bf16.gmra.mxu0 %v3395
    %v4960 = vpop.f32.mrf.mxu0
    %v4961 = vadd.f32 %v4948, %v4960
    %v4962 = vpop.f32.mrf.mxu0
    %4963 = vdwg.mxu0
    %4964 = vmatpush.bf16.msra.mxu0 %v4427
    %4965 = vmatpush.bf16.msra.mxu0 %v4425
    %4966 = vmatpush.bf16.msra.mxu0 %v4423
    %4967 = vmatpush.bf16.msra.mxu0 %v4421
    %4968 = vmatpush.bf16.msra.mxu0 %v4419
    %4969 = vmatpush.bf16.msra.mxu0 %v4417
    %4970 = vmatpush.bf16.msra.mxu0 %v4415
    %4971 = vmatpush.bf16.msra.mxu0 %v4413
    %4972 = vmatmul.bf16.gmra.mxu0 %v3396
    %v4973 = vpop.f32.mrf.mxu0
    %v4974 = vadd.f32 %v4961, %v4973
    %v4975 = vpop.f32.mrf.mxu0
    %4976 = vdwg.mxu0
    %4977 = vmatpush.bf16.msra.mxu0 %v4443
    %4978 = vmatpush.bf16.msra.mxu0 %v4441
    %4979 = vmatpush.bf16.msra.mxu0 %v4439
    %4980 = vmatpush.bf16.msra.mxu0 %v4437
    %4981 = vmatpush.bf16.msra.mxu0 %v4435
    %4982 = vmatpush.bf16.msra.mxu0 %v4433
    %4983 = vmatpush.bf16.msra.mxu0 %v4431
    %4984 = vmatpush.bf16.msra.mxu0 %v4429
    %4985 = vmatmul.bf16.gmra.mxu0 %v3397
    %v4986 = vpop.f32.mrf.mxu0
    %v4987 = vadd.f32 %v4974, %v4986
    %v4988 = vpop.f32.mrf.mxu0
    %4989 = vdwg.mxu0
    %v4990 = vmax.f32 %v4818, 0.0
    %v4991 = vmax.f32 %v4987, 0.0
    %v4992 = vpack.c.bf16 %v4990, %v4990
    %v4993 = vpack.c.bf16 %v4991, %v4991
    %v4994 = vld [vmem:[%s5] sm:$0xf]
    %v4995 = vld [vmem:[%s5 + $0x4] sm:$0xf]
    %v4996 = vld [vmem:[%s5 + $0x8] sm:$0xf]
    %v4997 = vld [vmem:[%s5 + $0xc] sm:$0xf]
    %v4998 = vld [vmem:[%s5 + $0x10] sm:$0xf]
    %v4999 = vld [vmem:[%s5 + $0x14] sm:$0xf]
    %v5000 = vld [vmem:[%s5 + $0x18] sm:$0xf]
    %v5001 = vld [vmem:[%s5 + $0x1c] sm:$0xf]
    %v5002 = vld [vmem:[%s5 + $0x20] sm:$0xf]
    %v5003 = vld [vmem:[%s5 + $0x24] sm:$0xf]
    %v5004 = vld [vmem:[%s5 + $0x28] sm:$0xf]
    %v5005 = vld [vmem:[%s5 + $0x2c] sm:$0xf]
    %v5006 = vld [vmem:[%s5 + $0x30] sm:$0xf]
    %v5007 = vld [vmem:[%s5 + $0x34] sm:$0xf]
    %v5008 = vld [vmem:[%s5 + $0x38] sm:$0xf]
    %v5009 = vld [vmem:[%s5 + $0x3c] sm:$0xf]
    %v5010 = vld [vmem:[%s5 + $0x40] sm:$0xf]
    %v5011 = vld [vmem:[%s5 + $0x44] sm:$0xf]
    %v5012 = vld [vmem:[%s5 + $0x48] sm:$0xf]
    %v5013 = vld [vmem:[%s5 + $0x4c] sm:$0xf]
    %v5014 = vld [vmem:[%s5 + $0x50] sm:$0xf]
    %v5015 = vld [vmem:[%s5 + $0x54] sm:$0xf]
    %v5016 = vld [vmem:[%s5 + $0x58] sm:$0xf]
    %v5017 = vld [vmem:[%s5 + $0x5c] sm:$0xf]
    %v5018 = vld [vmem:[%s5 + $0x60] sm:$0xf]
    %v5019 = vld [vmem:[%s5 + $0x64] sm:$0xf]
    %v5020 = vld [vmem:[%s5 + $0x68] sm:$0xf]
    %v5021 = vld [vmem:[%s5 + $0x6c] sm:$0xf]
    %v5022 = vld [vmem:[%s5 + $0x70] sm:$0xf]
    %v5023 = vld [vmem:[%s5 + $0x74] sm:$0xf]
    %v5024 = vld [vmem:[%s5 + $0x78] sm:$0xf]
    %v5025 = vld [vmem:[%s5 + $0x7c] sm:$0xf]
    %v5026 = vld [vmem:[#allocation9] sm:$0x1]
    %v5028 = vperm.slane %v5026, 0
    %v5062 = vunpack.c.l.b16 %v4994
    %v5063 = vunpack.c.l.b16 %v4995
    %v5064 = vunpack.c.l.b16 %v4996
    %v5065 = vunpack.c.l.b16 %v4997
    %v5066 = vunpack.c.l.b16 %v4998
    %v5067 = vunpack.c.l.b16 %v4999
    %v5068 = vunpack.c.l.b16 %v5000
    %v5069 = vunpack.c.l.b16 %v5001
    %v5070 = vunpack.c.l.b16 %v5002
    %v5071 = vunpack.c.l.b16 %v5003
    %v5072 = vunpack.c.l.b16 %v5004
    %v5073 = vunpack.c.l.b16 %v5005
    %v5074 = vunpack.c.l.b16 %v5006
    %v5075 = vunpack.c.l.b16 %v5007
    %v5076 = vunpack.c.l.b16 %v5008
    %v5077 = vunpack.c.l.b16 %v5009
    %v5078 = vunpack.c.l.b16 %v5010
    %v5079 = vunpack.c.l.b16 %v5011
    %v5080 = vunpack.c.l.b16 %v5012
    %v5081 = vunpack.c.l.b16 %v5013
    %v5082 = vunpack.c.l.b16 %v5014
    %v5083 = vunpack.c.l.b16 %v5015
    %v5084 = vunpack.c.l.b16 %v5016
    %v5085 = vunpack.c.l.b16 %v5017
    %v5086 = vunpack.c.l.b16 %v5018
    %v5087 = vunpack.c.l.b16 %v5019
    %v5088 = vunpack.c.l.b16 %v5020
    %v5089 = vunpack.c.l.b16 %v5021
    %v5090 = vunpack.c.l.b16 %v5022
    %v5091 = vunpack.c.l.b16 %v5023
    %v5092 = vunpack.c.l.b16 %v5024
    %v5093 = vunpack.c.l.b16 %v5025
    %v5094 = vpack.c.b16 %v5063, %v5062
    %v5095 = vpack.c.b16 %v5065, %v5064
    %v5096 = vpack.c.b16 %v5067, %v5066
    %v5097 = vpack.c.b16 %v5069, %v5068
    %v5098 = vpack.c.b16 %v5071, %v5070
    %v5099 = vpack.c.b16 %v5073, %v5072
    %v5100 = vpack.c.b16 %v5075, %v5074
    %v5101 = vpack.c.b16 %v5077, %v5076
    %v5102 = vpack.c.b16 %v5079, %v5078
    %v5103 = vpack.c.b16 %v5081, %v5080
    %v5104 = vpack.c.b16 %v5083, %v5082
    %v5105 = vpack.c.b16 %v5085, %v5084
    %v5106 = vpack.c.b16 %v5087, %v5086
    %v5107 = vpack.c.b16 %v5089, %v5088
    %v5108 = vpack.c.b16 %v5091, %v5090
    %v5109 = vpack.c.b16 %v5093, %v5092
    %5126 = vmatpush.bf16.msra.mxu0 %v5101
    %5127 = vmatpush.bf16.msra.mxu0 %v5100
    %5128 = vmatpush.bf16.msra.mxu0 %v5099
    %5129 = vmatpush.bf16.msra.mxu0 %v5098
    %5130 = vmatpush.bf16.msra.mxu0 %v5097
    %5131 = vmatpush.bf16.msra.mxu0 %v5096
    %5132 = vmatpush.bf16.msra.mxu0 %v5095
    %5133 = vmatpush.bf16.msra.mxu0 %v5094
    %5134 = vmatmul.bf16.gmra.mxu0 %v4992
    %v5135 = vpop.f32.mrf.mxu0
    %v5136 = vadd.f32 %v5028, %v5135
    %v5137 = vpop.f32.mrf.mxu0
    %5138 = vdwg.mxu0
    %5139 = vmatpush.bf16.msra.mxu0 %v5109
    %5140 = vmatpush.bf16.msra.mxu0 %v5108
    %5141 = vmatpush.bf16.msra.mxu0 %v5107
    %5142 = vmatpush.bf16.msra.mxu0 %v5106
    %5143 = vmatpush.bf16.msra.mxu0 %v5105
    %5144 = vmatpush.bf16.msra.mxu0 %v5104
    %5145 = vmatpush.bf16.msra.mxu0 %v5103
    %5146 = vmatpush.bf16.msra.mxu0 %v5102
    %5147 = vmatmul.bf16.gmra.mxu0 %v4993
    %v5148 = vpop.f32.mrf.mxu0
    %v5149 = vadd.f32 %v5136, %v5148
    %v5150 = vpop.f32.mrf.mxu0
    %5151 = vdwg.mxu0
    %vm5152 = vcmask 72704
    %v5153 = vsel %vm5152, %v5149, -inf
    %5154 = vmax.xlane.f32.xlu0 %v5153
    %v5155 = vpop.xlane.xlu0 %5154
    %v5156 = vsub.f32 %v5149, %v5155
    %v5157 = vmul.f32 %v5156, 1.442695
    %v5158 = vpow.pop %v5157
    %v5159 = vsel %vm5152, %v5158, 0.0
    %5160 = vadd.xlane.f32.xlu0 %v5159
    %v5161 = vpop.xlane.xlu0 %5160
    %v5162 = vrcp.pop %v5161
    %v5163 = vmul.f32 %v5161, %v5162
    %v5164 = vsub.f32 1.0, %v5163
    %v5165 = vmul.f32 %v5162, %v5164
    %v5166 = vadd.f32 %v5162, %v5165
    %vm5167 = vweird.f32 %v5161
    %vm5168 = vweird.f32 %v5162
    %vm5169 = vmor %vm5167, %vm5168
    %v5170 = vsel %vm5169, %v5162, %v5166
    %v5171 = vand.u32 2147483647, %v5161
    %vm5172 = vcmp.eq.f32.partialorder %v5171, 8.507059e+37
    %v5173 = vand.u32 %v5161, 2147483648
    %v5174 = vor.u32 1.1754944e-38, %v5173
    %v5175 = vsel %vm5172, %v5174, %v5170
    %v5176 = vmul.f32 %v5158, %v5175
    %5177 = vst.msk [vmem:[%s7] sm:$0xff] %vm5152, %v5176
    // Predicated region
    $region50: #{cnn_forward.1} parent=1 // pred_check
      _
    $region51: #{cnn_forward.1} parent=1 // pred_check_branch
      %5179 = sbr.rel (0) target = $region53
    $region52: #{cnn_forward.1} parent=1 // pred_region
      _
    $region53: #{cnn_forward.1} parent=1 // pred_fallthru
      _
    // Predicated region
    $region54: #{cnn_forward.1} parent=1 // pred_check
      _
    $region55: #{cnn_forward.1} parent=1 // pred_check_branch
      %5181 = sbr.rel (0) target = $region57
    $region56: #{cnn_forward.1} parent=1 // pred_region
      _
    $region57: #{cnn_forward.1} parent=1 // pred_fallthru
      _
    %5182 = vsyncpa [#allocation3], 1
    %5183 = vsyncpa [#allocation5], 1
    %5184 = vsyncpa [#allocation8], 1

</llo_original>
